<compile_context>
chip_gen: v5e
topology: v5e:2x2
jax: 0.10.0
libtpu: 0.0.40
codegen_flags: <defaults>
</compile_context>

<pallas_src>
import functools

import numpy as np
import jax
import jax.numpy as jnp
from jax import lax
from jax.experimental import pallas as pl
from jax.experimental.pallas import tpu as pltpu


# ----------------------------------------------------------------------------
# Fused Pallas kernel (per batch block): conv1+ReLU, *emb, conv2a+ReLU,
# conv2b, global max-pool, conv3 head.  Everything stays in VMEM/vregs.
# ----------------------------------------------------------------------------
def _illumination_kernel(x_ref, emb_ref, coord_ref,
                         w1_ref, b1_ref,
                         w2a_ref, b2a_ref,
                         w2b_ref, b2b_ref,
                         w3_ref, b3_ref,
                         o_ref, *, W2, oh, ow, slot, bblk):
    f32, bf16 = jnp.float32, jnp.bfloat16

    # Per-lane (row, col) coordinates on the (H2, W2) space-to-depth grid
    # (periodic per packed-image lane slot).  Used to build the 3x3 tap
    # validity masks and the pooling mask fully in-kernel.
    coords = coord_ref[...]                       # (2, L) int32
    yy = coords[0:1, :]
    xx = coords[1:2, :]
    col_ok = (yy < oh) & (xx < ow)                # lanes holding valid outputs

    # ---- conv1: 7x7/stride-2 conv == 4x4/stride-1 valid conv on the s2d
    # input.  Patches built from 16 lane-rolls of the (16, L) bf16 input.
    # Taps of *valid* output columns never wrap or leave the image's lane
    # slot, so no masks are needed here; garbage at invalid columns is killed
    # by the -inf mask before the max-pool.
    x16 = x_ref[0]                                # (16, L) bf16
    pieces = []
    for ky in range(4):
        for kx in range(4):
            off = ky * W2 + kx
            pieces.append(x16 if off == 0 else jnp.roll(x16, shift=-off, axis=1))
    patches1 = jnp.concatenate(pieces, axis=0)    # (256, L) bf16
    y = jnp.dot(w1_ref[...], patches1, preferred_element_type=f32)   # (64, L)
    y = jnp.maximum(y + b1_ref[...], 0.0)

    # ---- * embedding (per packed image: lanes [j*slot, (j+1)*slot)).
    emb = emb_ref[0]                              # (64, bblk) f32
    y = jnp.concatenate(
        [y[:, j * slot:(j + 1) * slot] * emb[:, j:j + 1] for j in range(bblk)],
        axis=1)

    # ---- 3x3 same-padded convs on the (oh, ow) grid embedded in the (H2, W2)
    # flat layout: 8 bf16 lane-rolls + in-kernel boundary selects, one K=576
    # MXU matmul each.
    def conv3x3(x_f32, w_ref, b_ref):
        xb = x_f32.astype(bf16)                   # (64, L) bf16
        taps = []
        for dy in (-1, 0, 1):
            for dx in (-1, 0, 1):
                off = dy * W2 + dx
                if off == 0:
                    taps.append(xb)               # center tap: no shift/mask
                else:
                    ok = ((yy + dy >= 0) & (yy + dy < oh) &
                          (xx + dx >= 0) & (xx + dx < ow))
                    shifted = jnp.roll(xb, shift=-off, axis=1)
                    taps.append(jnp.where(ok, shifted, jnp.zeros((), bf16)))
        patches = jnp.concatenate(taps, axis=0)   # (576, L) bf16
        return jnp.dot(w_ref[...], patches, preferred_element_type=f32) + b_ref[...]

    y = jnp.maximum(conv3x3(y, w2a_ref, b2a_ref), 0.0)     # conv2a + ReLU
    y = conv3x3(y, w2b_ref, b2b_ref)                        # conv2b (no ReLU)

    # ---- AdaptiveMaxPool2d(1): -inf out the invalid/padded lanes (conv2b has
    # no ReLU so real activations can be negative), then reduce per image.
    y = jnp.where(col_ok, y, -jnp.inf)
    pooled = jnp.concatenate(
        [jnp.max(y[:, j * slot:(j + 1) * slot], axis=1, keepdims=True)
         for j in range(bblk)], axis=1)                     # (64, bblk) f32

    # ---- conv3: 1x1 conv 64 -> 4 head on the pooled vectors.
    o_ref[0] = jnp.dot(w3_ref[...], pooled,
                       preferred_element_type=f32) + b3_ref[...]


# ----------------------------------------------------------------------------
# Illumination.forward
# ----------------------------------------------------------------------------
def illumination_forward(raw, embedding, params):
    B, Cin, H, W = raw.shape
    assert Cin == 4 and H >= 7 and W >= 7
    f32, bf16 = jnp.float32, jnp.bfloat16

    oh = (H - 7) // 2 + 1
    ow = (W - 7) // 2 + 1
    H2 = -(-H // 2)                     # ceil(H/2)
    W2 = -(-W // 2)
    assert oh == H2 - 3 and ow == W2 - 3    # s2d 4x4 valid conv == 7x7 s2 conv

    # Space-to-depth relayout of raw: (B,4,H,W) -> (B,16,H2,W2) -> flat lanes.
    x = jnp.pad(raw, ((0, 0), (0, 0), (0, 2 * H2 - H), (0, 2 * W2 - W)))
    x = x.reshape(B, 4, H2, 2, W2, 2).transpose(0, 1, 3, 5, 2, 4)
    x = x.reshape(B, 16, H2 * W2)

    # Pad each image's flat spatial axis to a 128-aligned lane slot, then pack
    # several images per grid step along the lane axis so the MXU sees N>=256.
    slot = ((H2 * W2 + 127) // 128) * 128
    x = jnp.pad(x, ((0, 0), (0, 0), (0, slot - H2 * W2))).astype(bf16)
    bblk = max(d for d in range(1, B + 1)
               if B % d == 0 and d * slot <= max(256, slot))
    # (For v7x's 2 TensorCores, prefer an even number of grid steps when B is
    #  large enough; with tiny B the single fused step dominates anyway.)
    nblk = B // bblk
    L = bblk * slot
    x = x.reshape(nblk, bblk, 16, slot).transpose(0, 2, 1, 3).reshape(nblk, 16, L)

    # Per-image embedding, packed to match the lane layout.
    emb = embedding.reshape(B, 64).astype(f32)
    emb = emb.reshape(nblk, bblk, 64).transpose(0, 2, 1)     # (nblk, 64, bblk)

    # Tiny per-lane (row, col) coordinate table (int32), shared by all steps.
    p = np.arange(L, dtype=np.int64) % slot
    coords = jnp.asarray(np.stack([p // W2, p % W2]).astype(np.int32))  # (2, L)

    # Weights.  conv1: zero-pad 7x7 -> 8x8, space-to-depth to (64,16,4,4),
    # columns ordered (ky, kx, c16) to match the in-kernel patch rows.
    w1p = jnp.pad(params["w1"], ((0, 0), (0, 0), (0, 1), (0, 1)))
    w1f = (w1p.reshape(64, 4, 4, 2, 4, 2).transpose(0, 2, 4, 1, 3, 5)
              .reshape(64, 256).astype(bf16))
    w2af = params["w2a"].transpose(0, 2, 3, 1).reshape(64, 9 * 64).astype(bf16)
    w2bf = params["w2b"].transpose(0, 2, 3, 1).reshape(64, 9 * 64).astype(bf16)
    w3f = params["w3"].reshape(4, 64).astype(f32)
    b1 = params["b1"].reshape(64, 1).astype(f32)
    b2a = params["b2a"].reshape(64, 1).astype(f32)
    b2b = params["b2b"].reshape(64, 1).astype(f32)
    b3 = params["b3"].reshape(4, 1).astype(f32)

    def const(*shape):
        return pl.BlockSpec(shape, lambda i: (0,) * len(shape))

    # Per-step working-set estimate -> explicit scoped-VMEM limit
    # (>= 32 MiB beats the v5e/v6e defaults, <= 56 MiB fits v7x's 64 MiB).
    est = (2 * 16 * 2 + 256 * 2 + 2 * 576 * 2 + 6 * 64 * 4) * L
    vmem_limit = int(min(56 * 2**20, max(32 * 2**20, 2 * est)))

    out = pl.pallas_call(
        functools.partial(_illumination_kernel, W2=W2, oh=oh, ow=ow,
                          slot=slot, bblk=bblk),
        grid=(nblk,),
        in_specs=[
            pl.BlockSpec((1, 16, L), lambda i: (i, 0, 0)),    # s2d raw (bf16)
            pl.BlockSpec((1, 64, bblk), lambda i: (i, 0, 0)), # embedding
            const(2, L),                                      # lane coords
            const(64, 256), const(64, 1),                     # conv1 w, b
            const(64, 9 * 64), const(64, 1),                  # conv2a w, b
            const(64, 9 * 64), const(64, 1),                  # conv2b w, b
            const(4, 64), const(4, 1),                        # conv3 w, b
        ],
        out_specs=pl.BlockSpec((1, 4, bblk), lambda i: (i, 0, 0)),
        out_shape=jax.ShapeDtypeStruct((nblk, 4, bblk), f32),
        compiler_params=pltpu.CompilerParams(
            dimension_semantics=("parallel",),
            vmem_limit_bytes=vmem_limit),
    )(x, emb, coords, w1f, b1, w2af, b2a, w2bf, b2b, w3f, b3)

    return out.transpose(0, 2, 1).reshape(B, 4, 1, 1)         # NCHW like torch


# ----------------------------------------------------------------------------
# Pure-JAX reference (lax.conv, f32) for validation
# ----------------------------------------------------------------------------
def ref_forward(raw, embedding, params):
    dn = ("NCHW", "OIHW", "NCHW")

    def conv(x, w, b, stride, pad):
        y = lax.conv_general_dilated(
            x, w, (stride, stride), [(pad, pad), (pad, pad)],
            dimension_numbers=dn, precision=lax.Precision.HIGHEST)
        return y + b.reshape(1, -1, 1, 1)

    x = jnp.maximum(conv(raw, params["w1"], params["b1"], 2, 0), 0.0)
    x = x * embedding
    x = jnp.maximum(conv(x, params["w2a"], params["b2a"], 1, 1), 0.0)
    x = conv(x, params["w2b"], params["b2b"], 1, 1)
    x = jnp.max(x, axis=(2, 3), keepdims=True)
    x = conv(x, params["w3"], params["b3"], 1, 0)
    return x


# ----------------------------------------------------------------------------
if __name__ == "__main__":
    key = jax.random.PRNGKey(0)
    ks = jax.random.split(key, 10)

    B, Cin, H, W = 2, 4, 21, 21          # conv1 (k=7, s=2, p=0) -> 8x8 spatial
    raw = jax.random.normal(ks[0], (B, Cin, H, W), jnp.float32)
    embedding = jax.random.normal(ks[1], (B, 64, 1, 1), jnp.float32)

    params = {
        "w1": 0.05 * jax.random.normal(ks[2], (64, 4, 7, 7), jnp.float32),
        "b1": 0.01 * jax.random.normal(ks[3], (64,), jnp.float32),
        "w2a": 0.05 * jax.random.normal(ks[4], (64, 64, 3, 3), jnp.float32),
        "b2a": 0.01 * jax.random.normal(ks[5], (64,), jnp.float32),
        "w2b": 0.05 * jax.random.normal(ks[6], (64, 64, 3, 3), jnp.float32),
        "b2b": 0.01 * jax.random.normal(ks[7], (64,), jnp.float32),
        "w3": 0.05 * jax.random.normal(ks[8], (4, 64, 1, 1), jnp.float32),
        "b3": 0.01 * jax.random.normal(ks[9], (4,), jnp.float32),
    }

    fwd = jax.jit(illumination_forward)
    out = jax.block_until_ready(fwd(raw, embedding, params))
    ref = jax.block_until_ready(ref_forward(raw, embedding, params))

    assert out.shape == (B, 4, 1, 1), out.shape
    max_err = float(jnp.max(jnp.abs(out - ref)))
    # bf16 matmul inputs with f32 accumulation: well within a few 1e-2.
    assert jnp.allclose(out, ref, atol=3e-2, rtol=3e-2), max_err

    print("KERNEL_OK")
</pallas_src>

<mosaic_0001>
module attributes {stable_mosaic.version = 11 : i64} {
  func.func @_illumination_kernel(%arg0: i32, %arg1: memref<1x16x256xbf16, #tpu.memory_space<vmem>>, %arg2: memref<1x64x2xf32, #tpu.memory_space<vmem>>, %arg3: memref<2x256xi32, #tpu.memory_space<vmem>>, %arg4: memref<64x256xbf16, #tpu.memory_space<vmem>>, %arg5: memref<64x1xf32, #tpu.memory_space<vmem>>, %arg6: memref<64x576xbf16, #tpu.memory_space<vmem>>, %arg7: memref<64x1xf32, #tpu.memory_space<vmem>>, %arg8: memref<64x576xbf16, #tpu.memory_space<vmem>>, %arg9: memref<64x1xf32, #tpu.memory_space<vmem>>, %arg10: memref<4x64xf32, #tpu.memory_space<vmem>>, %arg11: memref<4x1xf32, #tpu.memory_space<vmem>>, %arg12: memref<1x4x2xf32, #tpu.memory_space<vmem>>) attributes {dimension_semantics = [#tpu.dimension_semantics<parallel>], iteration_bounds = array<i64: 1>, scalar_prefetch = 0 : i64, scratch_operands = 0 : i64, tpu.core_type = #tpu.core_type<tc>, window_params = [{transform_indices = @transform_0, window_bounds = array<i64: 1, 16, 256>}, {transform_indices = @transform_1, window_bounds = array<i64: 1, 64, 2>}, {pipeline_mode = #tpu.pipeline_mode<synchronous>, transform_indices = @transform_2, window_bounds = array<i64: 2, 256>}, {pipeline_mode = #tpu.pipeline_mode<synchronous>, transform_indices = @transform_3, window_bounds = array<i64: 64, 256>}, {pipeline_mode = #tpu.pipeline_mode<synchronous>, transform_indices = @transform_4, window_bounds = array<i64: 64, 1>}, {pipeline_mode = #tpu.pipeline_mode<synchronous>, transform_indices = @transform_5, window_bounds = array<i64: 64, 576>}, {pipeline_mode = #tpu.pipeline_mode<synchronous>, transform_indices = @transform_6, window_bounds = array<i64: 64, 1>}, {pipeline_mode = #tpu.pipeline_mode<synchronous>, transform_indices = @transform_7, window_bounds = array<i64: 64, 576>}, {pipeline_mode = #tpu.pipeline_mode<synchronous>, transform_indices = @transform_8, window_bounds = array<i64: 64, 1>}, {pipeline_mode = #tpu.pipeline_mode<synchronous>, transform_indices = @transform_9, window_bounds = array<i64: 4, 64>}, {pipeline_mode = #tpu.pipeline_mode<synchronous>, transform_indices = @transform_10, window_bounds = array<i64: 4, 1>}, {transform_indices = @transform_11, window_bounds = array<i64: 1, 4, 2>}]} {
    %c0 = arith.constant 0 : index
    %c0_0 = arith.constant 0 : index
    %0 = vector.load %arg3[%c0, %c0_0] : memref<2x256xi32, #tpu.memory_space<vmem>>, vector<2x256xi32>
    %1 = vector.extract_strided_slice %0 {offsets = [0, 0], sizes = [1, 256], strides = [1, 1]} : vector<2x256xi32> to vector<1x256xi32>
    %2 = vector.extract_strided_slice %0 {offsets = [1, 0], sizes = [1, 256], strides = [1, 1]} : vector<2x256xi32> to vector<1x256xi32>
    %c8_i32 = arith.constant 8 : i32
    %3 = vector.broadcast %c8_i32 : i32 to vector<1x256xi32>
    %4 = arith.cmpi slt, %1, %3 : vector<1x256xi32>
    %c8_i32_1 = arith.constant 8 : i32
    %5 = vector.broadcast %c8_i32_1 : i32 to vector<1x256xi32>
    %6 = arith.cmpi slt, %2, %5 : vector<1x256xi32>
    %7 = arith.andi %4, %6 : vector<1x256xi1>
    %c0_2 = arith.constant 0 : index
    %c0_3 = arith.constant 0 : index
    %c0_4 = arith.constant 0 : index
    %8 = vector.load %arg1[%c0_2, %c0_3, %c0_4] : memref<1x16x256xbf16, #tpu.memory_space<vmem>>, vector<1x16x256xbf16>
    %9 = vector.shape_cast %8 : vector<1x16x256xbf16> to vector<16x256xbf16>
    %10 = vector.extract_strided_slice %9 {offsets = [0, 1], sizes = [16, 255], strides = [1, 1]} : vector<16x256xbf16> to vector<16x255xbf16>
    %11 = vector.extract_strided_slice %9 {offsets = [0, 0], sizes = [16, 1], strides = [1, 1]} : vector<16x256xbf16> to vector<16x1xbf16>
    %12 = tpu.concatenate %10, %11 in 1 : vector<16x255xbf16>, vector<16x1xbf16> -> vector<16x256xbf16>
    %13 = vector.extract_strided_slice %9 {offsets = [0, 2], sizes = [16, 254], strides = [1, 1]} : vector<16x256xbf16> to vector<16x254xbf16>
    %14 = vector.extract_strided_slice %9 {offsets = [0, 0], sizes = [16, 2], strides = [1, 1]} : vector<16x256xbf16> to vector<16x2xbf16>
    %15 = tpu.concatenate %13, %14 in 1 : vector<16x254xbf16>, vector<16x2xbf16> -> vector<16x256xbf16>
    %16 = vector.extract_strided_slice %9 {offsets = [0, 3], sizes = [16, 253], strides = [1, 1]} : vector<16x256xbf16> to vector<16x253xbf16>
    %17 = vector.extract_strided_slice %9 {offsets = [0, 0], sizes = [16, 3], strides = [1, 1]} : vector<16x256xbf16> to vector<16x3xbf16>
    %18 = tpu.concatenate %16, %17 in 1 : vector<16x253xbf16>, vector<16x3xbf16> -> vector<16x256xbf16>
    %19 = vector.extract_strided_slice %9 {offsets = [0, 11], sizes = [16, 245], strides = [1, 1]} : vector<16x256xbf16> to vector<16x245xbf16>
    %20 = vector.extract_strided_slice %9 {offsets = [0, 0], sizes = [16, 11], strides = [1, 1]} : vector<16x256xbf16> to vector<16x11xbf16>
    %21 = tpu.concatenate %19, %20 in 1 : vector<16x245xbf16>, vector<16x11xbf16> -> vector<16x256xbf16>
    %22 = vector.extract_strided_slice %9 {offsets = [0, 12], sizes = [16, 244], strides = [1, 1]} : vector<16x256xbf16> to vector<16x244xbf16>
    %23 = vector.extract_strided_slice %9 {offsets = [0, 0], sizes = [16, 12], strides = [1, 1]} : vector<16x256xbf16> to vector<16x12xbf16>
    %24 = tpu.concatenate %22, %23 in 1 : vector<16x244xbf16>, vector<16x12xbf16> -> vector<16x256xbf16>
    %25 = vector.extract_strided_slice %9 {offsets = [0, 13], sizes = [16, 243], strides = [1, 1]} : vector<16x256xbf16> to vector<16x243xbf16>
    %26 = vector.extract_strided_slice %9 {offsets = [0, 0], sizes = [16, 13], strides = [1, 1]} : vector<16x256xbf16> to vector<16x13xbf16>
    %27 = tpu.concatenate %25, %26 in 1 : vector<16x243xbf16>, vector<16x13xbf16> -> vector<16x256xbf16>
    %28 = vector.extract_strided_slice %9 {offsets = [0, 14], sizes = [16, 242], strides = [1, 1]} : vector<16x256xbf16> to vector<16x242xbf16>
    %29 = vector.extract_strided_slice %9 {offsets = [0, 0], sizes = [16, 14], strides = [1, 1]} : vector<16x256xbf16> to vector<16x14xbf16>
    %30 = tpu.concatenate %28, %29 in 1 : vector<16x242xbf16>, vector<16x14xbf16> -> vector<16x256xbf16>
    %31 = vector.extract_strided_slice %9 {offsets = [0, 22], sizes = [16, 234], strides = [1, 1]} : vector<16x256xbf16> to vector<16x234xbf16>
    %32 = vector.extract_strided_slice %9 {offsets = [0, 0], sizes = [16, 22], strides = [1, 1]} : vector<16x256xbf16> to vector<16x22xbf16>
    %33 = tpu.concatenate %31, %32 in 1 : vector<16x234xbf16>, vector<16x22xbf16> -> vector<16x256xbf16>
    %34 = vector.extract_strided_slice %9 {offsets = [0, 23], sizes = [16, 233], strides = [1, 1]} : vector<16x256xbf16> to vector<16x233xbf16>
    %35 = vector.extract_strided_slice %9 {offsets = [0, 0], sizes = [16, 23], strides = [1, 1]} : vector<16x256xbf16> to vector<16x23xbf16>
    %36 = tpu.concatenate %34, %35 in 1 : vector<16x233xbf16>, vector<16x23xbf16> -> vector<16x256xbf16>
    %37 = vector.extract_strided_slice %9 {offsets = [0, 24], sizes = [16, 232], strides = [1, 1]} : vector<16x256xbf16> to vector<16x232xbf16>
    %38 = vector.extract_strided_slice %9 {offsets = [0, 0], sizes = [16, 24], strides = [1, 1]} : vector<16x256xbf16> to vector<16x24xbf16>
    %39 = tpu.concatenate %37, %38 in 1 : vector<16x232xbf16>, vector<16x24xbf16> -> vector<16x256xbf16>
    %40 = vector.extract_strided_slice %9 {offsets = [0, 25], sizes = [16, 231], strides = [1, 1]} : vector<16x256xbf16> to vector<16x231xbf16>
    %41 = vector.extract_strided_slice %9 {offsets = [0, 0], sizes = [16, 25], strides = [1, 1]} : vector<16x256xbf16> to vector<16x25xbf16>
    %42 = tpu.concatenate %40, %41 in 1 : vector<16x231xbf16>, vector<16x25xbf16> -> vector<16x256xbf16>
    %43 = vector.extract_strided_slice %9 {offsets = [0, 33], sizes = [16, 223], strides = [1, 1]} : vector<16x256xbf16> to vector<16x223xbf16>
    %44 = vector.extract_strided_slice %9 {offsets = [0, 0], sizes = [16, 33], strides = [1, 1]} : vector<16x256xbf16> to vector<16x33xbf16>
    %45 = tpu.concatenate %43, %44 in 1 : vector<16x223xbf16>, vector<16x33xbf16> -> vector<16x256xbf16>
    %46 = vector.extract_strided_slice %9 {offsets = [0, 34], sizes = [16, 222], strides = [1, 1]} : vector<16x256xbf16> to vector<16x222xbf16>
    %47 = vector.extract_strided_slice %9 {offsets = [0, 0], sizes = [16, 34], strides = [1, 1]} : vector<16x256xbf16> to vector<16x34xbf16>
    %48 = tpu.concatenate %46, %47 in 1 : vector<16x222xbf16>, vector<16x34xbf16> -> vector<16x256xbf16>
    %49 = vector.extract_strided_slice %9 {offsets = [0, 35], sizes = [16, 221], strides = [1, 1]} : vector<16x256xbf16> to vector<16x221xbf16>
    %50 = vector.extract_strided_slice %9 {offsets = [0, 0], sizes = [16, 35], strides = [1, 1]} : vector<16x256xbf16> to vector<16x35xbf16>
    %51 = tpu.concatenate %49, %50 in 1 : vector<16x221xbf16>, vector<16x35xbf16> -> vector<16x256xbf16>
    %52 = vector.extract_strided_slice %9 {offsets = [0, 36], sizes = [16, 220], strides = [1, 1]} : vector<16x256xbf16> to vector<16x220xbf16>
    %53 = vector.extract_strided_slice %9 {offsets = [0, 0], sizes = [16, 36], strides = [1, 1]} : vector<16x256xbf16> to vector<16x36xbf16>
    %54 = tpu.concatenate %52, %53 in 1 : vector<16x220xbf16>, vector<16x36xbf16> -> vector<16x256xbf16>
    %55 = tpu.concatenate %9, %12, %15, %18, %21, %24, %27, %30, %33, %36, %39, %42, %45, %48, %51, %54 in 0 : vector<16x256xbf16>, vector<16x256xbf16>, vector<16x256xbf16>, vector<16x256xbf16>, vector<16x256xbf16>, vector<16x256xbf16>, vector<16x256xbf16>, vector<16x256xbf16>, vector<16x256xbf16>, vector<16x256xbf16>, vector<16x256xbf16>, vector<16x256xbf16>, vector<16x256xbf16>, vector<16x256xbf16>, vector<16x256xbf16>, vector<16x256xbf16> -> vector<256x256xbf16>
    %c0_5 = arith.constant 0 : index
    %c0_6 = arith.constant 0 : index
    %56 = vector.load %arg4[%c0_5, %c0_6] : memref<64x256xbf16, #tpu.memory_space<vmem>>, vector<64x256xbf16>
    %cst = arith.constant dense<0.000000e+00> : vector<64x256xf32>
    %57 = tpu.matmul %56, %55, %cst {dimension_numbers = #tpu.dot_dimension_numbers<[1], [0], [0], [1], [0, 0, 1, 1], [], []>} : vector<64x256xbf16>, vector<256x256xbf16>, vector<64x256xf32> -> vector<64x256xf32>
    %c0_7 = arith.constant 0 : index
    %c0_8 = arith.constant 0 : index
    %58 = vector.load %arg5[%c0_7, %c0_8] : memref<64x1xf32, #tpu.memory_space<vmem>>, vector<64x1xf32>
    %59 = vector.broadcast %58 : vector<64x1xf32> to vector<64x256xf32>
    %60 = arith.addf %57, %59 : vector<64x256xf32>
    %cst_9 = arith.constant 0.000000e+00 : f32
    %61 = vector.broadcast %cst_9 : f32 to vector<64x256xf32>
    %62 = arith.maximumf %60, %61 : vector<64x256xf32>
    %c0_10 = arith.constant 0 : index
    %c0_11 = arith.constant 0 : index
    %c0_12 = arith.constant 0 : index
    %63 = vector.load %arg2[%c0_10, %c0_11, %c0_12] : memref<1x64x2xf32, #tpu.memory_space<vmem>>, vector<1x64x2xf32>
    %64 = vector.shape_cast %63 : vector<1x64x2xf32> to vector<64x2xf32>
    %65 = vector.extract_strided_slice %62 {offsets = [0, 0], sizes = [64, 128], strides = [1, 1]} : vector<64x256xf32> to vector<64x128xf32>
    %66 = vector.extract_strided_slice %64 {offsets = [0, 0], sizes = [64, 1], strides = [1, 1]} : vector<64x2xf32> to vector<64x1xf32>
    %67 = vector.broadcast %66 : vector<64x1xf32> to vector<64x128xf32>
    %68 = arith.mulf %65, %67 : vector<64x128xf32>
    %69 = vector.extract_strided_slice %62 {offsets = [0, 128], sizes = [64, 128], strides = [1, 1]} : vector<64x256xf32> to vector<64x128xf32>
    %70 = vector.extract_strided_slice %64 {offsets = [0, 1], sizes = [64, 1], strides = [1, 1]} : vector<64x2xf32> to vector<64x1xf32>
    %71 = vector.broadcast %70 : vector<64x1xf32> to vector<64x128xf32>
    %72 = arith.mulf %69, %71 : vector<64x128xf32>
    %73 = tpu.concatenate %68, %72 in 1 : vector<64x128xf32>, vector<64x128xf32> -> vector<64x256xf32>
    %74 = arith.truncf %73 : vector<64x256xf32> to vector<64x256xbf16>
    %c-1_i32 = arith.constant -1 : i32
    %75 = vector.broadcast %c-1_i32 : i32 to vector<1x256xi32>
    %76 = arith.addi %1, %75 : vector<1x256xi32>
    %c0_i32 = arith.constant 0 : i32
    %77 = vector.broadcast %c0_i32 : i32 to vector<1x256xi32>
    %78 = arith.cmpi sge, %76, %77 : vector<1x256xi32>
    %c-1_i32_13 = arith.constant -1 : i32
    %79 = vector.broadcast %c-1_i32_13 : i32 to vector<1x256xi32>
    %80 = arith.addi %1, %79 : vector<1x256xi32>
    %c8_i32_14 = arith.constant 8 : i32
    %81 = vector.broadcast %c8_i32_14 : i32 to vector<1x256xi32>
    %82 = arith.cmpi slt, %80, %81 : vector<1x256xi32>
    %83 = arith.andi %78, %82 : vector<1x256xi1>
    %c-1_i32_15 = arith.constant -1 : i32
    %84 = vector.broadcast %c-1_i32_15 : i32 to vector<1x256xi32>
    %85 = arith.addi %2, %84 : vector<1x256xi32>
    %c0_i32_16 = arith.constant 0 : i32
    %86 = vector.broadcast %c0_i32_16 : i32 to vector<1x256xi32>
    %87 = arith.cmpi sge, %85, %86 : vector<1x256xi32>
    %88 = arith.andi %83, %87 : vector<1x256xi1>
    %c-1_i32_17 = arith.constant -1 : i32
    %89 = vector.broadcast %c-1_i32_17 : i32 to vector<1x256xi32>
    %90 = arith.addi %2, %89 : vector<1x256xi32>
    %c8_i32_18 = arith.constant 8 : i32
    %91 = vector.broadcast %c8_i32_18 : i32 to vector<1x256xi32>
    %92 = arith.cmpi slt, %90, %91 : vector<1x256xi32>
    %93 = arith.andi %88, %92 : vector<1x256xi1>
    %94 = vector.extract_strided_slice %74 {offsets = [0, 244], sizes = [64, 12], strides = [1, 1]} : vector<64x256xbf16> to vector<64x12xbf16>
    %95 = vector.extract_strided_slice %74 {offsets = [0, 0], sizes = [64, 244], strides = [1, 1]} : vector<64x256xbf16> to vector<64x244xbf16>
    %96 = tpu.concatenate %94, %95 in 1 : vector<64x12xbf16>, vector<64x244xbf16> -> vector<64x256xbf16>
    %cst_19 = arith.constant 0.000000e+00 : bf16
    %97 = vector.shape_cast %93 : vector<1x256xi1> to vector<1x256xi1>
    %98 = vector.broadcast %97 : vector<1x256xi1> to vector<64x256xi1>
    %99 = vector.broadcast %cst_19 : bf16 to vector<64x256xbf16>
    %100 = arith.select %98, %96, %99 : vector<64x256xi1>, vector<64x256xbf16>
    %c-1_i32_20 = arith.constant -1 : i32
    %101 = vector.broadcast %c-1_i32_20 : i32 to vector<1x256xi32>
    %102 = arith.addi %1, %101 : vector<1x256xi32>
    %c0_i32_21 = arith.constant 0 : i32
    %103 = vector.broadcast %c0_i32_21 : i32 to vector<1x256xi32>
    %104 = arith.cmpi sge, %102, %103 : vector<1x256xi32>
    %c-1_i32_22 = arith.constant -1 : i32
    %105 = vector.broadcast %c-1_i32_22 : i32 to vector<1x256xi32>
    %106 = arith.addi %1, %105 : vector<1x256xi32>
    %c8_i32_23 = arith.constant 8 : i32
    %107 = vector.broadcast %c8_i32_23 : i32 to vector<1x256xi32>
    %108 = arith.cmpi slt, %106, %107 : vector<1x256xi32>
    %109 = arith.andi %104, %108 : vector<1x256xi1>
    %c0_i32_24 = arith.constant 0 : i32
    %110 = vector.broadcast %c0_i32_24 : i32 to vector<1x256xi32>
    %111 = arith.addi %2, %110 : vector<1x256xi32>
    %c0_i32_25 = arith.constant 0 : i32
    %112 = vector.broadcast %c0_i32_25 : i32 to vector<1x256xi32>
    %113 = arith.cmpi sge, %111, %112 : vector<1x256xi32>
    %114 = arith.andi %109, %113 : vector<1x256xi1>
    %c0_i32_26 = arith.constant 0 : i32
    %115 = vector.broadcast %c0_i32_26 : i32 to vector<1x256xi32>
    %116 = arith.addi %2, %115 : vector<1x256xi32>
    %c8_i32_27 = arith.constant 8 : i32
    %117 = vector.broadcast %c8_i32_27 : i32 to vector<1x256xi32>
    %118 = arith.cmpi slt, %116, %117 : vector<1x256xi32>
    %119 = arith.andi %114, %118 : vector<1x256xi1>
    %120 = vector.extract_strided_slice %74 {offsets = [0, 245], sizes = [64, 11], strides = [1, 1]} : vector<64x256xbf16> to vector<64x11xbf16>
    %121 = vector.extract_strided_slice %74 {offsets = [0, 0], sizes = [64, 245], strides = [1, 1]} : vector<64x256xbf16> to vector<64x245xbf16>
    %122 = tpu.concatenate %120, %121 in 1 : vector<64x11xbf16>, vector<64x245xbf16> -> vector<64x256xbf16>
    %cst_28 = arith.constant 0.000000e+00 : bf16
    %123 = vector.shape_cast %119 : vector<1x256xi1> to vector<1x256xi1>
    %124 = vector.broadcast %123 : vector<1x256xi1> to vector<64x256xi1>
    %125 = vector.broadcast %cst_28 : bf16 to vector<64x256xbf16>
    %126 = arith.select %124, %122, %125 : vector<64x256xi1>, vector<64x256xbf16>
    %c-1_i32_29 = arith.constant -1 : i32
    %127 = vector.broadcast %c-1_i32_29 : i32 to vector<1x256xi32>
    %128 = arith.addi %1, %127 : vector<1x256xi32>
    %c0_i32_30 = arith.constant 0 : i32
    %129 = vector.broadcast %c0_i32_30 : i32 to vector<1x256xi32>
    %130 = arith.cmpi sge, %128, %129 : vector<1x256xi32>
    %c-1_i32_31 = arith.constant -1 : i32
    %131 = vector.broadcast %c-1_i32_31 : i32 to vector<1x256xi32>
    %132 = arith.addi %1, %131 : vector<1x256xi32>
    %c8_i32_32 = arith.constant 8 : i32
    %133 = vector.broadcast %c8_i32_32 : i32 to vector<1x256xi32>
    %134 = arith.cmpi slt, %132, %133 : vector<1x256xi32>
    %135 = arith.andi %130, %134 : vector<1x256xi1>
    %c1_i32 = arith.constant 1 : i32
    %136 = vector.broadcast %c1_i32 : i32 to vector<1x256xi32>
    %137 = arith.addi %2, %136 : vector<1x256xi32>
    %c0_i32_33 = arith.constant 0 : i32
    %138 = vector.broadcast %c0_i32_33 : i32 to vector<1x256xi32>
    %139 = arith.cmpi sge, %137, %138 : vector<1x256xi32>
    %140 = arith.andi %135, %139 : vector<1x256xi1>
    %c1_i32_34 = arith.constant 1 : i32
    %141 = vector.broadcast %c1_i32_34 : i32 to vector<1x256xi32>
    %142 = arith.addi %2, %141 : vector<1x256xi32>
    %c8_i32_35 = arith.constant 8 : i32
    %143 = vector.broadcast %c8_i32_35 : i32 to vector<1x256xi32>
    %144 = arith.cmpi slt, %142, %143 : vector<1x256xi32>
    %145 = arith.andi %140, %144 : vector<1x256xi1>
    %146 = vector.extract_strided_slice %74 {offsets = [0, 246], sizes = [64, 10], strides = [1, 1]} : vector<64x256xbf16> to vector<64x10xbf16>
    %147 = vector.extract_strided_slice %74 {offsets = [0, 0], sizes = [64, 246], strides = [1, 1]} : vector<64x256xbf16> to vector<64x246xbf16>
    %148 = tpu.concatenate %146, %147 in 1 : vector<64x10xbf16>, vector<64x246xbf16> -> vector<64x256xbf16>
    %cst_36 = arith.constant 0.000000e+00 : bf16
    %149 = vector.shape_cast %145 : vector<1x256xi1> to vector<1x256xi1>
    %150 = vector.broadcast %149 : vector<1x256xi1> to vector<64x256xi1>
    %151 = vector.broadcast %cst_36 : bf16 to vector<64x256xbf16>
    %152 = arith.select %150, %148, %151 : vector<64x256xi1>, vector<64x256xbf16>
    %c0_i32_37 = arith.constant 0 : i32
    %153 = vector.broadcast %c0_i32_37 : i32 to vector<1x256xi32>
    %154 = arith.addi %1, %153 : vector<1x256xi32>
    %c0_i32_38 = arith.constant 0 : i32
    %155 = vector.broadcast %c0_i32_38 : i32 to vector<1x256xi32>
    %156 = arith.cmpi sge, %154, %155 : vector<1x256xi32>
    %c0_i32_39 = arith.constant 0 : i32
    %157 = vector.broadcast %c0_i32_39 : i32 to vector<1x256xi32>
    %158 = arith.addi %1, %157 : vector<1x256xi32>
    %c8_i32_40 = arith.constant 8 : i32
    %159 = vector.broadcast %c8_i32_40 : i32 to vector<1x256xi32>
    %160 = arith.cmpi slt, %158, %159 : vector<1x256xi32>
    %161 = arith.andi %156, %160 : vector<1x256xi1>
    %c-1_i32_41 = arith.constant -1 : i32
    %162 = vector.broadcast %c-1_i32_41 : i32 to vector<1x256xi32>
    %163 = arith.addi %2, %162 : vector<1x256xi32>
    %c0_i32_42 = arith.constant 0 : i32
    %164 = vector.broadcast %c0_i32_42 : i32 to vector<1x256xi32>
    %165 = arith.cmpi sge, %163, %164 : vector<1x256xi32>
    %166 = arith.andi %161, %165 : vector<1x256xi1>
    %c-1_i32_43 = arith.constant -1 : i32
    %167 = vector.broadcast %c-1_i32_43 : i32 to vector<1x256xi32>
    %168 = arith.addi %2, %167 : vector<1x256xi32>
    %c8_i32_44 = arith.constant 8 : i32
    %169 = vector.broadcast %c8_i32_44 : i32 to vector<1x256xi32>
    %170 = arith.cmpi slt, %168, %169 : vector<1x256xi32>
    %171 = arith.andi %166, %170 : vector<1x256xi1>
    %172 = vector.extract_strided_slice %74 {offsets = [0, 255], sizes = [64, 1], strides = [1, 1]} : vector<64x256xbf16> to vector<64x1xbf16>
    %173 = vector.extract_strided_slice %74 {offsets = [0, 0], sizes = [64, 255], strides = [1, 1]} : vector<64x256xbf16> to vector<64x255xbf16>
    %174 = tpu.concatenate %172, %173 in 1 : vector<64x1xbf16>, vector<64x255xbf16> -> vector<64x256xbf16>
    %cst_45 = arith.constant 0.000000e+00 : bf16
    %175 = vector.shape_cast %171 : vector<1x256xi1> to vector<1x256xi1>
    %176 = vector.broadcast %175 : vector<1x256xi1> to vector<64x256xi1>
    %177 = vector.broadcast %cst_45 : bf16 to vector<64x256xbf16>
    %178 = arith.select %176, %174, %177 : vector<64x256xi1>, vector<64x256xbf16>
    %c0_i32_46 = arith.constant 0 : i32
    %179 = vector.broadcast %c0_i32_46 : i32 to vector<1x256xi32>
    %180 = arith.addi %1, %179 : vector<1x256xi32>
    %c0_i32_47 = arith.constant 0 : i32
    %181 = vector.broadcast %c0_i32_47 : i32 to vector<1x256xi32>
    %182 = arith.cmpi sge, %180, %181 : vector<1x256xi32>
    %c0_i32_48 = arith.constant 0 : i32
    %183 = vector.broadcast %c0_i32_48 : i32 to vector<1x256xi32>
    %184 = arith.addi %1, %183 : vector<1x256xi32>
    %c8_i32_49 = arith.constant 8 : i32
    %185 = vector.broadcast %c8_i32_49 : i32 to vector<1x256xi32>
    %186 = arith.cmpi slt, %184, %185 : vector<1x256xi32>
    %187 = arith.andi %182, %186 : vector<1x256xi1>
    %c1_i32_50 = arith.constant 1 : i32
    %188 = vector.broadcast %c1_i32_50 : i32 to vector<1x256xi32>
    %189 = arith.addi %2, %188 : vector<1x256xi32>
    %c0_i32_51 = arith.constant 0 : i32
    %190 = vector.broadcast %c0_i32_51 : i32 to vector<1x256xi32>
    %191 = arith.cmpi sge, %189, %190 : vector<1x256xi32>
    %192 = arith.andi %187, %191 : vector<1x256xi1>
    %c1_i32_52 = arith.constant 1 : i32
    %193 = vector.broadcast %c1_i32_52 : i32 to vector<1x256xi32>
    %194 = arith.addi %2, %193 : vector<1x256xi32>
    %c8_i32_53 = arith.constant 8 : i32
    %195 = vector.broadcast %c8_i32_53 : i32 to vector<1x256xi32>
    %196 = arith.cmpi slt, %194, %195 : vector<1x256xi32>
    %197 = arith.andi %192, %196 : vector<1x256xi1>
    %198 = vector.extract_strided_slice %74 {offsets = [0, 1], sizes = [64, 255], strides = [1, 1]} : vector<64x256xbf16> to vector<64x255xbf16>
    %199 = vector.extract_strided_slice %74 {offsets = [0, 0], sizes = [64, 1], strides = [1, 1]} : vector<64x256xbf16> to vector<64x1xbf16>
    %200 = tpu.concatenate %198, %199 in 1 : vector<64x255xbf16>, vector<64x1xbf16> -> vector<64x256xbf16>
    %cst_54 = arith.constant 0.000000e+00 : bf16
    %201 = vector.shape_cast %197 : vector<1x256xi1> to vector<1x256xi1>
    %202 = vector.broadcast %201 : vector<1x256xi1> to vector<64x256xi1>
    %203 = vector.broadcast %cst_54 : bf16 to vector<64x256xbf16>
    %204 = arith.select %202, %200, %203 : vector<64x256xi1>, vector<64x256xbf16>
    %c1_i32_55 = arith.constant 1 : i32
    %205 = vector.broadcast %c1_i32_55 : i32 to vector<1x256xi32>
    %206 = arith.addi %1, %205 : vector<1x256xi32>
    %c0_i32_56 = arith.constant 0 : i32
    %207 = vector.broadcast %c0_i32_56 : i32 to vector<1x256xi32>
    %208 = arith.cmpi sge, %206, %207 : vector<1x256xi32>
    %c1_i32_57 = arith.constant 1 : i32
    %209 = vector.broadcast %c1_i32_57 : i32 to vector<1x256xi32>
    %210 = arith.addi %1, %209 : vector<1x256xi32>
    %c8_i32_58 = arith.constant 8 : i32
    %211 = vector.broadcast %c8_i32_58 : i32 to vector<1x256xi32>
    %212 = arith.cmpi slt, %210, %211 : vector<1x256xi32>
    %213 = arith.andi %208, %212 : vector<1x256xi1>
    %c-1_i32_59 = arith.constant -1 : i32
    %214 = vector.broadcast %c-1_i32_59 : i32 to vector<1x256xi32>
    %215 = arith.addi %2, %214 : vector<1x256xi32>
    %c0_i32_60 = arith.constant 0 : i32
    %216 = vector.broadcast %c0_i32_60 : i32 to vector<1x256xi32>
    %217 = arith.cmpi sge, %215, %216 : vector<1x256xi32>
    %218 = arith.andi %213, %217 : vector<1x256xi1>
    %c-1_i32_61 = arith.constant -1 : i32
    %219 = vector.broadcast %c-1_i32_61 : i32 to vector<1x256xi32>
    %220 = arith.addi %2, %219 : vector<1x256xi32>
    %c8_i32_62 = arith.constant 8 : i32
    %221 = vector.broadcast %c8_i32_62 : i32 to vector<1x256xi32>
    %222 = arith.cmpi slt, %220, %221 : vector<1x256xi32>
    %223 = arith.andi %218, %222 : vector<1x256xi1>
    %224 = vector.extract_strided_slice %74 {offsets = [0, 10], sizes = [64, 246], strides = [1, 1]} : vector<64x256xbf16> to vector<64x246xbf16>
    %225 = vector.extract_strided_slice %74 {offsets = [0, 0], sizes = [64, 10], strides = [1, 1]} : vector<64x256xbf16> to vector<64x10xbf16>
    %226 = tpu.concatenate %224, %225 in 1 : vector<64x246xbf16>, vector<64x10xbf16> -> vector<64x256xbf16>
    %cst_63 = arith.constant 0.000000e+00 : bf16
    %227 = vector.shape_cast %223 : vector<1x256xi1> to vector<1x256xi1>
    %228 = vector.broadcast %227 : vector<1x256xi1> to vector<64x256xi1>
    %229 = vector.broadcast %cst_63 : bf16 to vector<64x256xbf16>
    %230 = arith.select %228, %226, %229 : vector<64x256xi1>, vector<64x256xbf16>
    %c1_i32_64 = arith.constant 1 : i32
    %231 = vector.broadcast %c1_i32_64 : i32 to vector<1x256xi32>
    %232 = arith.addi %1, %231 : vector<1x256xi32>
    %c0_i32_65 = arith.constant 0 : i32
    %233 = vector.broadcast %c0_i32_65 : i32 to vector<1x256xi32>
    %234 = arith.cmpi sge, %232, %233 : vector<1x256xi32>
    %c1_i32_66 = arith.constant 1 : i32
    %235 = vector.broadcast %c1_i32_66 : i32 to vector<1x256xi32>
    %236 = arith.addi %1, %235 : vector<1x256xi32>
    %c8_i32_67 = arith.constant 8 : i32
    %237 = vector.broadcast %c8_i32_67 : i32 to vector<1x256xi32>
    %238 = arith.cmpi slt, %236, %237 : vector<1x256xi32>
    %239 = arith.andi %234, %238 : vector<1x256xi1>
    %c0_i32_68 = arith.constant 0 : i32
    %240 = vector.broadcast %c0_i32_68 : i32 to vector<1x256xi32>
    %241 = arith.addi %2, %240 : vector<1x256xi32>
    %c0_i32_69 = arith.constant 0 : i32
    %242 = vector.broadcast %c0_i32_69 : i32 to vector<1x256xi32>
    %243 = arith.cmpi sge, %241, %242 : vector<1x256xi32>
    %244 = arith.andi %239, %243 : vector<1x256xi1>
    %c0_i32_70 = arith.constant 0 : i32
    %245 = vector.broadcast %c0_i32_70 : i32 to vector<1x256xi32>
    %246 = arith.addi %2, %245 : vector<1x256xi32>
    %c8_i32_71 = arith.constant 8 : i32
    %247 = vector.broadcast %c8_i32_71 : i32 to vector<1x256xi32>
    %248 = arith.cmpi slt, %246, %247 : vector<1x256xi32>
    %249 = arith.andi %244, %248 : vector<1x256xi1>
    %250 = vector.extract_strided_slice %74 {offsets = [0, 11], sizes = [64, 245], strides = [1, 1]} : vector<64x256xbf16> to vector<64x245xbf16>
    %251 = vector.extract_strided_slice %74 {offsets = [0, 0], sizes = [64, 11], strides = [1, 1]} : vector<64x256xbf16> to vector<64x11xbf16>
    %252 = tpu.concatenate %250, %251 in 1 : vector<64x245xbf16>, vector<64x11xbf16> -> vector<64x256xbf16>
    %cst_72 = arith.constant 0.000000e+00 : bf16
    %253 = vector.shape_cast %249 : vector<1x256xi1> to vector<1x256xi1>
    %254 = vector.broadcast %253 : vector<1x256xi1> to vector<64x256xi1>
    %255 = vector.broadcast %cst_72 : bf16 to vector<64x256xbf16>
    %256 = arith.select %254, %252, %255 : vector<64x256xi1>, vector<64x256xbf16>
    %c1_i32_73 = arith.constant 1 : i32
    %257 = vector.broadcast %c1_i32_73 : i32 to vector<1x256xi32>
    %258 = arith.addi %1, %257 : vector<1x256xi32>
    %c0_i32_74 = arith.constant 0 : i32
    %259 = vector.broadcast %c0_i32_74 : i32 to vector<1x256xi32>
    %260 = arith.cmpi sge, %258, %259 : vector<1x256xi32>
    %c1_i32_75 = arith.constant 1 : i32
    %261 = vector.broadcast %c1_i32_75 : i32 to vector<1x256xi32>
    %262 = arith.addi %1, %261 : vector<1x256xi32>
    %c8_i32_76 = arith.constant 8 : i32
    %263 = vector.broadcast %c8_i32_76 : i32 to vector<1x256xi32>
    %264 = arith.cmpi slt, %262, %263 : vector<1x256xi32>
    %265 = arith.andi %260, %264 : vector<1x256xi1>
    %c1_i32_77 = arith.constant 1 : i32
    %266 = vector.broadcast %c1_i32_77 : i32 to vector<1x256xi32>
    %267 = arith.addi %2, %266 : vector<1x256xi32>
    %c0_i32_78 = arith.constant 0 : i32
    %268 = vector.broadcast %c0_i32_78 : i32 to vector<1x256xi32>
    %269 = arith.cmpi sge, %267, %268 : vector<1x256xi32>
    %270 = arith.andi %265, %269 : vector<1x256xi1>
    %c1_i32_79 = arith.constant 1 : i32
    %271 = vector.broadcast %c1_i32_79 : i32 to vector<1x256xi32>
    %272 = arith.addi %2, %271 : vector<1x256xi32>
    %c8_i32_80 = arith.constant 8 : i32
    %273 = vector.broadcast %c8_i32_80 : i32 to vector<1x256xi32>
    %274 = arith.cmpi slt, %272, %273 : vector<1x256xi32>
    %275 = arith.andi %270, %274 : vector<1x256xi1>
    %276 = vector.extract_strided_slice %74 {offsets = [0, 12], sizes = [64, 244], strides = [1, 1]} : vector<64x256xbf16> to vector<64x244xbf16>
    %277 = vector.extract_strided_slice %74 {offsets = [0, 0], sizes = [64, 12], strides = [1, 1]} : vector<64x256xbf16> to vector<64x12xbf16>
    %278 = tpu.concatenate %276, %277 in 1 : vector<64x244xbf16>, vector<64x12xbf16> -> vector<64x256xbf16>
    %cst_81 = arith.constant 0.000000e+00 : bf16
    %279 = vector.shape_cast %275 : vector<1x256xi1> to vector<1x256xi1>
    %280 = vector.broadcast %279 : vector<1x256xi1> to vector<64x256xi1>
    %281 = vector.broadcast %cst_81 : bf16 to vector<64x256xbf16>
    %282 = arith.select %280, %278, %281 : vector<64x256xi1>, vector<64x256xbf16>
    %283 = tpu.concatenate %100, %126, %152, %178, %74, %204, %230, %256, %282 in 0 : vector<64x256xbf16>, vector<64x256xbf16>, vector<64x256xbf16>, vector<64x256xbf16>, vector<64x256xbf16>, vector<64x256xbf16>, vector<64x256xbf16>, vector<64x256xbf16>, vector<64x256xbf16> -> vector<576x256xbf16>
    %c0_82 = arith.constant 0 : index
    %c0_83 = arith.constant 0 : index
    %284 = vector.load %arg6[%c0_82, %c0_83] : memref<64x576xbf16, #tpu.memory_space<vmem>>, vector<64x576xbf16>
    %cst_84 = arith.constant dense<0.000000e+00> : vector<64x256xf32>
    %285 = tpu.matmul %284, %283, %cst_84 {dimension_numbers = #tpu.dot_dimension_numbers<[1], [0], [0], [1], [0, 0, 1, 1], [], []>} : vector<64x576xbf16>, vector<576x256xbf16>, vector<64x256xf32> -> vector<64x256xf32>
    %c0_85 = arith.constant 0 : index
    %c0_86 = arith.constant 0 : index
    %286 = vector.load %arg7[%c0_85, %c0_86] : memref<64x1xf32, #tpu.memory_space<vmem>>, vector<64x1xf32>
    %287 = vector.broadcast %286 : vector<64x1xf32> to vector<64x256xf32>
    %288 = arith.addf %285, %287 : vector<64x256xf32>
    %cst_87 = arith.constant 0.000000e+00 : f32
    %289 = vector.broadcast %cst_87 : f32 to vector<64x256xf32>
    %290 = arith.maximumf %288, %289 : vector<64x256xf32>
    %291 = arith.truncf %290 : vector<64x256xf32> to vector<64x256xbf16>
    %c-1_i32_88 = arith.constant -1 : i32
    %292 = vector.broadcast %c-1_i32_88 : i32 to vector<1x256xi32>
    %293 = arith.addi %1, %292 : vector<1x256xi32>
    %c0_i32_89 = arith.constant 0 : i32
    %294 = vector.broadcast %c0_i32_89 : i32 to vector<1x256xi32>
    %295 = arith.cmpi sge, %293, %294 : vector<1x256xi32>
    %c-1_i32_90 = arith.constant -1 : i32
    %296 = vector.broadcast %c-1_i32_90 : i32 to vector<1x256xi32>
    %297 = arith.addi %1, %296 : vector<1x256xi32>
    %c8_i32_91 = arith.constant 8 : i32
    %298 = vector.broadcast %c8_i32_91 : i32 to vector<1x256xi32>
    %299 = arith.cmpi slt, %297, %298 : vector<1x256xi32>
    %300 = arith.andi %295, %299 : vector<1x256xi1>
    %c-1_i32_92 = arith.constant -1 : i32
    %301 = vector.broadcast %c-1_i32_92 : i32 to vector<1x256xi32>
    %302 = arith.addi %2, %301 : vector<1x256xi32>
    %c0_i32_93 = arith.constant 0 : i32
    %303 = vector.broadcast %c0_i32_93 : i32 to vector<1x256xi32>
    %304 = arith.cmpi sge, %302, %303 : vector<1x256xi32>
    %305 = arith.andi %300, %304 : vector<1x256xi1>
    %c-1_i32_94 = arith.constant -1 : i32
    %306 = vector.broadcast %c-1_i32_94 : i32 to vector<1x256xi32>
    %307 = arith.addi %2, %306 : vector<1x256xi32>
    %c8_i32_95 = arith.constant 8 : i32
    %308 = vector.broadcast %c8_i32_95 : i32 to vector<1x256xi32>
    %309 = arith.cmpi slt, %307, %308 : vector<1x256xi32>
    %310 = arith.andi %305, %309 : vector<1x256xi1>
    %311 = vector.extract_strided_slice %291 {offsets = [0, 244], sizes = [64, 12], strides = [1, 1]} : vector<64x256xbf16> to vector<64x12xbf16>
    %312 = vector.extract_strided_slice %291 {offsets = [0, 0], sizes = [64, 244], strides = [1, 1]} : vector<64x256xbf16> to vector<64x244xbf16>
    %313 = tpu.concatenate %311, %312 in 1 : vector<64x12xbf16>, vector<64x244xbf16> -> vector<64x256xbf16>
    %cst_96 = arith.constant 0.000000e+00 : bf16
    %314 = vector.shape_cast %310 : vector<1x256xi1> to vector<1x256xi1>
    %315 = vector.broadcast %314 : vector<1x256xi1> to vector<64x256xi1>
    %316 = vector.broadcast %cst_96 : bf16 to vector<64x256xbf16>
    %317 = arith.select %315, %313, %316 : vector<64x256xi1>, vector<64x256xbf16>
    %c-1_i32_97 = arith.constant -1 : i32
    %318 = vector.broadcast %c-1_i32_97 : i32 to vector<1x256xi32>
    %319 = arith.addi %1, %318 : vector<1x256xi32>
    %c0_i32_98 = arith.constant 0 : i32
    %320 = vector.broadcast %c0_i32_98 : i32 to vector<1x256xi32>
    %321 = arith.cmpi sge, %319, %320 : vector<1x256xi32>
    %c-1_i32_99 = arith.constant -1 : i32
    %322 = vector.broadcast %c-1_i32_99 : i32 to vector<1x256xi32>
    %323 = arith.addi %1, %322 : vector<1x256xi32>
    %c8_i32_100 = arith.constant 8 : i32
    %324 = vector.broadcast %c8_i32_100 : i32 to vector<1x256xi32>
    %325 = arith.cmpi slt, %323, %324 : vector<1x256xi32>
    %326 = arith.andi %321, %325 : vector<1x256xi1>
    %c0_i32_101 = arith.constant 0 : i32
    %327 = vector.broadcast %c0_i32_101 : i32 to vector<1x256xi32>
    %328 = arith.addi %2, %327 : vector<1x256xi32>
    %c0_i32_102 = arith.constant 0 : i32
    %329 = vector.broadcast %c0_i32_102 : i32 to vector<1x256xi32>
    %330 = arith.cmpi sge, %328, %329 : vector<1x256xi32>
    %331 = arith.andi %326, %330 : vector<1x256xi1>
    %c0_i32_103 = arith.constant 0 : i32
    %332 = vector.broadcast %c0_i32_103 : i32 to vector<1x256xi32>
    %333 = arith.addi %2, %332 : vector<1x256xi32>
    %c8_i32_104 = arith.constant 8 : i32
    %334 = vector.broadcast %c8_i32_104 : i32 to vector<1x256xi32>
    %335 = arith.cmpi slt, %333, %334 : vector<1x256xi32>
    %336 = arith.andi %331, %335 : vector<1x256xi1>
    %337 = vector.extract_strided_slice %291 {offsets = [0, 245], sizes = [64, 11], strides = [1, 1]} : vector<64x256xbf16> to vector<64x11xbf16>
    %338 = vector.extract_strided_slice %291 {offsets = [0, 0], sizes = [64, 245], strides = [1, 1]} : vector<64x256xbf16> to vector<64x245xbf16>
    %339 = tpu.concatenate %337, %338 in 1 : vector<64x11xbf16>, vector<64x245xbf16> -> vector<64x256xbf16>
    %cst_105 = arith.constant 0.000000e+00 : bf16
    %340 = vector.shape_cast %336 : vector<1x256xi1> to vector<1x256xi1>
    %341 = vector.broadcast %340 : vector<1x256xi1> to vector<64x256xi1>
    %342 = vector.broadcast %cst_105 : bf16 to vector<64x256xbf16>
    %343 = arith.select %341, %339, %342 : vector<64x256xi1>, vector<64x256xbf16>
    %c-1_i32_106 = arith.constant -1 : i32
    %344 = vector.broadcast %c-1_i32_106 : i32 to vector<1x256xi32>
    %345 = arith.addi %1, %344 : vector<1x256xi32>
    %c0_i32_107 = arith.constant 0 : i32
    %346 = vector.broadcast %c0_i32_107 : i32 to vector<1x256xi32>
    %347 = arith.cmpi sge, %345, %346 : vector<1x256xi32>
    %c-1_i32_108 = arith.constant -1 : i32
    %348 = vector.broadcast %c-1_i32_108 : i32 to vector<1x256xi32>
    %349 = arith.addi %1, %348 : vector<1x256xi32>
    %c8_i32_109 = arith.constant 8 : i32
    %350 = vector.broadcast %c8_i32_109 : i32 to vector<1x256xi32>
    %351 = arith.cmpi slt, %349, %350 : vector<1x256xi32>
    %352 = arith.andi %347, %351 : vector<1x256xi1>
    %c1_i32_110 = arith.constant 1 : i32
    %353 = vector.broadcast %c1_i32_110 : i32 to vector<1x256xi32>
    %354 = arith.addi %2, %353 : vector<1x256xi32>
    %c0_i32_111 = arith.constant 0 : i32
    %355 = vector.broadcast %c0_i32_111 : i32 to vector<1x256xi32>
    %356 = arith.cmpi sge, %354, %355 : vector<1x256xi32>
    %357 = arith.andi %352, %356 : vector<1x256xi1>
    %c1_i32_112 = arith.constant 1 : i32
    %358 = vector.broadcast %c1_i32_112 : i32 to vector<1x256xi32>
    %359 = arith.addi %2, %358 : vector<1x256xi32>
    %c8_i32_113 = arith.constant 8 : i32
    %360 = vector.broadcast %c8_i32_113 : i32 to vector<1x256xi32>
    %361 = arith.cmpi slt, %359, %360 : vector<1x256xi32>
    %362 = arith.andi %357, %361 : vector<1x256xi1>
    %363 = vector.extract_strided_slice %291 {offsets = [0, 246], sizes = [64, 10], strides = [1, 1]} : vector<64x256xbf16> to vector<64x10xbf16>
    %364 = vector.extract_strided_slice %291 {offsets = [0, 0], sizes = [64, 246], strides = [1, 1]} : vector<64x256xbf16> to vector<64x246xbf16>
    %365 = tpu.concatenate %363, %364 in 1 : vector<64x10xbf16>, vector<64x246xbf16> -> vector<64x256xbf16>
    %cst_114 = arith.constant 0.000000e+00 : bf16
    %366 = vector.shape_cast %362 : vector<1x256xi1> to vector<1x256xi1>
    %367 = vector.broadcast %366 : vector<1x256xi1> to vector<64x256xi1>
    %368 = vector.broadcast %cst_114 : bf16 to vector<64x256xbf16>
    %369 = arith.select %367, %365, %368 : vector<64x256xi1>, vector<64x256xbf16>
    %c0_i32_115 = arith.constant 0 : i32
    %370 = vector.broadcast %c0_i32_115 : i32 to vector<1x256xi32>
    %371 = arith.addi %1, %370 : vector<1x256xi32>
    %c0_i32_116 = arith.constant 0 : i32
    %372 = vector.broadcast %c0_i32_116 : i32 to vector<1x256xi32>
    %373 = arith.cmpi sge, %371, %372 : vector<1x256xi32>
    %c0_i32_117 = arith.constant 0 : i32
    %374 = vector.broadcast %c0_i32_117 : i32 to vector<1x256xi32>
    %375 = arith.addi %1, %374 : vector<1x256xi32>
    %c8_i32_118 = arith.constant 8 : i32
    %376 = vector.broadcast %c8_i32_118 : i32 to vector<1x256xi32>
    %377 = arith.cmpi slt, %375, %376 : vector<1x256xi32>
    %378 = arith.andi %373, %377 : vector<1x256xi1>
    %c-1_i32_119 = arith.constant -1 : i32
    %379 = vector.broadcast %c-1_i32_119 : i32 to vector<1x256xi32>
    %380 = arith.addi %2, %379 : vector<1x256xi32>
    %c0_i32_120 = arith.constant 0 : i32
    %381 = vector.broadcast %c0_i32_120 : i32 to vector<1x256xi32>
    %382 = arith.cmpi sge, %380, %381 : vector<1x256xi32>
    %383 = arith.andi %378, %382 : vector<1x256xi1>
    %c-1_i32_121 = arith.constant -1 : i32
    %384 = vector.broadcast %c-1_i32_121 : i32 to vector<1x256xi32>
    %385 = arith.addi %2, %384 : vector<1x256xi32>
    %c8_i32_122 = arith.constant 8 : i32
    %386 = vector.broadcast %c8_i32_122 : i32 to vector<1x256xi32>
    %387 = arith.cmpi slt, %385, %386 : vector<1x256xi32>
    %388 = arith.andi %383, %387 : vector<1x256xi1>
    %389 = vector.extract_strided_slice %291 {offsets = [0, 255], sizes = [64, 1], strides = [1, 1]} : vector<64x256xbf16> to vector<64x1xbf16>
    %390 = vector.extract_strided_slice %291 {offsets = [0, 0], sizes = [64, 255], strides = [1, 1]} : vector<64x256xbf16> to vector<64x255xbf16>
    %391 = tpu.concatenate %389, %390 in 1 : vector<64x1xbf16>, vector<64x255xbf16> -> vector<64x256xbf16>
    %cst_123 = arith.constant 0.000000e+00 : bf16
    %392 = vector.shape_cast %388 : vector<1x256xi1> to vector<1x256xi1>
    %393 = vector.broadcast %392 : vector<1x256xi1> to vector<64x256xi1>
    %394 = vector.broadcast %cst_123 : bf16 to vector<64x256xbf16>
    %395 = arith.select %393, %391, %394 : vector<64x256xi1>, vector<64x256xbf16>
    %c0_i32_124 = arith.constant 0 : i32
    %396 = vector.broadcast %c0_i32_124 : i32 to vector<1x256xi32>
    %397 = arith.addi %1, %396 : vector<1x256xi32>
    %c0_i32_125 = arith.constant 0 : i32
    %398 = vector.broadcast %c0_i32_125 : i32 to vector<1x256xi32>
    %399 = arith.cmpi sge, %397, %398 : vector<1x256xi32>
    %c0_i32_126 = arith.constant 0 : i32
    %400 = vector.broadcast %c0_i32_126 : i32 to vector<1x256xi32>
    %401 = arith.addi %1, %400 : vector<1x256xi32>
    %c8_i32_127 = arith.constant 8 : i32
    %402 = vector.broadcast %c8_i32_127 : i32 to vector<1x256xi32>
    %403 = arith.cmpi slt, %401, %402 : vector<1x256xi32>
    %404 = arith.andi %399, %403 : vector<1x256xi1>
    %c1_i32_128 = arith.constant 1 : i32
    %405 = vector.broadcast %c1_i32_128 : i32 to vector<1x256xi32>
    %406 = arith.addi %2, %405 : vector<1x256xi32>
    %c0_i32_129 = arith.constant 0 : i32
    %407 = vector.broadcast %c0_i32_129 : i32 to vector<1x256xi32>
    %408 = arith.cmpi sge, %406, %407 : vector<1x256xi32>
    %409 = arith.andi %404, %408 : vector<1x256xi1>
    %c1_i32_130 = arith.constant 1 : i32
    %410 = vector.broadcast %c1_i32_130 : i32 to vector<1x256xi32>
    %411 = arith.addi %2, %410 : vector<1x256xi32>
    %c8_i32_131 = arith.constant 8 : i32
    %412 = vector.broadcast %c8_i32_131 : i32 to vector<1x256xi32>
    %413 = arith.cmpi slt, %411, %412 : vector<1x256xi32>
    %414 = arith.andi %409, %413 : vector<1x256xi1>
    %415 = vector.extract_strided_slice %291 {offsets = [0, 1], sizes = [64, 255], strides = [1, 1]} : vector<64x256xbf16> to vector<64x255xbf16>
    %416 = vector.extract_strided_slice %291 {offsets = [0, 0], sizes = [64, 1], strides = [1, 1]} : vector<64x256xbf16> to vector<64x1xbf16>
    %417 = tpu.concatenate %415, %416 in 1 : vector<64x255xbf16>, vector<64x1xbf16> -> vector<64x256xbf16>
    %cst_132 = arith.constant 0.000000e+00 : bf16
    %418 = vector.shape_cast %414 : vector<1x256xi1> to vector<1x256xi1>
    %419 = vector.broadcast %418 : vector<1x256xi1> to vector<64x256xi1>
    %420 = vector.broadcast %cst_132 : bf16 to vector<64x256xbf16>
    %421 = arith.select %419, %417, %420 : vector<64x256xi1>, vector<64x256xbf16>
    %c1_i32_133 = arith.constant 1 : i32
    %422 = vector.broadcast %c1_i32_133 : i32 to vector<1x256xi32>
    %423 = arith.addi %1, %422 : vector<1x256xi32>
    %c0_i32_134 = arith.constant 0 : i32
    %424 = vector.broadcast %c0_i32_134 : i32 to vector<1x256xi32>
    %425 = arith.cmpi sge, %423, %424 : vector<1x256xi32>
    %c1_i32_135 = arith.constant 1 : i32
    %426 = vector.broadcast %c1_i32_135 : i32 to vector<1x256xi32>
    %427 = arith.addi %1, %426 : vector<1x256xi32>
    %c8_i32_136 = arith.constant 8 : i32
    %428 = vector.broadcast %c8_i32_136 : i32 to vector<1x256xi32>
    %429 = arith.cmpi slt, %427, %428 : vector<1x256xi32>
    %430 = arith.andi %425, %429 : vector<1x256xi1>
    %c-1_i32_137 = arith.constant -1 : i32
    %431 = vector.broadcast %c-1_i32_137 : i32 to vector<1x256xi32>
    %432 = arith.addi %2, %431 : vector<1x256xi32>
    %c0_i32_138 = arith.constant 0 : i32
    %433 = vector.broadcast %c0_i32_138 : i32 to vector<1x256xi32>
    %434 = arith.cmpi sge, %432, %433 : vector<1x256xi32>
    %435 = arith.andi %430, %434 : vector<1x256xi1>
    %c-1_i32_139 = arith.constant -1 : i32
    %436 = vector.broadcast %c-1_i32_139 : i32 to vector<1x256xi32>
    %437 = arith.addi %2, %436 : vector<1x256xi32>
    %c8_i32_140 = arith.constant 8 : i32
    %438 = vector.broadcast %c8_i32_140 : i32 to vector<1x256xi32>
    %439 = arith.cmpi slt, %437, %438 : vector<1x256xi32>
    %440 = arith.andi %435, %439 : vector<1x256xi1>
    %441 = vector.extract_strided_slice %291 {offsets = [0, 10], sizes = [64, 246], strides = [1, 1]} : vector<64x256xbf16> to vector<64x246xbf16>
    %442 = vector.extract_strided_slice %291 {offsets = [0, 0], sizes = [64, 10], strides = [1, 1]} : vector<64x256xbf16> to vector<64x10xbf16>
    %443 = tpu.concatenate %441, %442 in 1 : vector<64x246xbf16>, vector<64x10xbf16> -> vector<64x256xbf16>
    %cst_141 = arith.constant 0.000000e+00 : bf16
    %444 = vector.shape_cast %440 : vector<1x256xi1> to vector<1x256xi1>
    %445 = vector.broadcast %444 : vector<1x256xi1> to vector<64x256xi1>
    %446 = vector.broadcast %cst_141 : bf16 to vector<64x256xbf16>
    %447 = arith.select %445, %443, %446 : vector<64x256xi1>, vector<64x256xbf16>
    %c1_i32_142 = arith.constant 1 : i32
    %448 = vector.broadcast %c1_i32_142 : i32 to vector<1x256xi32>
    %449 = arith.addi %1, %448 : vector<1x256xi32>
    %c0_i32_143 = arith.constant 0 : i32
    %450 = vector.broadcast %c0_i32_143 : i32 to vector<1x256xi32>
    %451 = arith.cmpi sge, %449, %450 : vector<1x256xi32>
    %c1_i32_144 = arith.constant 1 : i32
    %452 = vector.broadcast %c1_i32_144 : i32 to vector<1x256xi32>
    %453 = arith.addi %1, %452 : vector<1x256xi32>
    %c8_i32_145 = arith.constant 8 : i32
    %454 = vector.broadcast %c8_i32_145 : i32 to vector<1x256xi32>
    %455 = arith.cmpi slt, %453, %454 : vector<1x256xi32>
    %456 = arith.andi %451, %455 : vector<1x256xi1>
    %c0_i32_146 = arith.constant 0 : i32
    %457 = vector.broadcast %c0_i32_146 : i32 to vector<1x256xi32>
    %458 = arith.addi %2, %457 : vector<1x256xi32>
    %c0_i32_147 = arith.constant 0 : i32
    %459 = vector.broadcast %c0_i32_147 : i32 to vector<1x256xi32>
    %460 = arith.cmpi sge, %458, %459 : vector<1x256xi32>
    %461 = arith.andi %456, %460 : vector<1x256xi1>
    %c0_i32_148 = arith.constant 0 : i32
    %462 = vector.broadcast %c0_i32_148 : i32 to vector<1x256xi32>
    %463 = arith.addi %2, %462 : vector<1x256xi32>
    %c8_i32_149 = arith.constant 8 : i32
    %464 = vector.broadcast %c8_i32_149 : i32 to vector<1x256xi32>
    %465 = arith.cmpi slt, %463, %464 : vector<1x256xi32>
    %466 = arith.andi %461, %465 : vector<1x256xi1>
    %467 = vector.extract_strided_slice %291 {offsets = [0, 11], sizes = [64, 245], strides = [1, 1]} : vector<64x256xbf16> to vector<64x245xbf16>
    %468 = vector.extract_strided_slice %291 {offsets = [0, 0], sizes = [64, 11], strides = [1, 1]} : vector<64x256xbf16> to vector<64x11xbf16>
    %469 = tpu.concatenate %467, %468 in 1 : vector<64x245xbf16>, vector<64x11xbf16> -> vector<64x256xbf16>
    %cst_150 = arith.constant 0.000000e+00 : bf16
    %470 = vector.shape_cast %466 : vector<1x256xi1> to vector<1x256xi1>
    %471 = vector.broadcast %470 : vector<1x256xi1> to vector<64x256xi1>
    %472 = vector.broadcast %cst_150 : bf16 to vector<64x256xbf16>
    %473 = arith.select %471, %469, %472 : vector<64x256xi1>, vector<64x256xbf16>
    %c1_i32_151 = arith.constant 1 : i32
    %474 = vector.broadcast %c1_i32_151 : i32 to vector<1x256xi32>
    %475 = arith.addi %1, %474 : vector<1x256xi32>
    %c0_i32_152 = arith.constant 0 : i32
    %476 = vector.broadcast %c0_i32_152 : i32 to vector<1x256xi32>
    %477 = arith.cmpi sge, %475, %476 : vector<1x256xi32>
    %c1_i32_153 = arith.constant 1 : i32
    %478 = vector.broadcast %c1_i32_153 : i32 to vector<1x256xi32>
    %479 = arith.addi %1, %478 : vector<1x256xi32>
    %c8_i32_154 = arith.constant 8 : i32
    %480 = vector.broadcast %c8_i32_154 : i32 to vector<1x256xi32>
    %481 = arith.cmpi slt, %479, %480 : vector<1x256xi32>
    %482 = arith.andi %477, %481 : vector<1x256xi1>
    %c1_i32_155 = arith.constant 1 : i32
    %483 = vector.broadcast %c1_i32_155 : i32 to vector<1x256xi32>
    %484 = arith.addi %2, %483 : vector<1x256xi32>
    %c0_i32_156 = arith.constant 0 : i32
    %485 = vector.broadcast %c0_i32_156 : i32 to vector<1x256xi32>
    %486 = arith.cmpi sge, %484, %485 : vector<1x256xi32>
    %487 = arith.andi %482, %486 : vector<1x256xi1>
    %c1_i32_157 = arith.constant 1 : i32
    %488 = vector.broadcast %c1_i32_157 : i32 to vector<1x256xi32>
    %489 = arith.addi %2, %488 : vector<1x256xi32>
    %c8_i32_158 = arith.constant 8 : i32
    %490 = vector.broadcast %c8_i32_158 : i32 to vector<1x256xi32>
    %491 = arith.cmpi slt, %489, %490 : vector<1x256xi32>
    %492 = arith.andi %487, %491 : vector<1x256xi1>
    %493 = vector.extract_strided_slice %291 {offsets = [0, 12], sizes = [64, 244], strides = [1, 1]} : vector<64x256xbf16> to vector<64x244xbf16>
    %494 = vector.extract_strided_slice %291 {offsets = [0, 0], sizes = [64, 12], strides = [1, 1]} : vector<64x256xbf16> to vector<64x12xbf16>
    %495 = tpu.concatenate %493, %494 in 1 : vector<64x244xbf16>, vector<64x12xbf16> -> vector<64x256xbf16>
    %cst_159 = arith.constant 0.000000e+00 : bf16
    %496 = vector.shape_cast %492 : vector<1x256xi1> to vector<1x256xi1>
    %497 = vector.broadcast %496 : vector<1x256xi1> to vector<64x256xi1>
    %498 = vector.broadcast %cst_159 : bf16 to vector<64x256xbf16>
    %499 = arith.select %497, %495, %498 : vector<64x256xi1>, vector<64x256xbf16>
    %500 = tpu.concatenate %317, %343, %369, %395, %291, %421, %447, %473, %499 in 0 : vector<64x256xbf16>, vector<64x256xbf16>, vector<64x256xbf16>, vector<64x256xbf16>, vector<64x256xbf16>, vector<64x256xbf16>, vector<64x256xbf16>, vector<64x256xbf16>, vector<64x256xbf16> -> vector<576x256xbf16>
    %c0_160 = arith.constant 0 : index
    %c0_161 = arith.constant 0 : index
    %501 = vector.load %arg8[%c0_160, %c0_161] : memref<64x576xbf16, #tpu.memory_space<vmem>>, vector<64x576xbf16>
    %cst_162 = arith.constant dense<0.000000e+00> : vector<64x256xf32>
    %502 = tpu.matmul %501, %500, %cst_162 {dimension_numbers = #tpu.dot_dimension_numbers<[1], [0], [0], [1], [0, 0, 1, 1], [], []>} : vector<64x576xbf16>, vector<576x256xbf16>, vector<64x256xf32> -> vector<64x256xf32>
    %c0_163 = arith.constant 0 : index
    %c0_164 = arith.constant 0 : index
    %503 = vector.load %arg9[%c0_163, %c0_164] : memref<64x1xf32, #tpu.memory_space<vmem>>, vector<64x1xf32>
    %504 = vector.broadcast %503 : vector<64x1xf32> to vector<64x256xf32>
    %505 = arith.addf %502, %504 : vector<64x256xf32>
    %cst_165 = arith.constant 0xFF800000 : f32
    %506 = vector.shape_cast %7 : vector<1x256xi1> to vector<1x256xi1>
    %507 = vector.broadcast %506 : vector<1x256xi1> to vector<64x256xi1>
    %508 = vector.broadcast %cst_165 : f32 to vector<64x256xf32>
    %509 = arith.select %507, %505, %508 : vector<64x256xi1>, vector<64x256xf32>
    %510 = vector.extract_strided_slice %509 {offsets = [0, 0], sizes = [64, 128], strides = [1, 1]} : vector<64x256xf32> to vector<64x128xf32>
    %cst_166 = arith.constant dense<0xFF800000> : vector<64xf32>
    %511 = vector.multi_reduction <maximumf>, %510, %cst_166 [1] : vector<64x128xf32> to vector<64xf32>
    %512 = vector.shape_cast %511 : vector<64xf32> to vector<64x1xf32>
    %513 = vector.extract_strided_slice %509 {offsets = [0, 128], sizes = [64, 128], strides = [1, 1]} : vector<64x256xf32> to vector<64x128xf32>
    %cst_167 = arith.constant dense<0xFF800000> : vector<64xf32>
    %514 = vector.multi_reduction <maximumf>, %513, %cst_167 [1] : vector<64x128xf32> to vector<64xf32>
    %515 = vector.shape_cast %514 : vector<64xf32> to vector<64x1xf32>
    %516 = tpu.concatenate %512, %515 in 1 : vector<64x1xf32>, vector<64x1xf32> -> vector<64x2xf32>
    %c0_168 = arith.constant 0 : index
    %c0_169 = arith.constant 0 : index
    %517 = vector.load %arg10[%c0_168, %c0_169] : memref<4x64xf32, #tpu.memory_space<vmem>>, vector<4x64xf32>
    %cst_170 = arith.constant dense<0.000000e+00> : vector<4x2xf32>
    %518 = tpu.matmul %517, %516, %cst_170 {dimension_numbers = #tpu.dot_dimension_numbers<[1], [0], [0], [1], [0, 0, 1, 1], [], []>} : vector<4x64xf32>, vector<64x2xf32>, vector<4x2xf32> -> vector<4x2xf32>
    %c0_171 = arith.constant 0 : index
    %c0_172 = arith.constant 0 : index
    %519 = vector.load %arg11[%c0_171, %c0_172] : memref<4x1xf32, #tpu.memory_space<vmem>>, vector<4x1xf32>
    %520 = vector.broadcast %519 : vector<4x1xf32> to vector<4x2xf32>
    %521 = arith.addf %518, %520 : vector<4x2xf32>
    %c0_173 = arith.constant 0 : index
    %c0_174 = arith.constant 0 : index
    %c0_175 = arith.constant 0 : index
    %522 = vector.load %arg12[%c0_173, %c0_174, %c0_175] : memref<1x4x2xf32, #tpu.memory_space<vmem>>, vector<1x4x2xf32>
    %523 = vector.shape_cast %522 : vector<1x4x2xf32> to vector<4x2xf32>
    %524 = vector.shape_cast %521 : vector<4x2xf32> to vector<1x4x2xf32>
    tpu.vector_store %arg12[%c0_173, %c0_174, %c0_175], %524 {strides = array<i32>} : memref<1x4x2xf32, #tpu.memory_space<vmem>>, vector<1x4x2xf32>,
    return
  }
  func.func @transform_0(%arg0: i32) -> (i32, i32, i32) {
    %c0_i32 = arith.constant 0 : i32
    %c0_i32_0 = arith.constant 0 : i32
    %c0_i32_1 = arith.constant 0 : i32
    return %arg0, %c0_i32, %c0_i32_0 : i32, i32, i32
  }
  func.func @transform_1(%arg0: i32) -> (i32, i32, i32) {
    %c0_i32 = arith.constant 0 : i32
    %c0_i32_0 = arith.constant 0 : i32
    %c0_i32_1 = arith.constant 0 : i32
    return %arg0, %c0_i32, %c0_i32_0 : i32, i32, i32
  }
  func.func @transform_2(%arg0: i32) -> (i32, i32) {
    %c0_i32 = arith.constant 0 : i32
    %c0_i32_0 = arith.constant 0 : i32
    %c0_i32_1 = arith.constant 0 : i32
    return %c0_i32, %c0_i32_0 : i32, i32
  }
  func.func @transform_3(%arg0: i32) -> (i32, i32) {
    %c0_i32 = arith.constant 0 : i32
    %c0_i32_0 = arith.constant 0 : i32
    %c0_i32_1 = arith.constant 0 : i32
    return %c0_i32, %c0_i32_0 : i32, i32
  }
  func.func @transform_4(%arg0: i32) -> (i32, i32) {
    %c0_i32 = arith.constant 0 : i32
    %c0_i32_0 = arith.constant 0 : i32
    %c0_i32_1 = arith.constant 0 : i32
    return %c0_i32, %c0_i32_0 : i32, i32
  }
  func.func @transform_5(%arg0: i32) -> (i32, i32) {
    %c0_i32 = arith.constant 0 : i32
    %c0_i32_0 = arith.constant 0 : i32
    %c0_i32_1 = arith.constant 0 : i32
    return %c0_i32, %c0_i32_0 : i32, i32
  }
  func.func @transform_6(%arg0: i32) -> (i32, i32) {
    %c0_i32 = arith.constant 0 : i32
    %c0_i32_0 = arith.constant 0 : i32
    %c0_i32_1 = arith.constant 0 : i32
    return %c0_i32, %c0_i32_0 : i32, i32
  }
  func.func @transform_7(%arg0: i32) -> (i32, i32) {
    %c0_i32 = arith.constant 0 : i32
    %c0_i32_0 = arith.constant 0 : i32
    %c0_i32_1 = arith.constant 0 : i32
    return %c0_i32, %c0_i32_0 : i32, i32
  }
  func.func @transform_8(%arg0: i32) -> (i32, i32) {
    %c0_i32 = arith.constant 0 : i32
    %c0_i32_0 = arith.constant 0 : i32
    %c0_i32_1 = arith.constant 0 : i32
    return %c0_i32, %c0_i32_0 : i32, i32
  }
  func.func @transform_9(%arg0: i32) -> (i32, i32) {
    %c0_i32 = arith.constant 0 : i32
    %c0_i32_0 = arith.constant 0 : i32
    %c0_i32_1 = arith.constant 0 : i32
    return %c0_i32, %c0_i32_0 : i32, i32
  }
  func.func @transform_10(%arg0: i32) -> (i32, i32) {
    %c0_i32 = arith.constant 0 : i32
    %c0_i32_0 = arith.constant 0 : i32
    %c0_i32_1 = arith.constant 0 : i32
    return %c0_i32, %c0_i32_0 : i32, i32
  }
  func.func @transform_11(%arg0: i32) -> (i32, i32, i32) {
    %c0_i32 = arith.constant 0 : i32
    %c0_i32_0 = arith.constant 0 : i32
    %c0_i32_1 = arith.constant 0 : i32
    return %arg0, %c0_i32, %c0_i32_0 : i32, i32, i32
  }
}

</mosaic_0001>

<llo_original>
// kernel: illumination_forward.1
$region0: #{illumination_forward.1}
  #allocation0 [shape = 'u32[]', space=smem, size = 0x4, offset = 0x4, fixed_abs, tag = 'smem constant byte address 0x4 - core index']
  #allocation1 [shape = 'u32[72,128]{1,0:T(1,128)}', space=vmem, size = 0x9000, scoped, tag = 'internal scratch']
  %s0 = inlined_call_operand.vmem [shape: bf16[1,16,256], index: 0, kind: input, shape index: {}]
  %s1 = inlined_call_operand.vmem [shape: f32[1,64,2], index: 1, kind: input, shape index: {}]
  %s2 = inlined_call_operand.vmem [shape: s32[2,256], index: 2, kind: input, shape index: {}]
  %s3 = inlined_call_operand.vmem [shape: bf16[64,256], index: 3, kind: input, shape index: {}]
  %s4 = inlined_call_operand.vmem [shape: f32[64,1], index: 4, kind: input, shape index: {}]
  %s5 = inlined_call_operand.vmem [shape: bf16[64,576], index: 5, kind: input, shape index: {}]
  %s6 = inlined_call_operand.vmem [shape: f32[64,1], index: 6, kind: input, shape index: {}]
  %s7 = inlined_call_operand.vmem [shape: bf16[64,576], index: 7, kind: input, shape index: {}]
  %s8 = inlined_call_operand.vmem [shape: f32[64,1], index: 8, kind: input, shape index: {}]
  %s9 = inlined_call_operand.vmem [shape: f32[4,64], index: 9, kind: input, shape index: {}]
  %s10 = inlined_call_operand.vmem [shape: f32[4,1], index: 10, kind: input, shape index: {}]
  %s11 = inlined_call_operand.vmem [shape: f32[1,4,2], index: 11, kind: output, shape index: {}]
  %s12 = sld [smem:[#allocation0]]
  $region54: #{illumination_forward.1} parent=0
    _
  %s14 = ssub.s32 1, %s12
  %s15 = scalar_select 0, %s14, %s12
  // Predicated region
  $region2: #{illumination_forward.1} parent=0 // pred_check
    _
  $region3: #{illumination_forward.1} parent=0 // pred_check_branch
    %17 = sbr.rel (0) target = $region5
  $region4: #{illumination_forward.1} parent=0 // pred_region
    _
  $region5: #{illumination_forward.1} parent=0 // pred_fallthru
    _
  // Predicated region
  $region6: #{illumination_forward.1} parent=0 // pred_check
    _
  $region7: #{illumination_forward.1} parent=0 // pred_check_branch
    %19 = sbr.rel (0) target = $region9
  $region8: #{illumination_forward.1} parent=0 // pred_region
    _
  $region9: #{illumination_forward.1} parent=0 // pred_fallthru
    _
  // Predicated region
  $region10: #{illumination_forward.1} parent=0 // pred_check
    _
  $region11: #{illumination_forward.1} parent=0 // pred_check_branch
    %21 = sbr.rel (0) target = $region13
  $region12: #{illumination_forward.1} parent=0 // pred_region
    _
  $region13: #{illumination_forward.1} parent=0 // pred_fallthru
    _
  // Predicated region
  $region14: #{illumination_forward.1} parent=0 // pred_check
    _
  $region15: #{illumination_forward.1} parent=0 // pred_check_branch
    %23 = sbr.rel (0) target = $region17
  $region16: #{illumination_forward.1} parent=0 // pred_region
    _
  $region17: #{illumination_forward.1} parent=0 // pred_fallthru
    _
  // Predicated region
  $region18: #{illumination_forward.1} parent=0 // pred_check
    _
  $region19: #{illumination_forward.1} parent=0 // pred_check_branch
    %25 = sbr.rel (0) target = $region21
  $region20: #{illumination_forward.1} parent=0 // pred_region
    _
  $region21: #{illumination_forward.1} parent=0 // pred_fallthru
    _
  // Predicated region
  $region22: #{illumination_forward.1} parent=0 // pred_check
    _
  $region23: #{illumination_forward.1} parent=0 // pred_check_branch
    %27 = sbr.rel (0) target = $region25
  $region24: #{illumination_forward.1} parent=0 // pred_region
    _
  $region25: #{illumination_forward.1} parent=0 // pred_fallthru
    _
  // Predicated region
  $region26: #{illumination_forward.1} parent=0 // pred_check
    _
  $region27: #{illumination_forward.1} parent=0 // pred_check_branch
    %29 = sbr.rel (0) target = $region29
  $region28: #{illumination_forward.1} parent=0 // pred_region
    _
  $region29: #{illumination_forward.1} parent=0 // pred_fallthru
    _
  // Predicated region
  $region30: #{illumination_forward.1} parent=0 // pred_check
    _
  $region31: #{illumination_forward.1} parent=0 // pred_check_branch
    %31 = sbr.rel (0) target = $region33
  $region32: #{illumination_forward.1} parent=0 // pred_region
    _
  $region33: #{illumination_forward.1} parent=0 // pred_fallthru
    _
  // Predicated region
  $region34: #{illumination_forward.1} parent=0 // pred_check
    _
  $region35: #{illumination_forward.1} parent=0 // pred_check_branch
    %33 = sbr.rel (0) target = $region37
  $region36: #{illumination_forward.1} parent=0 // pred_region
    _
  $region37: #{illumination_forward.1} parent=0 // pred_fallthru
    _
  // Predicated region
  $region38: #{illumination_forward.1} parent=0 // pred_check
    _
  $region39: #{illumination_forward.1} parent=0 // pred_check_branch
    %35 = sbr.rel (0) target = $region41
  $region40: #{illumination_forward.1} parent=0 // pred_region
    _
  $region41: #{illumination_forward.1} parent=0 // pred_fallthru
    _
  // Predicated region
  $region42: #{illumination_forward.1} parent=0 // pred_check
    _
  $region43: #{illumination_forward.1} parent=0 // pred_check_branch
    %37 = sbr.rel (0) target = $region45
  $region44: #{illumination_forward.1} parent=0 // pred_region
    _
  $region45: #{illumination_forward.1} parent=0 // pred_fallthru
    _
  %v41 = vld [vmem:[%s2] sm:$0xf]
  %vm42 = vcmp.lt.s32.totalorder %v41, 8
  %v43 = vsel %vm42, 1, 0
  %v44 = vrot.slane %v43, 7
  %v45 = vrot.slane %v44, 2
  %vm46 = vcmp.ne.s32.totalorder %v45, 0
  %vm47 = vmand %vm42, %vm46
  %v48 = vld [vmem:[%s0] sm:$0xff]
  %v49 = vld [vmem:[%s0 + $0x8] sm:$0xff]
  %v52 = vunpack.c.l.b16 %v48
  %v53 = vunpack.c.h.b16 %v48
  %v54 = vunpack.c.l.b16 %v49
  %v55 = vunpack.c.h.b16 %v49
  %v56 = vpack.c.b16 %v54, %v52
  %v57 = vpack.c.b16 %v55, %v53
  %58 = vrot.lane.b32.xlu0 %v56, 127
  %v59 = vpop.permute.xlu0 %58
  %60 = vrot.lane.b32.xlu0 %v57, 127
  %v61 = vpop.permute.xlu0 %60
  %vm62 = vcmask 1039360
  %v63 = vsel %vm62, %v59, %v61
  %vm65 = vcmask 1039360
  %v68 = vsel %vm65, %v61, %v59
  %70 = vrot.lane.b32.xlu0 %v56, 126
  %v71 = vpop.permute.xlu0 %70
  %72 = vrot.lane.b32.xlu0 %v57, 126
  %v73 = vpop.permute.xlu0 %72
  %vm74 = vcmask 1031168
  %v75 = vsel %vm74, %v71, %v73
  %vm77 = vcmask 1031168
  %v80 = vsel %vm77, %v73, %v71
  %82 = vrot.lane.b32.xlu0 %v56, 125
  %v83 = vpop.permute.xlu0 %82
  %84 = vrot.lane.b32.xlu0 %v57, 125
  %v85 = vpop.permute.xlu0 %84
  %vm86 = vcmask 1022976
  %v87 = vsel %vm86, %v83, %v85
  %vm89 = vcmask 1022976
  %v92 = vsel %vm89, %v85, %v83
  %94 = vrot.lane.b32.xlu0 %v56, 117
  %v95 = vpop.permute.xlu0 %94
  %96 = vrot.lane.b32.xlu0 %v57, 117
  %v97 = vpop.permute.xlu0 %96
  %vm98 = vcmask 957440
  %v99 = vsel %vm98, %v95, %v97
  %vm101 = vcmask 957440
  %v104 = vsel %vm101, %v97, %v95
  %106 = vrot.lane.b32.xlu0 %v56, 116
  %v107 = vpop.permute.xlu0 %106
  %108 = vrot.lane.b32.xlu0 %v57, 116
  %v109 = vpop.permute.xlu0 %108
  %vm110 = vcmask 949248
  %v111 = vsel %vm110, %v107, %v109
  %vm113 = vcmask 949248
  %v116 = vsel %vm113, %v109, %v107
  %118 = vrot.lane.b32.xlu0 %v56, 115
  %v119 = vpop.permute.xlu0 %118
  %120 = vrot.lane.b32.xlu0 %v57, 115
  %v121 = vpop.permute.xlu0 %120
  %vm122 = vcmask 941056
  %v123 = vsel %vm122, %v119, %v121
  %vm125 = vcmask 941056
  %v128 = vsel %vm125, %v121, %v119
  %130 = vrot.lane.b32.xlu0 %v56, 114
  %v131 = vpop.permute.xlu0 %130
  %132 = vrot.lane.b32.xlu0 %v57, 114
  %v133 = vpop.permute.xlu0 %132
  %vm134 = vcmask 932864
  %v135 = vsel %vm134, %v131, %v133
  %vm137 = vcmask 932864
  %v140 = vsel %vm137, %v133, %v131
  %142 = vrot.lane.b32.xlu0 %v56, 106
  %v143 = vpop.permute.xlu0 %142
  %144 = vrot.lane.b32.xlu0 %v57, 106
  %v145 = vpop.permute.xlu0 %144
  %vm146 = vcmask 867328
  %v147 = vsel %vm146, %v143, %v145
  %vm149 = vcmask 867328
  %v152 = vsel %vm149, %v145, %v143
  %154 = vrot.lane.b32.xlu0 %v56, 105
  %v155 = vpop.permute.xlu0 %154
  %156 = vrot.lane.b32.xlu0 %v57, 105
  %v157 = vpop.permute.xlu0 %156
  %vm158 = vcmask 859136
  %v159 = vsel %vm158, %v155, %v157
  %vm161 = vcmask 859136
  %v164 = vsel %vm161, %v157, %v155
  %166 = vrot.lane.b32.xlu0 %v56, 104
  %v167 = vpop.permute.xlu0 %166
  %168 = vrot.lane.b32.xlu0 %v57, 104
  %v169 = vpop.permute.xlu0 %168
  %vm170 = vcmask 850944
  %v171 = vsel %vm170, %v167, %v169
  %vm173 = vcmask 850944
  %v176 = vsel %vm173, %v169, %v167
  %178 = vrot.lane.b32.xlu0 %v56, 103
  %v179 = vpop.permute.xlu0 %178
  %180 = vrot.lane.b32.xlu0 %v57, 103
  %v181 = vpop.permute.xlu0 %180
  %vm182 = vcmask 842752
  %v183 = vsel %vm182, %v179, %v181
  %vm185 = vcmask 842752
  %v188 = vsel %vm185, %v181, %v179
  %190 = vrot.lane.b32.xlu0 %v56, 95
  %v191 = vpop.permute.xlu0 %190
  %192 = vrot.lane.b32.xlu0 %v57, 95
  %v193 = vpop.permute.xlu0 %192
  %vm194 = vcmask 777216
  %v195 = vsel %vm194, %v191, %v193
  %vm197 = vcmask 777216
  %v200 = vsel %vm197, %v193, %v191
  %202 = vrot.lane.b32.xlu0 %v56, 94
  %v203 = vpop.permute.xlu0 %202
  %204 = vrot.lane.b32.xlu0 %v57, 94
  %v205 = vpop.permute.xlu0 %204
  %vm206 = vcmask 769024
  %v207 = vsel %vm206, %v203, %v205
  %vm209 = vcmask 769024
  %v212 = vsel %vm209, %v205, %v203
  %214 = vrot.lane.b32.xlu0 %v56, 93
  %v215 = vpop.permute.xlu0 %214
  %216 = vrot.lane.b32.xlu0 %v57, 93
  %v217 = vpop.permute.xlu0 %216
  %vm218 = vcmask 760832
  %v219 = vsel %vm218, %v215, %v217
  %vm221 = vcmask 760832
  %v224 = vsel %vm221, %v217, %v215
  %226 = vrot.lane.b32.xlu0 %v56, 92
  %v227 = vpop.permute.xlu0 %226
  %228 = vrot.lane.b32.xlu0 %v57, 92
  %v229 = vpop.permute.xlu0 %228
  %vm230 = vcmask 752640
  %v231 = vsel %vm230, %v227, %v229
  %vm233 = vcmask 752640
  %v236 = vsel %vm233, %v229, %v227
  %v240 = vld [vmem:[%s3] sm:$0xff]
  %v241 = vld [vmem:[%s3 + $0x8] sm:$0xff]
  %v242 = vld [vmem:[%s3 + $0x10] sm:$0xff]
  %v243 = vld [vmem:[%s3 + $0x18] sm:$0xff]
  %v244 = vld [vmem:[%s3 + $0x20] sm:$0xff]
  %v245 = vld [vmem:[%s3 + $0x28] sm:$0xff]
  %v246 = vld [vmem:[%s3 + $0x30] sm:$0xff]
  %v247 = vld [vmem:[%s3 + $0x38] sm:$0xff]
  %v248 = vld [vmem:[%s4] sm:$0xff]
  %v249 = vld [vmem:[%s4 + $0x8] sm:$0xff]
  %v250 = vld [vmem:[%s4 + $0x10] sm:$0xff]
  %v251 = vld [vmem:[%s4 + $0x18] sm:$0xff]
  %v252 = vld [vmem:[%s4 + $0x20] sm:$0xff]
  %v253 = vld [vmem:[%s4 + $0x28] sm:$0xff]
  %v254 = vld [vmem:[%s4 + $0x30] sm:$0xff]
  %v255 = vld [vmem:[%s4 + $0x38] sm:$0xff]
  %257 = vset.pattern.permute.xlu0 0
  %258 = vperm.xlu0 %257, %v248
  %v259 = vpop.permute.xlu0 %258
  %262 = vset.pattern.permute.xlu0 0
  %263 = vperm.xlu0 %262, %v249
  %v264 = vpop.permute.xlu0 %263
  %267 = vset.pattern.permute.xlu0 0
  %268 = vperm.xlu0 %267, %v250
  %v269 = vpop.permute.xlu0 %268
  %272 = vset.pattern.permute.xlu0 0
  %273 = vperm.xlu0 %272, %v251
  %v274 = vpop.permute.xlu0 %273
  %277 = vset.pattern.permute.xlu0 0
  %278 = vperm.xlu0 %277, %v252
  %v279 = vpop.permute.xlu0 %278
  %282 = vset.pattern.permute.xlu0 0
  %283 = vperm.xlu0 %282, %v253
  %v284 = vpop.permute.xlu0 %283
  %287 = vset.pattern.permute.xlu0 0
  %288 = vperm.xlu0 %287, %v254
  %v289 = vpop.permute.xlu0 %288
  %292 = vset.pattern.permute.xlu0 0
  %293 = vperm.xlu0 %292, %v255
  %v294 = vpop.permute.xlu0 %293
  %v304 = vunpack.c.l.b16 %v240
  %v305 = vunpack.c.h.b16 %v240
  %v306 = vunpack.c.l.b16 %v241
  %v307 = vunpack.c.h.b16 %v241
  %v308 = vunpack.c.l.b16 %v242
  %v309 = vunpack.c.h.b16 %v242
  %v310 = vunpack.c.l.b16 %v243
  %v311 = vunpack.c.h.b16 %v243
  %v312 = vunpack.c.l.b16 %v244
  %v313 = vunpack.c.h.b16 %v244
  %v314 = vunpack.c.l.b16 %v245
  %v315 = vunpack.c.h.b16 %v245
  %v316 = vunpack.c.l.b16 %v246
  %v317 = vunpack.c.h.b16 %v246
  %v318 = vunpack.c.l.b16 %v247
  %v319 = vunpack.c.h.b16 %v247
  %v320 = vpack.c.b16 %v306, %v304
  %v321 = vpack.c.b16 %v307, %v305
  %v322 = vpack.c.b16 %v310, %v308
  %v323 = vpack.c.b16 %v311, %v309
  %v324 = vpack.c.b16 %v314, %v312
  %v325 = vpack.c.b16 %v315, %v313
  %v326 = vpack.c.b16 %v318, %v316
  %v327 = vpack.c.b16 %v319, %v317
  %336 = vmatpush.bf16.msra.mxu0 %v135
  %337 = vmatpush.bf16.msra.mxu0 %v123
  %338 = vmatpush.bf16.msra.mxu0 %v111
  %339 = vmatpush.bf16.msra.mxu0 %v99
  %340 = vmatpush.bf16.msra.mxu0 %v87
  %341 = vmatpush.bf16.msra.mxu0 %v75
  %342 = vmatpush.bf16.msra.mxu0 %v63
  %343 = vmatpush.bf16.msra.mxu0 %v56
  %344 = vmatmul.bf16.gmra.mxu0 %v320
  %v345 = vpop.f32.mrf.mxu0
  %v346 = vadd.f32 %v259, %v345
  %v347 = vpop.f32.mrf.mxu0
  %v348 = vadd.f32 %v264, %v347
  %349 = vmatmul.bf16.gmra.mxu0 %v322
  %v350 = vpop.f32.mrf.mxu0
  %v351 = vadd.f32 %v269, %v350
  %v352 = vpop.f32.mrf.mxu0
  %v353 = vadd.f32 %v274, %v352
  %354 = vmatmul.bf16.gmra.mxu0 %v324
  %v355 = vpop.f32.mrf.mxu0
  %v356 = vadd.f32 %v279, %v355
  %v357 = vpop.f32.mrf.mxu0
  %v358 = vadd.f32 %v284, %v357
  %359 = vmatmul.bf16.gmra.mxu0 %v326
  %v360 = vpop.f32.mrf.mxu0
  %v361 = vadd.f32 %v289, %v360
  %v362 = vpop.f32.mrf.mxu0
  %v363 = vadd.f32 %v294, %v362
  %364 = vdwg.mxu0
  %365 = vmatpush.bf16.msra.mxu0 %v231
  %366 = vmatpush.bf16.msra.mxu0 %v219
  %367 = vmatpush.bf16.msra.mxu0 %v207
  %368 = vmatpush.bf16.msra.mxu0 %v195
  %369 = vmatpush.bf16.msra.mxu0 %v183
  %370 = vmatpush.bf16.msra.mxu0 %v171
  %371 = vmatpush.bf16.msra.mxu0 %v159
  %372 = vmatpush.bf16.msra.mxu0 %v147
  %373 = vmatmul.bf16.gmra.mxu0 %v321
  %v374 = vpop.f32.mrf.mxu0
  %v375 = vadd.f32 %v346, %v374
  %v376 = vpop.f32.mrf.mxu0
  %v377 = vadd.f32 %v348, %v376
  %378 = vmatmul.bf16.gmra.mxu0 %v323
  %v379 = vpop.f32.mrf.mxu0
  %v380 = vadd.f32 %v351, %v379
  %v381 = vpop.f32.mrf.mxu0
  %v382 = vadd.f32 %v353, %v381
  %383 = vmatmul.bf16.gmra.mxu0 %v325
  %v384 = vpop.f32.mrf.mxu0
  %v385 = vadd.f32 %v356, %v384
  %v386 = vpop.f32.mrf.mxu0
  %v387 = vadd.f32 %v358, %v386
  %388 = vmatmul.bf16.gmra.mxu0 %v327
  %v389 = vpop.f32.mrf.mxu0
  %v390 = vadd.f32 %v361, %v389
  %v391 = vpop.f32.mrf.mxu0
  %v392 = vadd.f32 %v363, %v391
  %393 = vdwg.mxu0
  %394 = vmatpush.bf16.msra.mxu0 %v140
  %395 = vmatpush.bf16.msra.mxu0 %v128
  %396 = vmatpush.bf16.msra.mxu0 %v116
  %397 = vmatpush.bf16.msra.mxu0 %v104
  %398 = vmatpush.bf16.msra.mxu0 %v92
  %399 = vmatpush.bf16.msra.mxu0 %v80
  %400 = vmatpush.bf16.msra.mxu0 %v68
  %401 = vmatpush.bf16.msra.mxu0 %v57
  %402 = vmatmul.bf16.gmra.mxu0 %v320
  %v403 = vpop.f32.mrf.mxu0
  %v404 = vadd.f32 %v259, %v403
  %v405 = vpop.f32.mrf.mxu0
  %v406 = vadd.f32 %v264, %v405
  %407 = vmatmul.bf16.gmra.mxu0 %v322
  %v408 = vpop.f32.mrf.mxu0
  %v409 = vadd.f32 %v269, %v408
  %v410 = vpop.f32.mrf.mxu0
  %v411 = vadd.f32 %v274, %v410
  %412 = vmatmul.bf16.gmra.mxu0 %v324
  %v413 = vpop.f32.mrf.mxu0
  %v414 = vadd.f32 %v279, %v413
  %v415 = vpop.f32.mrf.mxu0
  %v416 = vadd.f32 %v284, %v415
  %417 = vmatmul.bf16.gmra.mxu0 %v326
  %v418 = vpop.f32.mrf.mxu0
  %v419 = vadd.f32 %v289, %v418
  %v420 = vpop.f32.mrf.mxu0
  %v421 = vadd.f32 %v294, %v420
  %422 = vdwg.mxu0
  %423 = vmatpush.bf16.msra.mxu0 %v236
  %424 = vmatpush.bf16.msra.mxu0 %v224
  %425 = vmatpush.bf16.msra.mxu0 %v212
  %426 = vmatpush.bf16.msra.mxu0 %v200
  %427 = vmatpush.bf16.msra.mxu0 %v188
  %428 = vmatpush.bf16.msra.mxu0 %v176
  %429 = vmatpush.bf16.msra.mxu0 %v164
  %430 = vmatpush.bf16.msra.mxu0 %v152
  %431 = vmatmul.bf16.gmra.mxu0 %v321
  %v432 = vpop.f32.mrf.mxu0
  %v433 = vadd.f32 %v404, %v432
  %v434 = vpop.f32.mrf.mxu0
  %v435 = vadd.f32 %v406, %v434
  %436 = vmatmul.bf16.gmra.mxu0 %v323
  %v437 = vpop.f32.mrf.mxu0
  %v438 = vadd.f32 %v409, %v437
  %v439 = vpop.f32.mrf.mxu0
  %v440 = vadd.f32 %v411, %v439
  %441 = vmatmul.bf16.gmra.mxu0 %v325
  %v442 = vpop.f32.mrf.mxu0
  %v443 = vadd.f32 %v414, %v442
  %v444 = vpop.f32.mrf.mxu0
  %v445 = vadd.f32 %v416, %v444
  %446 = vmatmul.bf16.gmra.mxu0 %v327
  %v447 = vpop.f32.mrf.mxu0
  %v448 = vadd.f32 %v419, %v447
  %v449 = vpop.f32.mrf.mxu0
  %v450 = vadd.f32 %v421, %v449
  %451 = vdwg.mxu0
  %v452 = vmax.f32 %v375, 0.0
  %v453 = vmax.f32 %v433, 0.0
  %v454 = vmax.f32 %v377, 0.0
  %v455 = vmax.f32 %v435, 0.0
  %v456 = vmax.f32 %v380, 0.0
  %v457 = vmax.f32 %v438, 0.0
  %v458 = vmax.f32 %v382, 0.0
  %v459 = vmax.f32 %v440, 0.0
  %v460 = vmax.f32 %v385, 0.0
  %v461 = vmax.f32 %v443, 0.0
  %v462 = vmax.f32 %v387, 0.0
  %v463 = vmax.f32 %v445, 0.0
  %v464 = vmax.f32 %v390, 0.0
  %v465 = vmax.f32 %v448, 0.0
  %v466 = vmax.f32 %v392, 0.0
  %v467 = vmax.f32 %v450, 0.0
  %v468 = vld [vmem:[%s1] sm:$0xff]
  %v469 = vld [vmem:[%s1 + $0x8] sm:$0xff]
  %v470 = vld [vmem:[%s1 + $0x10] sm:$0xff]
  %v471 = vld [vmem:[%s1 + $0x18] sm:$0xff]
  %v472 = vld [vmem:[%s1 + $0x20] sm:$0xff]
  %v473 = vld [vmem:[%s1 + $0x28] sm:$0xff]
  %v474 = vld [vmem:[%s1 + $0x30] sm:$0xff]
  %v475 = vld [vmem:[%s1 + $0x38] sm:$0xff]
  %477 = vset.pattern.permute.xlu0 0
  %478 = vperm.xlu0 %477, %v468
  %v479 = vpop.permute.xlu0 %478
  %482 = vset.pattern.permute.xlu0 0
  %483 = vperm.xlu0 %482, %v469
  %v484 = vpop.permute.xlu0 %483
  %487 = vset.pattern.permute.xlu0 0
  %488 = vperm.xlu0 %487, %v470
  %v489 = vpop.permute.xlu0 %488
  %492 = vset.pattern.permute.xlu0 0
  %493 = vperm.xlu0 %492, %v471
  %v494 = vpop.permute.xlu0 %493
  %497 = vset.pattern.permute.xlu0 0
  %498 = vperm.xlu0 %497, %v472
  %v499 = vpop.permute.xlu0 %498
  %502 = vset.pattern.permute.xlu0 0
  %503 = vperm.xlu0 %502, %v473
  %v504 = vpop.permute.xlu0 %503
  %507 = vset.pattern.permute.xlu0 0
  %508 = vperm.xlu0 %507, %v474
  %v509 = vpop.permute.xlu0 %508
  %512 = vset.pattern.permute.xlu0 0
  %513 = vperm.xlu0 %512, %v475
  %v514 = vpop.permute.xlu0 %513
  %v516 = vmul.f32 %v452, %v479
  %v517 = vmul.f32 %v454, %v484
  %v518 = vmul.f32 %v456, %v489
  %v519 = vmul.f32 %v458, %v494
  %v520 = vmul.f32 %v460, %v499
  %v521 = vmul.f32 %v462, %v504
  %v522 = vmul.f32 %v464, %v509
  %v523 = vmul.f32 %v466, %v514
  %524 = vset.pattern.permute.xlu0 1
  %525 = vperm.xlu0 %524, %v468
  %v526 = vpop.permute.xlu0 %525
  %528 = vset.pattern.permute.xlu0 1
  %529 = vperm.xlu0 %528, %v469
  %v530 = vpop.permute.xlu0 %529
  %532 = vset.pattern.permute.xlu0 1
  %533 = vperm.xlu0 %532, %v470
  %v534 = vpop.permute.xlu0 %533
  %536 = vset.pattern.permute.xlu0 1
  %537 = vperm.xlu0 %536, %v471
  %v538 = vpop.permute.xlu0 %537
  %540 = vset.pattern.permute.xlu0 1
  %541 = vperm.xlu0 %540, %v472
  %v542 = vpop.permute.xlu0 %541
  %544 = vset.pattern.permute.xlu0 1
  %545 = vperm.xlu0 %544, %v473
  %v546 = vpop.permute.xlu0 %545
  %548 = vset.pattern.permute.xlu0 1
  %549 = vperm.xlu0 %548, %v474
  %v550 = vpop.permute.xlu0 %549
  %552 = vset.pattern.permute.xlu0 1
  %553 = vperm.xlu0 %552, %v475
  %v554 = vpop.permute.xlu0 %553
  %v556 = vmul.f32 %v453, %v526
  %v557 = vmul.f32 %v455, %v530
  %v558 = vmul.f32 %v457, %v534
  %v559 = vmul.f32 %v459, %v538
  %v560 = vmul.f32 %v461, %v542
  %v561 = vmul.f32 %v463, %v546
  %v562 = vmul.f32 %v465, %v550
  %v563 = vmul.f32 %v467, %v554
  %v564 = vpack.c.bf16 %v556, %v516
  %v565 = vpack.c.bf16 %v557, %v517
  %v566 = vpack.c.bf16 %v558, %v518
  %v567 = vpack.c.bf16 %v559, %v519
  %v568 = vpack.c.bf16 %v560, %v520
  %v569 = vpack.c.bf16 %v561, %v521
  %v570 = vpack.c.bf16 %v562, %v522
  %v571 = vpack.c.bf16 %v563, %v523
  %v572 = vadd.s32 %v41, 4294967295
  %vm573 = vcmp.ge.s32.totalorder %v572, 0
  %vm574 = vcmp.lt.s32.totalorder %v572, 8
  %vm575 = vmand %vm573, %vm574
  %v576 = vsel %vm573, 1, 0
  %v577 = vrot.slane %v576, 7
  %v578 = vrot.slane %v577, 2
  %vm579 = vcmp.ne.s32.totalorder %v578, 0
  %vm580 = vmand %vm575, %vm579
  %v581 = vsel %vm574, 1, 0
  %v582 = vrot.slane %v581, 7
  %v583 = vrot.slane %v582, 2
  %vm584 = vcmp.ne.s32.totalorder %v583, 0
  %vm585 = vmand %vm580, %vm584
  %v594 = vunpack.c.h.b16 %v564
  %v595 = vunpack.c.h.b16 %v565
  %v596 = vunpack.c.h.b16 %v566
  %v597 = vunpack.c.h.b16 %v567
  %v598 = vunpack.c.h.b16 %v568
  %v599 = vunpack.c.h.b16 %v569
  %v600 = vunpack.c.h.b16 %v570
  %v601 = vunpack.c.h.b16 %v571
  %v602 = vpack.c.b16 %v595, %v594
  %v603 = vpack.c.b16 %v597, %v596
  %v604 = vpack.c.b16 %v599, %v598
  %v605 = vpack.c.b16 %v601, %v600
  %606 = vrot.lane.b32.xlu0 %v602, 12
  %v607 = vpop.permute.xlu0 %606
  %608 = vrot.lane.b32.xlu0 %v603, 12
  %v609 = vpop.permute.xlu0 %608
  %610 = vrot.lane.b32.xlu0 %v604, 12
  %v611 = vpop.permute.xlu0 %610
  %612 = vrot.lane.b32.xlu0 %v605, 12
  %v613 = vpop.permute.xlu0 %612
  %v614 = vunpack.c.l.b16 %v564
  %v615 = vunpack.c.l.b16 %v565
  %v616 = vunpack.c.l.b16 %v566
  %v617 = vunpack.c.l.b16 %v567
  %v618 = vunpack.c.l.b16 %v568
  %v619 = vunpack.c.l.b16 %v569
  %v620 = vunpack.c.l.b16 %v570
  %v621 = vunpack.c.l.b16 %v571
  %v622 = vpack.c.b16 %v615, %v614
  %v623 = vpack.c.b16 %v617, %v616
  %v624 = vpack.c.b16 %v619, %v618
  %v625 = vpack.c.b16 %v621, %v620
  %626 = vrot.lane.b32.xlu0 %v622, 12
  %v627 = vpop.permute.xlu0 %626
  %628 = vrot.lane.b32.xlu0 %v623, 12
  %v629 = vpop.permute.xlu0 %628
  %630 = vrot.lane.b32.xlu0 %v624, 12
  %v631 = vpop.permute.xlu0 %630
  %632 = vrot.lane.b32.xlu0 %v625, 12
  %v633 = vpop.permute.xlu0 %632
  %vm634 = vcmask 97280
  %v635 = vsel %vm634, %v627, %v607
  %v636 = vsel %vm634, %v629, %v609
  %v637 = vsel %vm634, %v631, %v611
  %v638 = vsel %vm634, %v633, %v613
  %vm643 = vcmask 97280
  %v646 = vsel %vm643, %v607, %v627
  %v650 = vsel %vm643, %v609, %v629
  %v654 = vsel %vm643, %v611, %v631
  %v658 = vsel %vm643, %v613, %v633
  %v660 = vsel %vm585, 1, 0
  %v661 = vperm.slane %v660, 0
  %v662 = vperm.slane %v660, 2
  %v663 = vperm.slane %v661, 0
  %v664 = vperm.slane %v662, 0
  %vm665 = vcmp.eq.s32.totalorder %v663, 1
  %vm666 = vcmp.eq.s32.totalorder %v664, 1
  %vm667 = vmpackc.low %vm666, %vm665
  %v668 = vsel %vm667, 65537, 0
  %v669 = vperm.slane %v668, 0
  %v670 = vperm.slane %v668, 4
  %v671 = vunpack.c.l.b16 %v669
  %v672 = vunpack.c.h.b16 %v669
  %v673 = vunpack.c.l.b16 0
  %v674 = vunpack.c.h.b16 0
  %vm675 = vcmp.ne.s32.totalorder %v671, %v673
  %vm676 = vcmp.ne.s32.totalorder %v672, %v674
  %vm677 = vmpackc.low %vm676, %vm675
  %v678 = vunpack.c.l.b16 %v670
  %v679 = vunpack.c.h.b16 %v670
  %v680 = vunpack.c.l.b16 0
  %v681 = vunpack.c.h.b16 0
  %vm682 = vcmp.ne.s32.totalorder %v678, %v680
  %vm683 = vcmp.ne.s32.totalorder %v679, %v681
  %vm684 = vmpackc.low %vm683, %vm682
  %v685 = vsel %vm677, %v646, 0
  %v686 = vsel %vm684, %v635, 0
  %v687 = vsel %vm677, %v650, 0
  %v688 = vsel %vm684, %v636, 0
  %v689 = vsel %vm677, %v654, 0
  %v690 = vsel %vm684, %v637, 0
  %v691 = vsel %vm677, %v658, 0
  %v692 = vsel %vm684, %v638, 0
  %vm693 = vcmp.ge.s32.totalorder %v41, 0
  %v694 = vsel %vm693, 1, 0
  %v695 = vrot.slane %v694, 7
  %v696 = vrot.slane %v695, 2
  %vm697 = vcmp.ne.s32.totalorder %v696, 0
  %vm698 = vmand %vm575, %vm697
  %vm699 = vmand %vm698, %vm46
  %700 = vrot.lane.b32.xlu0 %v602, 11
  %v701 = vpop.permute.xlu0 %700
  %702 = vrot.lane.b32.xlu0 %v603, 11
  %v703 = vpop.permute.xlu0 %702
  %704 = vrot.lane.b32.xlu0 %v604, 11
  %v705 = vpop.permute.xlu0 %704
  %706 = vrot.lane.b32.xlu0 %v605, 11
  %v707 = vpop.permute.xlu0 %706
  %708 = vrot.lane.b32.xlu0 %v622, 11
  %v709 = vpop.permute.xlu0 %708
  %710 = vrot.lane.b32.xlu0 %v623, 11
  %v711 = vpop.permute.xlu0 %710
  %712 = vrot.lane.b32.xlu0 %v624, 11
  %v713 = vpop.permute.xlu0 %712
  %714 = vrot.lane.b32.xlu0 %v625, 11
  %v715 = vpop.permute.xlu0 %714
  %vm716 = vcmask 89088
  %v717 = vsel %vm716, %v709, %v701
  %v718 = vsel %vm716, %v711, %v703
  %v719 = vsel %vm716, %v713, %v705
  %v720 = vsel %vm716, %v715, %v707
  %vm725 = vcmask 89088
  %v728 = vsel %vm725, %v701, %v709
  %v732 = vsel %vm725, %v703, %v711
  %v736 = vsel %vm725, %v705, %v713
  %v740 = vsel %vm725, %v707, %v715
  %v742 = vsel %vm699, 1, 0
  %v743 = vperm.slane %v742, 0
  %v744 = vperm.slane %v742, 2
  %v745 = vperm.slane %v743, 0
  %v746 = vperm.slane %v744, 0
  %vm747 = vcmp.eq.s32.totalorder %v745, 1
  %vm748 = vcmp.eq.s32.totalorder %v746, 1
  %vm749 = vmpackc.low %vm748, %vm747
  %v750 = vsel %vm749, 65537, 0
  %v751 = vperm.slane %v750, 0
  %v752 = vperm.slane %v750, 4
  %v753 = vunpack.c.l.b16 %v751
  %v754 = vunpack.c.h.b16 %v751
  %v755 = vunpack.c.l.b16 0
  %v756 = vunpack.c.h.b16 0
  %vm757 = vcmp.ne.s32.totalorder %v753, %v755
  %vm758 = vcmp.ne.s32.totalorder %v754, %v756
  %vm759 = vmpackc.low %vm758, %vm757
  %v760 = vunpack.c.l.b16 %v752
  %v761 = vunpack.c.h.b16 %v752
  %v762 = vunpack.c.l.b16 0
  %v763 = vunpack.c.h.b16 0
  %vm764 = vcmp.ne.s32.totalorder %v760, %v762
  %vm765 = vcmp.ne.s32.totalorder %v761, %v763
  %vm766 = vmpackc.low %vm765, %vm764
  %v767 = vsel %vm759, %v728, 0
  %v768 = vsel %vm766, %v717, 0
  %v769 = vsel %vm759, %v732, 0
  %v770 = vsel %vm766, %v718, 0
  %v771 = vsel %vm759, %v736, 0
  %v772 = vsel %vm766, %v719, 0
  %v773 = vsel %vm759, %v740, 0
  %v774 = vsel %vm766, %v720, 0
  %v775 = vadd.s32 %v41, 1
  %vm776 = vcmp.ge.s32.totalorder %v775, 0
  %v777 = vsel %vm776, 1, 0
  %v778 = vrot.slane %v777, 7
  %v779 = vrot.slane %v778, 2
  %vm780 = vcmp.ne.s32.totalorder %v779, 0
  %vm781 = vmand %vm575, %vm780
  %vm782 = vcmp.lt.s32.totalorder %v775, 8
  %v783 = vsel %vm782, 1, 0
  %v784 = vrot.slane %v783, 7
  %v785 = vrot.slane %v784, 2
  %vm786 = vcmp.ne.s32.totalorder %v785, 0
  %vm787 = vmand %vm781, %vm786
  %788 = vrot.lane.b32.xlu0 %v602, 10
  %v789 = vpop.permute.xlu0 %788
  %790 = vrot.lane.b32.xlu0 %v603, 10
  %v791 = vpop.permute.xlu0 %790
  %792 = vrot.lane.b32.xlu0 %v604, 10
  %v793 = vpop.permute.xlu0 %792
  %794 = vrot.lane.b32.xlu0 %v605, 10
  %v795 = vpop.permute.xlu0 %794
  %796 = vrot.lane.b32.xlu0 %v622, 10
  %v797 = vpop.permute.xlu0 %796
  %798 = vrot.lane.b32.xlu0 %v623, 10
  %v799 = vpop.permute.xlu0 %798
  %800 = vrot.lane.b32.xlu0 %v624, 10
  %v801 = vpop.permute.xlu0 %800
  %802 = vrot.lane.b32.xlu0 %v625, 10
  %v803 = vpop.permute.xlu0 %802
  %vm804 = vcmask 80896
  %v805 = vsel %vm804, %v797, %v789
  %v806 = vsel %vm804, %v799, %v791
  %v807 = vsel %vm804, %v801, %v793
  %v808 = vsel %vm804, %v803, %v795
  %vm813 = vcmask 80896
  %v816 = vsel %vm813, %v789, %v797
  %v820 = vsel %vm813, %v791, %v799
  %v824 = vsel %vm813, %v793, %v801
  %v828 = vsel %vm813, %v795, %v803
  %v830 = vsel %vm787, 1, 0
  %v831 = vperm.slane %v830, 0
  %v832 = vperm.slane %v830, 2
  %v833 = vperm.slane %v831, 0
  %v834 = vperm.slane %v832, 0
  %vm835 = vcmp.eq.s32.totalorder %v833, 1
  %vm836 = vcmp.eq.s32.totalorder %v834, 1
  %vm837 = vmpackc.low %vm836, %vm835
  %v838 = vsel %vm837, 65537, 0
  %v839 = vperm.slane %v838, 0
  %v840 = vperm.slane %v838, 4
  %v841 = vunpack.c.l.b16 %v839
  %v842 = vunpack.c.h.b16 %v839
  %v843 = vunpack.c.l.b16 0
  %v844 = vunpack.c.h.b16 0
  %vm845 = vcmp.ne.s32.totalorder %v841, %v843
  %vm846 = vcmp.ne.s32.totalorder %v842, %v844
  %vm847 = vmpackc.low %vm846, %vm845
  %v848 = vunpack.c.l.b16 %v840
  %v849 = vunpack.c.h.b16 %v840
  %v850 = vunpack.c.l.b16 0
  %v851 = vunpack.c.h.b16 0
  %vm852 = vcmp.ne.s32.totalorder %v848, %v850
  %vm853 = vcmp.ne.s32.totalorder %v849, %v851
  %vm854 = vmpackc.low %vm853, %vm852
  %v855 = vsel %vm847, %v816, 0
  %v856 = vsel %vm854, %v805, 0
  %v857 = vsel %vm847, %v820, 0
  %v858 = vsel %vm854, %v806, 0
  %v859 = vsel %vm847, %v824, 0
  %v860 = vsel %vm854, %v807, 0
  %v861 = vsel %vm847, %v828, 0
  %v862 = vsel %vm854, %v808, 0
  %vm863 = vmand %vm693, %vm42
  %vm864 = vmand %vm863, %vm579
  %vm865 = vmand %vm864, %vm584
  %866 = vrot.lane.b32.xlu0 %v602, 1
  %v867 = vpop.permute.xlu0 %866
  %868 = vrot.lane.b32.xlu0 %v603, 1
  %v869 = vpop.permute.xlu0 %868
  %870 = vrot.lane.b32.xlu0 %v604, 1
  %v871 = vpop.permute.xlu0 %870
  %872 = vrot.lane.b32.xlu0 %v605, 1
  %v873 = vpop.permute.xlu0 %872
  %874 = vrot.lane.b32.xlu0 %v622, 1
  %v875 = vpop.permute.xlu0 %874
  %876 = vrot.lane.b32.xlu0 %v623, 1
  %v877 = vpop.permute.xlu0 %876
  %878 = vrot.lane.b32.xlu0 %v624, 1
  %v879 = vpop.permute.xlu0 %878
  %880 = vrot.lane.b32.xlu0 %v625, 1
  %v881 = vpop.permute.xlu0 %880
  %vm882 = vcmask 7168
  %v883 = vsel %vm882, %v875, %v867
  %v884 = vsel %vm882, %v877, %v869
  %v885 = vsel %vm882, %v879, %v871
  %v886 = vsel %vm882, %v881, %v873
  %vm891 = vcmask 7168
  %v894 = vsel %vm891, %v867, %v875
  %v898 = vsel %vm891, %v869, %v877
  %v902 = vsel %vm891, %v871, %v879
  %v906 = vsel %vm891, %v873, %v881
  %v908 = vsel %vm865, 1, 0
  %v909 = vperm.slane %v908, 0
  %v910 = vperm.slane %v908, 2
  %v911 = vperm.slane %v909, 0
  %v912 = vperm.slane %v910, 0
  %vm913 = vcmp.eq.s32.totalorder %v911, 1
  %vm914 = vcmp.eq.s32.totalorder %v912, 1
  %vm915 = vmpackc.low %vm914, %vm913
  %v916 = vsel %vm915, 65537, 0
  %v917 = vperm.slane %v916, 0
  %v918 = vperm.slane %v916, 4
  %v919 = vunpack.c.l.b16 %v917
  %v920 = vunpack.c.h.b16 %v917
  %v921 = vunpack.c.l.b16 0
  %v922 = vunpack.c.h.b16 0
  %vm923 = vcmp.ne.s32.totalorder %v919, %v921
  %vm924 = vcmp.ne.s32.totalorder %v920, %v922
  %vm925 = vmpackc.low %vm924, %vm923
  %v926 = vunpack.c.l.b16 %v918
  %v927 = vunpack.c.h.b16 %v918
  %v928 = vunpack.c.l.b16 0
  %v929 = vunpack.c.h.b16 0
  %vm930 = vcmp.ne.s32.totalorder %v926, %v928
  %vm931 = vcmp.ne.s32.totalorder %v927, %v929
  %vm932 = vmpackc.low %vm931, %vm930
  %v933 = vsel %vm925, %v894, 0
  %v934 = vsel %vm932, %v883, 0
  %v935 = vsel %vm925, %v898, 0
  %v936 = vsel %vm932, %v884, 0
  %v937 = vsel %vm925, %v902, 0
  %v938 = vsel %vm932, %v885, 0
  %v939 = vsel %vm925, %v906, 0
  %v940 = vsel %vm932, %v886, 0
  %vm941 = vmand %vm863, %vm780
  %vm942 = vmand %vm941, %vm786
  %943 = vrot.lane.b32.xlu0 %v622, 127
  %v944 = vpop.permute.xlu0 %943
  %945 = vrot.lane.b32.xlu0 %v602, 127
  %v946 = vpop.permute.xlu0 %945
  %947 = vrot.lane.b32.xlu0 %v623, 127
  %v948 = vpop.permute.xlu0 %947
  %949 = vrot.lane.b32.xlu0 %v603, 127
  %v950 = vpop.permute.xlu0 %949
  %951 = vrot.lane.b32.xlu0 %v624, 127
  %v952 = vpop.permute.xlu0 %951
  %953 = vrot.lane.b32.xlu0 %v604, 127
  %v954 = vpop.permute.xlu0 %953
  %955 = vrot.lane.b32.xlu0 %v625, 127
  %v956 = vpop.permute.xlu0 %955
  %957 = vrot.lane.b32.xlu0 %v605, 127
  %v958 = vpop.permute.xlu0 %957
  %v959 = vsel %vm62, %v944, %v946
  %v960 = vsel %vm62, %v948, %v950
  %v961 = vsel %vm62, %v952, %v954
  %v962 = vsel %vm62, %v956, %v958
  %v969 = vsel %vm65, %v946, %v944
  %v973 = vsel %vm65, %v950, %v948
  %v977 = vsel %vm65, %v954, %v952
  %v981 = vsel %vm65, %v958, %v956
  %v983 = vsel %vm942, 1, 0
  %v984 = vperm.slane %v983, 0
  %v985 = vperm.slane %v983, 2
  %v986 = vperm.slane %v984, 0
  %v987 = vperm.slane %v985, 0
  %vm988 = vcmp.eq.s32.totalorder %v986, 1
  %vm989 = vcmp.eq.s32.totalorder %v987, 1
  %vm990 = vmpackc.low %vm989, %vm988
  %v991 = vsel %vm990, 65537, 0
  %v992 = vperm.slane %v991, 0
  %v993 = vperm.slane %v991, 4
  %v994 = vunpack.c.l.b16 %v992
  %v995 = vunpack.c.h.b16 %v992
  %v996 = vunpack.c.l.b16 0
  %v997 = vunpack.c.h.b16 0
  %vm998 = vcmp.ne.s32.totalorder %v994, %v996
  %vm999 = vcmp.ne.s32.totalorder %v995, %v997
  %vm1000 = vmpackc.low %vm999, %vm998
  %v1001 = vunpack.c.l.b16 %v993
  %v1002 = vunpack.c.h.b16 %v993
  %v1003 = vunpack.c.l.b16 0
  %v1004 = vunpack.c.h.b16 0
  %vm1005 = vcmp.ne.s32.totalorder %v1001, %v1003
  %vm1006 = vcmp.ne.s32.totalorder %v1002, %v1004
  %vm1007 = vmpackc.low %vm1006, %vm1005
  %v1008 = vsel %vm1000, %v959, 0
  %v1009 = vsel %vm1007, %v969, 0
  %v1010 = vsel %vm1000, %v960, 0
  %v1011 = vsel %vm1007, %v973, 0
  %v1012 = vsel %vm1000, %v961, 0
  %v1013 = vsel %vm1007, %v977, 0
  %v1014 = vsel %vm1000, %v962, 0
  %v1015 = vsel %vm1007, %v981, 0
  %vm1016 = vmand %vm776, %vm782
  %vm1017 = vmand %vm1016, %vm579
  %vm1018 = vmand %vm1017, %vm584
  %1019 = vrot.lane.b32.xlu0 %v622, 118
  %v1020 = vpop.permute.xlu0 %1019
  %1021 = vrot.lane.b32.xlu0 %v602, 118
  %v1022 = vpop.permute.xlu0 %1021
  %1023 = vrot.lane.b32.xlu0 %v623, 118
  %v1024 = vpop.permute.xlu0 %1023
  %1025 = vrot.lane.b32.xlu0 %v603, 118
  %v1026 = vpop.permute.xlu0 %1025
  %1027 = vrot.lane.b32.xlu0 %v624, 118
  %v1028 = vpop.permute.xlu0 %1027
  %1029 = vrot.lane.b32.xlu0 %v604, 118
  %v1030 = vpop.permute.xlu0 %1029
  %1031 = vrot.lane.b32.xlu0 %v625, 118
  %v1032 = vpop.permute.xlu0 %1031
  %1033 = vrot.lane.b32.xlu0 %v605, 118
  %v1034 = vpop.permute.xlu0 %1033
  %vm1035 = vcmask 965632
  %v1036 = vsel %vm1035, %v1020, %v1022
  %v1037 = vsel %vm1035, %v1024, %v1026
  %v1038 = vsel %vm1035, %v1028, %v1030
  %v1039 = vsel %vm1035, %v1032, %v1034
  %vm1044 = vcmask 965632
  %v1047 = vsel %vm1044, %v1022, %v1020
  %v1051 = vsel %vm1044, %v1026, %v1024
  %v1055 = vsel %vm1044, %v1030, %v1028
  %v1059 = vsel %vm1044, %v1034, %v1032
  %v1061 = vsel %vm1018, 1, 0
  %v1062 = vperm.slane %v1061, 0
  %v1063 = vperm.slane %v1061, 2
  %v1064 = vperm.slane %v1062, 0
  %v1065 = vperm.slane %v1063, 0
  %vm1066 = vcmp.eq.s32.totalorder %v1064, 1
  %vm1067 = vcmp.eq.s32.totalorder %v1065, 1
  %vm1068 = vmpackc.low %vm1067, %vm1066
  %v1069 = vsel %vm1068, 65537, 0
  %v1070 = vperm.slane %v1069, 0
  %v1071 = vperm.slane %v1069, 4
  %v1072 = vunpack.c.l.b16 %v1070
  %v1073 = vunpack.c.h.b16 %v1070
  %v1074 = vunpack.c.l.b16 0
  %v1075 = vunpack.c.h.b16 0
  %vm1076 = vcmp.ne.s32.totalorder %v1072, %v1074
  %vm1077 = vcmp.ne.s32.totalorder %v1073, %v1075
  %vm1078 = vmpackc.low %vm1077, %vm1076
  %v1079 = vunpack.c.l.b16 %v1071
  %v1080 = vunpack.c.h.b16 %v1071
  %v1081 = vunpack.c.l.b16 0
  %v1082 = vunpack.c.h.b16 0
  %vm1083 = vcmp.ne.s32.totalorder %v1079, %v1081
  %vm1084 = vcmp.ne.s32.totalorder %v1080, %v1082
  %vm1085 = vmpackc.low %vm1084, %vm1083
  %v1086 = vsel %vm1078, %v1036, 0
  %v1087 = vsel %vm1085, %v1047, 0
  %v1088 = vsel %vm1078, %v1037, 0
  %v1089 = vsel %vm1085, %v1051, 0
  %v1090 = vsel %vm1078, %v1038, 0
  %v1091 = vsel %vm1085, %v1055, 0
  %v1092 = vsel %vm1078, %v1039, 0
  %v1093 = vsel %vm1085, %v1059, 0
  %vm1094 = vmand %vm1016, %vm697
  %vm1095 = vmand %vm1094, %vm46
  %1096 = vrot.lane.b32.xlu0 %v622, 117
  %v1097 = vpop.permute.xlu0 %1096
  %1098 = vrot.lane.b32.xlu0 %v602, 117
  %v1099 = vpop.permute.xlu0 %1098
  %1100 = vrot.lane.b32.xlu0 %v623, 117
  %v1101 = vpop.permute.xlu0 %1100
  %1102 = vrot.lane.b32.xlu0 %v603, 117
  %v1103 = vpop.permute.xlu0 %1102
  %1104 = vrot.lane.b32.xlu0 %v624, 117
  %v1105 = vpop.permute.xlu0 %1104
  %1106 = vrot.lane.b32.xlu0 %v604, 117
  %v1107 = vpop.permute.xlu0 %1106
  %1108 = vrot.lane.b32.xlu0 %v625, 117
  %v1109 = vpop.permute.xlu0 %1108
  %1110 = vrot.lane.b32.xlu0 %v605, 117
  %v1111 = vpop.permute.xlu0 %1110
  %v1112 = vsel %vm98, %v1097, %v1099
  %v1113 = vsel %vm98, %v1101, %v1103
  %v1114 = vsel %vm98, %v1105, %v1107
  %v1115 = vsel %vm98, %v1109, %v1111
  %v1122 = vsel %vm101, %v1099, %v1097
  %v1126 = vsel %vm101, %v1103, %v1101
  %v1130 = vsel %vm101, %v1107, %v1105
  %v1134 = vsel %vm101, %v1111, %v1109
  %v1136 = vsel %vm1095, 1, 0
  %v1137 = vperm.slane %v1136, 0
  %v1138 = vperm.slane %v1136, 2
  %v1139 = vperm.slane %v1137, 0
  %v1140 = vperm.slane %v1138, 0
  %vm1141 = vcmp.eq.s32.totalorder %v1139, 1
  %vm1142 = vcmp.eq.s32.totalorder %v1140, 1
  %vm1143 = vmpackc.low %vm1142, %vm1141
  %v1144 = vsel %vm1143, 65537, 0
  %v1145 = vperm.slane %v1144, 0
  %v1146 = vperm.slane %v1144, 4
  %v1147 = vunpack.c.l.b16 %v1145
  %v1148 = vunpack.c.h.b16 %v1145
  %v1149 = vunpack.c.l.b16 0
  %v1150 = vunpack.c.h.b16 0
  %vm1151 = vcmp.ne.s32.totalorder %v1147, %v1149
  %vm1152 = vcmp.ne.s32.totalorder %v1148, %v1150
  %vm1153 = vmpackc.low %vm1152, %vm1151
  %v1154 = vunpack.c.l.b16 %v1146
  %v1155 = vunpack.c.h.b16 %v1146
  %v1156 = vunpack.c.l.b16 0
  %v1157 = vunpack.c.h.b16 0
  %vm1158 = vcmp.ne.s32.totalorder %v1154, %v1156
  %vm1159 = vcmp.ne.s32.totalorder %v1155, %v1157
  %vm1160 = vmpackc.low %vm1159, %vm1158
  %v1161 = vsel %vm1153, %v1112, 0
  %v1162 = vsel %vm1160, %v1122, 0
  %v1163 = vsel %vm1153, %v1113, 0
  %v1164 = vsel %vm1160, %v1126, 0
  %v1165 = vsel %vm1153, %v1114, 0
  %v1166 = vsel %vm1160, %v1130, 0
  %v1167 = vsel %vm1153, %v1115, 0
  %v1168 = vsel %vm1160, %v1134, 0
  %vm1169 = vmand %vm1016, %vm780
  %vm1170 = vmand %vm1169, %vm786
  %1171 = vrot.lane.b32.xlu0 %v622, 116
  %v1172 = vpop.permute.xlu0 %1171
  %1173 = vrot.lane.b32.xlu0 %v602, 116
  %v1174 = vpop.permute.xlu0 %1173
  %1175 = vrot.lane.b32.xlu0 %v623, 116
  %v1176 = vpop.permute.xlu0 %1175
  %1177 = vrot.lane.b32.xlu0 %v603, 116
  %v1178 = vpop.permute.xlu0 %1177
  %1179 = vrot.lane.b32.xlu0 %v624, 116
  %v1180 = vpop.permute.xlu0 %1179
  %1181 = vrot.lane.b32.xlu0 %v604, 116
  %v1182 = vpop.permute.xlu0 %1181
  %1183 = vrot.lane.b32.xlu0 %v625, 116
  %v1184 = vpop.permute.xlu0 %1183
  %1185 = vrot.lane.b32.xlu0 %v605, 116
  %v1186 = vpop.permute.xlu0 %1185
  %v1187 = vsel %vm110, %v1172, %v1174
  %v1188 = vsel %vm110, %v1176, %v1178
  %v1189 = vsel %vm110, %v1180, %v1182
  %v1190 = vsel %vm110, %v1184, %v1186
  %v1197 = vsel %vm113, %v1174, %v1172
  %v1201 = vsel %vm113, %v1178, %v1176
  %v1205 = vsel %vm113, %v1182, %v1180
  %v1209 = vsel %vm113, %v1186, %v1184
  %v1211 = vsel %vm1170, 1, 0
  %v1212 = vperm.slane %v1211, 0
  %v1213 = vperm.slane %v1211, 2
  %v1214 = vperm.slane %v1212, 0
  %v1215 = vperm.slane %v1213, 0
  %vm1216 = vcmp.eq.s32.totalorder %v1214, 1
  %vm1217 = vcmp.eq.s32.totalorder %v1215, 1
  %vm1218 = vmpackc.low %vm1217, %vm1216
  %v1219 = vsel %vm1218, 65537, 0
  %v1220 = vperm.slane %v1219, 0
  %v1221 = vperm.slane %v1219, 4
  %v1222 = vunpack.c.l.b16 %v1220
  %v1223 = vunpack.c.h.b16 %v1220
  %v1224 = vunpack.c.l.b16 0
  %v1225 = vunpack.c.h.b16 0
  %vm1226 = vcmp.ne.s32.totalorder %v1222, %v1224
  %vm1227 = vcmp.ne.s32.totalorder %v1223, %v1225
  %vm1228 = vmpackc.low %vm1227, %vm1226
  %v1229 = vunpack.c.l.b16 %v1221
  %v1230 = vunpack.c.h.b16 %v1221
  %v1231 = vunpack.c.l.b16 0
  %v1232 = vunpack.c.h.b16 0
  %vm1233 = vcmp.ne.s32.totalorder %v1229, %v1231
  %vm1234 = vcmp.ne.s32.totalorder %v1230, %v1232
  %vm1235 = vmpackc.low %vm1234, %vm1233
  %v1236 = vsel %vm1228, %v1187, 0
  %v1237 = vsel %vm1235, %v1197, 0
  %v1238 = vsel %vm1228, %v1188, 0
  %v1239 = vsel %vm1235, %v1201, 0
  %v1240 = vsel %vm1228, %v1189, 0
  %v1241 = vsel %vm1235, %v1205, 0
  %v1242 = vsel %vm1228, %v1190, 0
  %v1243 = vsel %vm1235, %v1209, 0
  %v1252 = vld [vmem:[%s5] sm:$0xff]
  %v1253 = vld [vmem:[%s5 + $0x8] sm:$0xff]
  %v1254 = vld [vmem:[%s5 + $0x10] sm:$0xf]
  %v1255 = vld [vmem:[%s5 + $0x14] sm:$0xff]
  %v1256 = vld [vmem:[%s5 + $0x1c] sm:$0xff]
  %v1257 = vld [vmem:[%s5 + $0x24] sm:$0xf]
  %v1258 = vld [vmem:[%s5 + $0x28] sm:$0xff]
  %v1259 = vld [vmem:[%s5 + $0x30] sm:$0xff]
  %v1260 = vld [vmem:[%s5 + $0x38] sm:$0xf]
  %v1261 = vld [vmem:[%s5 + $0x3c] sm:$0xff]
  %v1262 = vld [vmem:[%s5 + $0x44] sm:$0xff]
  %v1263 = vld [vmem:[%s5 + $0x4c] sm:$0xf]
  %v1264 = vld [vmem:[%s5 + $0x50] sm:$0xff]
  %v1265 = vld [vmem:[%s5 + $0x58] sm:$0xff]
  %v1266 = vld [vmem:[%s5 + $0x60] sm:$0xf]
  %v1267 = vld [vmem:[%s5 + $0x64] sm:$0xff]
  %v1268 = vld [vmem:[%s5 + $0x6c] sm:$0xff]
  %v1269 = vld [vmem:[%s5 + $0x74] sm:$0xf]
  %v1270 = vld [vmem:[%s5 + $0x78] sm:$0xff]
  %v1271 = vld [vmem:[%s5 + $0x80] sm:$0xff]
  %v1272 = vld [vmem:[%s5 + $0x88] sm:$0xf]
  %v1273 = vld [vmem:[%s5 + $0x8c] sm:$0xff]
  %v1274 = vld [vmem:[%s5 + $0x94] sm:$0xff]
  %v1275 = vld [vmem:[%s5 + $0x9c] sm:$0xf]
  %v1276 = vld [vmem:[%s6] sm:$0xff]
  %v1277 = vld [vmem:[%s6 + $0x8] sm:$0xff]
  %v1278 = vld [vmem:[%s6 + $0x10] sm:$0xff]
  %v1279 = vld [vmem:[%s6 + $0x18] sm:$0xff]
  %v1280 = vld [vmem:[%s6 + $0x20] sm:$0xff]
  %v1281 = vld [vmem:[%s6 + $0x28] sm:$0xff]
  %v1282 = vld [vmem:[%s6 + $0x30] sm:$0xff]
  %v1283 = vld [vmem:[%s6 + $0x38] sm:$0xff]
  %1285 = vset.pattern.permute.xlu0 0
  %1286 = vperm.xlu0 %1285, %v1276
  %v1287 = vpop.permute.xlu0 %1286
  %1290 = vset.pattern.permute.xlu0 0
  %1291 = vperm.xlu0 %1290, %v1277
  %v1292 = vpop.permute.xlu0 %1291
  %1295 = vset.pattern.permute.xlu0 0
  %1296 = vperm.xlu0 %1295, %v1278
  %v1297 = vpop.permute.xlu0 %1296
  %1300 = vset.pattern.permute.xlu0 0
  %1301 = vperm.xlu0 %1300, %v1279
  %v1302 = vpop.permute.xlu0 %1301
  %1305 = vset.pattern.permute.xlu0 0
  %1306 = vperm.xlu0 %1305, %v1280
  %v1307 = vpop.permute.xlu0 %1306
  %1310 = vset.pattern.permute.xlu0 0
  %1311 = vperm.xlu0 %1310, %v1281
  %v1312 = vpop.permute.xlu0 %1311
  %1315 = vset.pattern.permute.xlu0 0
  %1316 = vperm.xlu0 %1315, %v1282
  %v1317 = vpop.permute.xlu0 %1316
  %1320 = vset.pattern.permute.xlu0 0
  %1321 = vperm.xlu0 %1320, %v1283
  %v1322 = vpop.permute.xlu0 %1321
  %v1348 = vunpack.c.l.b16 %v1252
  %v1349 = vunpack.c.h.b16 %v1252
  %v1350 = vunpack.c.l.b16 %v1253
  %v1351 = vunpack.c.h.b16 %v1253
  %v1352 = vunpack.c.l.b16 %v1254
  %v1353 = vunpack.c.l.b16 %v1255
  %v1354 = vunpack.c.h.b16 %v1255
  %v1355 = vunpack.c.l.b16 %v1256
  %v1356 = vunpack.c.h.b16 %v1256
  %v1357 = vunpack.c.l.b16 %v1257
  %v1358 = vunpack.c.l.b16 %v1258
  %v1359 = vunpack.c.h.b16 %v1258
  %v1360 = vunpack.c.l.b16 %v1259
  %v1361 = vunpack.c.h.b16 %v1259
  %v1362 = vunpack.c.l.b16 %v1260
  %v1363 = vunpack.c.l.b16 %v1261
  %v1364 = vunpack.c.h.b16 %v1261
  %v1365 = vunpack.c.l.b16 %v1262
  %v1366 = vunpack.c.h.b16 %v1262
  %v1367 = vunpack.c.l.b16 %v1263
  %v1368 = vunpack.c.l.b16 %v1264
  %v1369 = vunpack.c.h.b16 %v1264
  %v1370 = vunpack.c.l.b16 %v1265
  %v1371 = vunpack.c.h.b16 %v1265
  %v1372 = vunpack.c.l.b16 %v1266
  %v1373 = vunpack.c.l.b16 %v1267
  %v1374 = vunpack.c.h.b16 %v1267
  %v1375 = vunpack.c.l.b16 %v1268
  %v1376 = vunpack.c.h.b16 %v1268
  %v1377 = vunpack.c.l.b16 %v1269
  %v1378 = vunpack.c.l.b16 %v1270
  %v1379 = vunpack.c.h.b16 %v1270
  %v1380 = vunpack.c.l.b16 %v1271
  %v1381 = vunpack.c.h.b16 %v1271
  %v1382 = vunpack.c.l.b16 %v1272
  %v1383 = vunpack.c.l.b16 %v1273
  %v1384 = vunpack.c.h.b16 %v1273
  %v1385 = vunpack.c.l.b16 %v1274
  %v1386 = vunpack.c.h.b16 %v1274
  %v1387 = vunpack.c.l.b16 %v1275
  %v1388 = vpack.c.b16 %v1353, %v1348
  %v1389 = vpack.c.b16 %v1354, %v1349
  %v1390 = vpack.c.b16 %v1355, %v1350
  %v1391 = vpack.c.b16 %v1356, %v1351
  %v1392 = vpack.c.b16 %v1357, %v1352
  %v1393 = vpack.c.b16 %v1363, %v1358
  %v1394 = vpack.c.b16 %v1364, %v1359
  %v1395 = vpack.c.b16 %v1365, %v1360
  %v1396 = vpack.c.b16 %v1366, %v1361
  %v1397 = vpack.c.b16 %v1367, %v1362
  %v1398 = vpack.c.b16 %v1373, %v1368
  %v1399 = vpack.c.b16 %v1374, %v1369
  %v1400 = vpack.c.b16 %v1375, %v1370
  %v1401 = vpack.c.b16 %v1376, %v1371
  %v1402 = vpack.c.b16 %v1377, %v1372
  %v1403 = vpack.c.b16 %v1383, %v1378
  %v1404 = vpack.c.b16 %v1384, %v1379
  %v1405 = vpack.c.b16 %v1385, %v1380
  %v1406 = vpack.c.b16 %v1386, %v1381
  %v1407 = vpack.c.b16 %v1387, %v1382
  %vm1424 = vcmask 523264
  %v1426 = vsel %vm1424, %v1392, 0
  %v1429 = vsel %vm1424, %v1397, 0
  %v1432 = vsel %vm1424, %v1402, 0
  %v1435 = vsel %vm1424, %v1407, 0
  %1437 = vmatpush.bf16.msra.mxu0 %v773
  %1438 = vmatpush.bf16.msra.mxu0 %v771
  %1439 = vmatpush.bf16.msra.mxu0 %v769
  %1440 = vmatpush.bf16.msra.mxu0 %v767
  %1441 = vmatpush.bf16.msra.mxu0 %v691
  %1442 = vmatpush.bf16.msra.mxu0 %v689
  %1443 = vmatpush.bf16.msra.mxu0 %v687
  %1444 = vmatpush.bf16.msra.mxu0 %v685
  %1445 = vmatmul.bf16.gmra.mxu0 %v1388
  %v1446 = vpop.f32.mrf.mxu0
  %v1447 = vadd.f32 %v1287, %v1446
  %v1448 = vpop.f32.mrf.mxu0
  %v1449 = vadd.f32 %v1292, %v1448
  %1450 = vmatmul.bf16.gmra.mxu0 %v1393
  %v1451 = vpop.f32.mrf.mxu0
  %v1452 = vadd.f32 %v1297, %v1451
  %v1453 = vpop.f32.mrf.mxu0
  %v1454 = vadd.f32 %v1302, %v1453
  %1455 = vmatmul.bf16.gmra.mxu0 %v1398
  %v1456 = vpop.f32.mrf.mxu0
  %v1457 = vadd.f32 %v1307, %v1456
  %v1458 = vpop.f32.mrf.mxu0
  %v1459 = vadd.f32 %v1312, %v1458
  %1460 = vmatmul.bf16.gmra.mxu0 %v1403
  %v1461 = vpop.f32.mrf.mxu0
  %v1462 = vadd.f32 %v1317, %v1461
  %v1463 = vpop.f32.mrf.mxu0
  %v1464 = vadd.f32 %v1322, %v1463
  %1465 = vdwg.mxu0
  %1466 = vmatpush.bf16.msra.mxu0 %v939
  %1467 = vmatpush.bf16.msra.mxu0 %v937
  %1468 = vmatpush.bf16.msra.mxu0 %v935
  %1469 = vmatpush.bf16.msra.mxu0 %v933
  %1470 = vmatpush.bf16.msra.mxu0 %v861
  %1471 = vmatpush.bf16.msra.mxu0 %v859
  %1472 = vmatpush.bf16.msra.mxu0 %v857
  %1473 = vmatpush.bf16.msra.mxu0 %v855
  %1474 = vmatmul.bf16.gmra.mxu0 %v1389
  %v1475 = vpop.f32.mrf.mxu0
  %v1476 = vadd.f32 %v1447, %v1475
  %v1477 = vpop.f32.mrf.mxu0
  %v1478 = vadd.f32 %v1449, %v1477
  %1479 = vmatmul.bf16.gmra.mxu0 %v1394
  %v1480 = vpop.f32.mrf.mxu0
  %v1481 = vadd.f32 %v1452, %v1480
  %v1482 = vpop.f32.mrf.mxu0
  %v1483 = vadd.f32 %v1454, %v1482
  %1484 = vmatmul.bf16.gmra.mxu0 %v1399
  %v1485 = vpop.f32.mrf.mxu0
  %v1486 = vadd.f32 %v1457, %v1485
  %v1487 = vpop.f32.mrf.mxu0
  %v1488 = vadd.f32 %v1459, %v1487
  %1489 = vmatmul.bf16.gmra.mxu0 %v1404
  %v1490 = vpop.f32.mrf.mxu0
  %v1491 = vadd.f32 %v1462, %v1490
  %v1492 = vpop.f32.mrf.mxu0
  %v1493 = vadd.f32 %v1464, %v1492
  %1494 = vdwg.mxu0
  %1495 = vmatpush.bf16.msra.mxu0 %v1014
  %1496 = vmatpush.bf16.msra.mxu0 %v1012
  %1497 = vmatpush.bf16.msra.mxu0 %v1010
  %1498 = vmatpush.bf16.msra.mxu0 %v1008
  %1499 = vmatpush.bf16.msra.mxu0 %v625
  %1500 = vmatpush.bf16.msra.mxu0 %v624
  %1501 = vmatpush.bf16.msra.mxu0 %v623
  %1502 = vmatpush.bf16.msra.mxu0 %v622
  %1503 = vmatmul.bf16.gmra.mxu0 %v1390
  %v1504 = vpop.f32.mrf.mxu0
  %v1505 = vadd.f32 %v1476, %v1504
  %v1506 = vpop.f32.mrf.mxu0
  %v1507 = vadd.f32 %v1478, %v1506
  %1508 = vmatmul.bf16.gmra.mxu0 %v1395
  %v1509 = vpop.f32.mrf.mxu0
  %v1510 = vadd.f32 %v1481, %v1509
  %v1511 = vpop.f32.mrf.mxu0
  %v1512 = vadd.f32 %v1483, %v1511
  %1513 = vmatmul.bf16.gmra.mxu0 %v1400
  %v1514 = vpop.f32.mrf.mxu0
  %v1515 = vadd.f32 %v1486, %v1514
  %v1516 = vpop.f32.mrf.mxu0
  %v1517 = vadd.f32 %v1488, %v1516
  %1518 = vmatmul.bf16.gmra.mxu0 %v1405
  %v1519 = vpop.f32.mrf.mxu0
  %v1520 = vadd.f32 %v1491, %v1519
  %v1521 = vpop.f32.mrf.mxu0
  %v1522 = vadd.f32 %v1493, %v1521
  %1523 = vdwg.mxu0
  %1524 = vmatpush.bf16.msra.mxu0 %v1167
  %1525 = vmatpush.bf16.msra.mxu0 %v1165
  %1526 = vmatpush.bf16.msra.mxu0 %v1163
  %1527 = vmatpush.bf16.msra.mxu0 %v1161
  %1528 = vmatpush.bf16.msra.mxu0 %v1092
  %1529 = vmatpush.bf16.msra.mxu0 %v1090
  %1530 = vmatpush.bf16.msra.mxu0 %v1088
  %1531 = vmatpush.bf16.msra.mxu0 %v1086
  %1532 = vmatmul.bf16.gmra.mxu0 %v1391
  %v1533 = vpop.f32.mrf.mxu0
  %v1534 = vadd.f32 %v1505, %v1533
  %v1535 = vpop.f32.mrf.mxu0
  %v1536 = vadd.f32 %v1507, %v1535
  %1537 = vmatmul.bf16.gmra.mxu0 %v1396
  %v1538 = vpop.f32.mrf.mxu0
  %v1539 = vadd.f32 %v1510, %v1538
  %v1540 = vpop.f32.mrf.mxu0
  %v1541 = vadd.f32 %v1512, %v1540
  %1542 = vmatmul.bf16.gmra.mxu0 %v1401
  %v1543 = vpop.f32.mrf.mxu0
  %v1544 = vadd.f32 %v1515, %v1543
  %v1545 = vpop.f32.mrf.mxu0
  %v1546 = vadd.f32 %v1517, %v1545
  %1547 = vmatmul.bf16.gmra.mxu0 %v1406
  %v1548 = vpop.f32.mrf.mxu0
  %v1549 = vadd.f32 %v1520, %v1548
  %v1550 = vpop.f32.mrf.mxu0
  %v1551 = vadd.f32 %v1522, %v1550
  %1552 = vdwg.mxu0
  %1553 = vmatpush.bf16.msra.mxu0 0
  %1554 = vmatpush.bf16.msra.mxu0 0
  %1555 = vmatpush.bf16.msra.mxu0 0
  %1556 = vmatpush.bf16.msra.mxu0 0
  %1557 = vmatpush.bf16.msra.mxu0 %v1242
  %1558 = vmatpush.bf16.msra.mxu0 %v1240
  %1559 = vmatpush.bf16.msra.mxu0 %v1238
  %1560 = vmatpush.bf16.msra.mxu0 %v1236
  %1561 = vmatmul.bf16.gmra.mxu0 %v1426
  %v1562 = vpop.f32.mrf.mxu0
  %v1563 = vadd.f32 %v1534, %v1562
  %v1564 = vpop.f32.mrf.mxu0
  %v1565 = vadd.f32 %v1536, %v1564
  %1566 = vmatmul.bf16.gmra.mxu0 %v1429
  %v1567 = vpop.f32.mrf.mxu0
  %v1568 = vadd.f32 %v1539, %v1567
  %v1569 = vpop.f32.mrf.mxu0
  %v1570 = vadd.f32 %v1541, %v1569
  %1571 = vmatmul.bf16.gmra.mxu0 %v1432
  %v1572 = vpop.f32.mrf.mxu0
  %v1573 = vadd.f32 %v1544, %v1572
  %v1574 = vpop.f32.mrf.mxu0
  %v1575 = vadd.f32 %v1546, %v1574
  %1576 = vmatmul.bf16.gmra.mxu0 %v1435
  %v1577 = vpop.f32.mrf.mxu0
  %v1578 = vadd.f32 %v1549, %v1577
  %v1579 = vpop.f32.mrf.mxu0
  %v1580 = vadd.f32 %v1551, %v1579
  %1581 = vdwg.mxu0
  %1582 = vmatpush.bf16.msra.mxu0 %v774
  %1583 = vmatpush.bf16.msra.mxu0 %v772
  %1584 = vmatpush.bf16.msra.mxu0 %v770
  %1585 = vmatpush.bf16.msra.mxu0 %v768
  %1586 = vmatpush.bf16.msra.mxu0 %v692
  %1587 = vmatpush.bf16.msra.mxu0 %v690
  %1588 = vmatpush.bf16.msra.mxu0 %v688
  %1589 = vmatpush.bf16.msra.mxu0 %v686
  %1590 = vmatmul.bf16.gmra.mxu0 %v1388
  %v1591 = vpop.f32.mrf.mxu0
  %v1592 = vadd.f32 %v1287, %v1591
  %v1593 = vpop.f32.mrf.mxu0
  %v1594 = vadd.f32 %v1292, %v1593
  %1595 = vmatmul.bf16.gmra.mxu0 %v1393
  %v1596 = vpop.f32.mrf.mxu0
  %v1597 = vadd.f32 %v1297, %v1596
  %v1598 = vpop.f32.mrf.mxu0
  %v1599 = vadd.f32 %v1302, %v1598
  %1600 = vmatmul.bf16.gmra.mxu0 %v1398
  %v1601 = vpop.f32.mrf.mxu0
  %v1602 = vadd.f32 %v1307, %v1601
  %v1603 = vpop.f32.mrf.mxu0
  %v1604 = vadd.f32 %v1312, %v1603
  %1605 = vmatmul.bf16.gmra.mxu0 %v1403
  %v1606 = vpop.f32.mrf.mxu0
  %v1607 = vadd.f32 %v1317, %v1606
  %v1608 = vpop.f32.mrf.mxu0
  %v1609 = vadd.f32 %v1322, %v1608
  %1610 = vdwg.mxu0
  %1611 = vmatpush.bf16.msra.mxu0 %v940
  %1612 = vmatpush.bf16.msra.mxu0 %v938
  %1613 = vmatpush.bf16.msra.mxu0 %v936
  %1614 = vmatpush.bf16.msra.mxu0 %v934
  %1615 = vmatpush.bf16.msra.mxu0 %v862
  %1616 = vmatpush.bf16.msra.mxu0 %v860
  %1617 = vmatpush.bf16.msra.mxu0 %v858
  %1618 = vmatpush.bf16.msra.mxu0 %v856
  %1619 = vmatmul.bf16.gmra.mxu0 %v1389
  %v1620 = vpop.f32.mrf.mxu0
  %v1621 = vadd.f32 %v1592, %v1620
  %v1622 = vpop.f32.mrf.mxu0
  %v1623 = vadd.f32 %v1594, %v1622
  %1624 = vmatmul.bf16.gmra.mxu0 %v1394
  %v1625 = vpop.f32.mrf.mxu0
  %v1626 = vadd.f32 %v1597, %v1625
  %v1627 = vpop.f32.mrf.mxu0
  %v1628 = vadd.f32 %v1599, %v1627
  %1629 = vmatmul.bf16.gmra.mxu0 %v1399
  %v1630 = vpop.f32.mrf.mxu0
  %v1631 = vadd.f32 %v1602, %v1630
  %v1632 = vpop.f32.mrf.mxu0
  %v1633 = vadd.f32 %v1604, %v1632
  %1634 = vmatmul.bf16.gmra.mxu0 %v1404
  %v1635 = vpop.f32.mrf.mxu0
  %v1636 = vadd.f32 %v1607, %v1635
  %v1637 = vpop.f32.mrf.mxu0
  %v1638 = vadd.f32 %v1609, %v1637
  %1639 = vdwg.mxu0
  %1640 = vmatpush.bf16.msra.mxu0 %v1015
  %1641 = vmatpush.bf16.msra.mxu0 %v1013
  %1642 = vmatpush.bf16.msra.mxu0 %v1011
  %1643 = vmatpush.bf16.msra.mxu0 %v1009
  %1644 = vmatpush.bf16.msra.mxu0 %v605
  %1645 = vmatpush.bf16.msra.mxu0 %v604
  %1646 = vmatpush.bf16.msra.mxu0 %v603
  %1647 = vmatpush.bf16.msra.mxu0 %v602
  %1648 = vmatmul.bf16.gmra.mxu0 %v1390
  %v1649 = vpop.f32.mrf.mxu0
  %v1650 = vadd.f32 %v1621, %v1649
  %v1651 = vpop.f32.mrf.mxu0
  %v1652 = vadd.f32 %v1623, %v1651
  %1653 = vmatmul.bf16.gmra.mxu0 %v1395
  %v1654 = vpop.f32.mrf.mxu0
  %v1655 = vadd.f32 %v1626, %v1654
  %v1656 = vpop.f32.mrf.mxu0
  %v1657 = vadd.f32 %v1628, %v1656
  %1658 = vmatmul.bf16.gmra.mxu0 %v1400
  %v1659 = vpop.f32.mrf.mxu0
  %v1660 = vadd.f32 %v1631, %v1659
  %v1661 = vpop.f32.mrf.mxu0
  %v1662 = vadd.f32 %v1633, %v1661
  %1663 = vmatmul.bf16.gmra.mxu0 %v1405
  %v1664 = vpop.f32.mrf.mxu0
  %v1665 = vadd.f32 %v1636, %v1664
  %v1666 = vpop.f32.mrf.mxu0
  %v1667 = vadd.f32 %v1638, %v1666
  %1668 = vdwg.mxu0
  %1669 = vmatpush.bf16.msra.mxu0 %v1168
  %1670 = vmatpush.bf16.msra.mxu0 %v1166
  %1671 = vmatpush.bf16.msra.mxu0 %v1164
  %1672 = vmatpush.bf16.msra.mxu0 %v1162
  %1673 = vmatpush.bf16.msra.mxu0 %v1093
  %1674 = vmatpush.bf16.msra.mxu0 %v1091
  %1675 = vmatpush.bf16.msra.mxu0 %v1089
  %1676 = vmatpush.bf16.msra.mxu0 %v1087
  %1677 = vmatmul.bf16.gmra.mxu0 %v1391
  %v1678 = vpop.f32.mrf.mxu0
  %v1679 = vadd.f32 %v1650, %v1678
  %v1680 = vpop.f32.mrf.mxu0
  %v1681 = vadd.f32 %v1652, %v1680
  %1682 = vmatmul.bf16.gmra.mxu0 %v1396
  %v1683 = vpop.f32.mrf.mxu0
  %v1684 = vadd.f32 %v1655, %v1683
  %v1685 = vpop.f32.mrf.mxu0
  %v1686 = vadd.f32 %v1657, %v1685
  %1687 = vmatmul.bf16.gmra.mxu0 %v1401
  %v1688 = vpop.f32.mrf.mxu0
  %v1689 = vadd.f32 %v1660, %v1688
  %v1690 = vpop.f32.mrf.mxu0
  %v1691 = vadd.f32 %v1662, %v1690
  %1692 = vmatmul.bf16.gmra.mxu0 %v1406
  %v1693 = vpop.f32.mrf.mxu0
  %v1694 = vadd.f32 %v1665, %v1693
  %v1695 = vpop.f32.mrf.mxu0
  %v1696 = vadd.f32 %v1667, %v1695
  %1697 = vdwg.mxu0
  %1698 = vmatpush.bf16.msra.mxu0 0
  %1699 = vmatpush.bf16.msra.mxu0 0
  %1700 = vmatpush.bf16.msra.mxu0 0
  %1701 = vmatpush.bf16.msra.mxu0 0
  %1702 = vmatpush.bf16.msra.mxu0 %v1243
  %1703 = vmatpush.bf16.msra.mxu0 %v1241
  %1704 = vmatpush.bf16.msra.mxu0 %v1239
  %1705 = vmatpush.bf16.msra.mxu0 %v1237
  %1706 = vmatmul.bf16.gmra.mxu0 %v1426
  %v1707 = vpop.f32.mrf.mxu0
  %v1708 = vadd.f32 %v1679, %v1707
  %v1709 = vpop.f32.mrf.mxu0
  %v1710 = vadd.f32 %v1681, %v1709
  %1711 = vmatmul.bf16.gmra.mxu0 %v1429
  %v1712 = vpop.f32.mrf.mxu0
  %v1713 = vadd.f32 %v1684, %v1712
  %v1714 = vpop.f32.mrf.mxu0
  %v1715 = vadd.f32 %v1686, %v1714
  %1716 = vmatmul.bf16.gmra.mxu0 %v1432
  %v1717 = vpop.f32.mrf.mxu0
  %v1718 = vadd.f32 %v1689, %v1717
  %v1719 = vpop.f32.mrf.mxu0
  %v1720 = vadd.f32 %v1691, %v1719
  %1721 = vmatmul.bf16.gmra.mxu0 %v1435
  %v1722 = vpop.f32.mrf.mxu0
  %v1723 = vadd.f32 %v1694, %v1722
  %v1724 = vpop.f32.mrf.mxu0
  %v1725 = vadd.f32 %v1696, %v1724
  %1726 = vdwg.mxu0
  %v1727 = vmax.f32 %v1563, 0.0
  %v1728 = vmax.f32 %v1708, 0.0
  %v1729 = vmax.f32 %v1565, 0.0
  %v1730 = vmax.f32 %v1710, 0.0
  %v1731 = vmax.f32 %v1568, 0.0
  %v1732 = vmax.f32 %v1713, 0.0
  %v1733 = vmax.f32 %v1570, 0.0
  %v1734 = vmax.f32 %v1715, 0.0
  %v1735 = vmax.f32 %v1573, 0.0
  %v1736 = vmax.f32 %v1718, 0.0
  %v1737 = vmax.f32 %v1575, 0.0
  %v1738 = vmax.f32 %v1720, 0.0
  %v1739 = vmax.f32 %v1578, 0.0
  %v1740 = vmax.f32 %v1723, 0.0
  %v1741 = vmax.f32 %v1580, 0.0
  %v1742 = vmax.f32 %v1725, 0.0
  %v1743 = vpack.c.bf16 %v1728, %v1727
  %v1744 = vpack.c.bf16 %v1730, %v1729
  %v1745 = vpack.c.bf16 %v1732, %v1731
  %v1746 = vpack.c.bf16 %v1734, %v1733
  %v1747 = vpack.c.bf16 %v1736, %v1735
  %v1748 = vpack.c.bf16 %v1738, %v1737
  %v1749 = vpack.c.bf16 %v1740, %v1739
  %v1750 = vpack.c.bf16 %v1742, %v1741
  %v1759 = vunpack.c.h.b16 %v1743
  %v1760 = vunpack.c.h.b16 %v1744
  %v1761 = vunpack.c.h.b16 %v1745
  %v1762 = vunpack.c.h.b16 %v1746
  %v1763 = vunpack.c.h.b16 %v1747
  %v1764 = vunpack.c.h.b16 %v1748
  %v1765 = vunpack.c.h.b16 %v1749
  %v1766 = vunpack.c.h.b16 %v1750
  %v1767 = vpack.c.b16 %v1760, %v1759
  %v1768 = vpack.c.b16 %v1762, %v1761
  %v1769 = vpack.c.b16 %v1764, %v1763
  %v1770 = vpack.c.b16 %v1766, %v1765
  %1771 = vrot.lane.b32.xlu0 %v1767, 12
  %v1772 = vpop.permute.xlu0 %1771
  %1773 = vrot.lane.b32.xlu0 %v1768, 12
  %v1774 = vpop.permute.xlu0 %1773
  %1775 = vrot.lane.b32.xlu0 %v1769, 12
  %v1776 = vpop.permute.xlu0 %1775
  %1777 = vrot.lane.b32.xlu0 %v1770, 12
  %v1778 = vpop.permute.xlu0 %1777
  %v1779 = vunpack.c.l.b16 %v1743
  %v1780 = vunpack.c.l.b16 %v1744
  %v1781 = vunpack.c.l.b16 %v1745
  %v1782 = vunpack.c.l.b16 %v1746
  %v1783 = vunpack.c.l.b16 %v1747
  %v1784 = vunpack.c.l.b16 %v1748
  %v1785 = vunpack.c.l.b16 %v1749
  %v1786 = vunpack.c.l.b16 %v1750
  %v1787 = vpack.c.b16 %v1780, %v1779
  %v1788 = vpack.c.b16 %v1782, %v1781
  %v1789 = vpack.c.b16 %v1784, %v1783
  %v1790 = vpack.c.b16 %v1786, %v1785
  %1791 = vrot.lane.b32.xlu0 %v1787, 12
  %v1792 = vpop.permute.xlu0 %1791
  %1793 = vrot.lane.b32.xlu0 %v1788, 12
  %v1794 = vpop.permute.xlu0 %1793
  %1795 = vrot.lane.b32.xlu0 %v1789, 12
  %v1796 = vpop.permute.xlu0 %1795
  %1797 = vrot.lane.b32.xlu0 %v1790, 12
  %v1798 = vpop.permute.xlu0 %1797
  %v1799 = vsel %vm634, %v1792, %v1772
  %v1800 = vsel %vm634, %v1794, %v1774
  %v1801 = vsel %vm634, %v1796, %v1776
  %v1802 = vsel %vm634, %v1798, %v1778
  %v1809 = vsel %vm643, %v1772, %v1792
  %v1813 = vsel %vm643, %v1774, %v1794
  %v1817 = vsel %vm643, %v1776, %v1796
  %v1821 = vsel %vm643, %v1778, %v1798
  %v1823 = vsel %vm677, %v1809, 0
  %v1824 = vsel %vm684, %v1799, 0
  %v1825 = vsel %vm677, %v1813, 0
  %v1826 = vsel %vm684, %v1800, 0
  %v1827 = vsel %vm677, %v1817, 0
  %v1828 = vsel %vm684, %v1801, 0
  %v1829 = vsel %vm677, %v1821, 0
  %v1830 = vsel %vm684, %v1802, 0
  %1831 = vrot.lane.b32.xlu0 %v1767, 11
  %v1832 = vpop.permute.xlu0 %1831
  %1833 = vrot.lane.b32.xlu0 %v1768, 11
  %v1834 = vpop.permute.xlu0 %1833
  %1835 = vrot.lane.b32.xlu0 %v1769, 11
  %v1836 = vpop.permute.xlu0 %1835
  %1837 = vrot.lane.b32.xlu0 %v1770, 11
  %v1838 = vpop.permute.xlu0 %1837
  %1839 = vrot.lane.b32.xlu0 %v1787, 11
  %v1840 = vpop.permute.xlu0 %1839
  %1841 = vrot.lane.b32.xlu0 %v1788, 11
  %v1842 = vpop.permute.xlu0 %1841
  %1843 = vrot.lane.b32.xlu0 %v1789, 11
  %v1844 = vpop.permute.xlu0 %1843
  %1845 = vrot.lane.b32.xlu0 %v1790, 11
  %v1846 = vpop.permute.xlu0 %1845
  %v1847 = vsel %vm716, %v1840, %v1832
  %v1848 = vsel %vm716, %v1842, %v1834
  %v1849 = vsel %vm716, %v1844, %v1836
  %v1850 = vsel %vm716, %v1846, %v1838
  %v1857 = vsel %vm725, %v1832, %v1840
  %v1861 = vsel %vm725, %v1834, %v1842
  %v1865 = vsel %vm725, %v1836, %v1844
  %v1869 = vsel %vm725, %v1838, %v1846
  %v1871 = vsel %vm759, %v1857, 0
  %v1872 = vsel %vm766, %v1847, 0
  %v1873 = vsel %vm759, %v1861, 0
  %v1874 = vsel %vm766, %v1848, 0
  %v1875 = vsel %vm759, %v1865, 0
  %v1876 = vsel %vm766, %v1849, 0
  %v1877 = vsel %vm759, %v1869, 0
  %v1878 = vsel %vm766, %v1850, 0
  %1879 = vrot.lane.b32.xlu0 %v1767, 10
  %v1880 = vpop.permute.xlu0 %1879
  %1881 = vrot.lane.b32.xlu0 %v1768, 10
  %v1882 = vpop.permute.xlu0 %1881
  %1883 = vrot.lane.b32.xlu0 %v1769, 10
  %v1884 = vpop.permute.xlu0 %1883
  %1885 = vrot.lane.b32.xlu0 %v1770, 10
  %v1886 = vpop.permute.xlu0 %1885
  %1887 = vrot.lane.b32.xlu0 %v1787, 10
  %v1888 = vpop.permute.xlu0 %1887
  %1889 = vrot.lane.b32.xlu0 %v1788, 10
  %v1890 = vpop.permute.xlu0 %1889
  %1891 = vrot.lane.b32.xlu0 %v1789, 10
  %v1892 = vpop.permute.xlu0 %1891
  %1893 = vrot.lane.b32.xlu0 %v1790, 10
  %v1894 = vpop.permute.xlu0 %1893
  %v1895 = vsel %vm804, %v1888, %v1880
  %v1896 = vsel %vm804, %v1890, %v1882
  %v1897 = vsel %vm804, %v1892, %v1884
  %v1898 = vsel %vm804, %v1894, %v1886
  %v1905 = vsel %vm813, %v1880, %v1888
  %v1909 = vsel %vm813, %v1882, %v1890
  %v1913 = vsel %vm813, %v1884, %v1892
  %v1917 = vsel %vm813, %v1886, %v1894
  %v1919 = vsel %vm847, %v1905, 0
  %v1920 = vsel %vm854, %v1895, 0
  %v1921 = vsel %vm847, %v1909, 0
  %v1922 = vsel %vm854, %v1896, 0
  %v1923 = vsel %vm847, %v1913, 0
  %v1924 = vsel %vm854, %v1897, 0
  %v1925 = vsel %vm847, %v1917, 0
  %v1926 = vsel %vm854, %v1898, 0
  %1927 = vrot.lane.b32.xlu0 %v1767, 1
  %v1928 = vpop.permute.xlu0 %1927
  %1929 = vrot.lane.b32.xlu0 %v1768, 1
  %v1930 = vpop.permute.xlu0 %1929
  %1931 = vrot.lane.b32.xlu0 %v1769, 1
  %v1932 = vpop.permute.xlu0 %1931
  %1933 = vrot.lane.b32.xlu0 %v1770, 1
  %v1934 = vpop.permute.xlu0 %1933
  %1935 = vrot.lane.b32.xlu0 %v1787, 1
  %v1936 = vpop.permute.xlu0 %1935
  %1937 = vrot.lane.b32.xlu0 %v1788, 1
  %v1938 = vpop.permute.xlu0 %1937
  %1939 = vrot.lane.b32.xlu0 %v1789, 1
  %v1940 = vpop.permute.xlu0 %1939
  %1941 = vrot.lane.b32.xlu0 %v1790, 1
  %v1942 = vpop.permute.xlu0 %1941
  %v1943 = vsel %vm882, %v1936, %v1928
  %v1944 = vsel %vm882, %v1938, %v1930
  %v1945 = vsel %vm882, %v1940, %v1932
  %v1946 = vsel %vm882, %v1942, %v1934
  %v1953 = vsel %vm891, %v1928, %v1936
  %v1957 = vsel %vm891, %v1930, %v1938
  %v1961 = vsel %vm891, %v1932, %v1940
  %v1965 = vsel %vm891, %v1934, %v1942
  %v1967 = vsel %vm925, %v1953, 0
  %v1968 = vsel %vm932, %v1943, 0
  %v1969 = vsel %vm925, %v1957, 0
  %v1970 = vsel %vm932, %v1944, 0
  %v1971 = vsel %vm925, %v1961, 0
  %v1972 = vsel %vm932, %v1945, 0
  %v1973 = vsel %vm925, %v1965, 0
  %v1974 = vsel %vm932, %v1946, 0
  %1975 = vrot.lane.b32.xlu0 %v1787, 127
  %v1976 = vpop.permute.xlu0 %1975
  %1977 = vrot.lane.b32.xlu0 %v1767, 127
  %v1978 = vpop.permute.xlu0 %1977
  %1979 = vrot.lane.b32.xlu0 %v1788, 127
  %v1980 = vpop.permute.xlu0 %1979
  %1981 = vrot.lane.b32.xlu0 %v1768, 127
  %v1982 = vpop.permute.xlu0 %1981
  %1983 = vrot.lane.b32.xlu0 %v1789, 127
  %v1984 = vpop.permute.xlu0 %1983
  %1985 = vrot.lane.b32.xlu0 %v1769, 127
  %v1986 = vpop.permute.xlu0 %1985
  %1987 = vrot.lane.b32.xlu0 %v1790, 127
  %v1988 = vpop.permute.xlu0 %1987
  %1989 = vrot.lane.b32.xlu0 %v1770, 127
  %v1990 = vpop.permute.xlu0 %1989
  %v1991 = vsel %vm62, %v1976, %v1978
  %v1992 = vsel %vm62, %v1980, %v1982
  %v1993 = vsel %vm62, %v1984, %v1986
  %v1994 = vsel %vm62, %v1988, %v1990
  %v2001 = vsel %vm65, %v1978, %v1976
  %v2005 = vsel %vm65, %v1982, %v1980
  %v2009 = vsel %vm65, %v1986, %v1984
  %v2013 = vsel %vm65, %v1990, %v1988
  %v2015 = vsel %vm1000, %v1991, 0
  %v2016 = vsel %vm1007, %v2001, 0
  %v2017 = vsel %vm1000, %v1992, 0
  %v2018 = vsel %vm1007, %v2005, 0
  %v2019 = vsel %vm1000, %v1993, 0
  %v2020 = vsel %vm1007, %v2009, 0
  %v2021 = vsel %vm1000, %v1994, 0
  %v2022 = vsel %vm1007, %v2013, 0
  %2023 = vrot.lane.b32.xlu0 %v1787, 118
  %v2024 = vpop.permute.xlu0 %2023
  %2025 = vrot.lane.b32.xlu0 %v1767, 118
  %v2026 = vpop.permute.xlu0 %2025
  %2027 = vrot.lane.b32.xlu0 %v1788, 118
  %v2028 = vpop.permute.xlu0 %2027
  %2029 = vrot.lane.b32.xlu0 %v1768, 118
  %v2030 = vpop.permute.xlu0 %2029
  %2031 = vrot.lane.b32.xlu0 %v1789, 118
  %v2032 = vpop.permute.xlu0 %2031
  %2033 = vrot.lane.b32.xlu0 %v1769, 118
  %v2034 = vpop.permute.xlu0 %2033
  %2035 = vrot.lane.b32.xlu0 %v1790, 118
  %v2036 = vpop.permute.xlu0 %2035
  %2037 = vrot.lane.b32.xlu0 %v1770, 118
  %v2038 = vpop.permute.xlu0 %2037
  %v2039 = vsel %vm1035, %v2024, %v2026
  %v2040 = vsel %vm1035, %v2028, %v2030
  %v2041 = vsel %vm1035, %v2032, %v2034
  %v2042 = vsel %vm1035, %v2036, %v2038
  %v2049 = vsel %vm1044, %v2026, %v2024
  %v2053 = vsel %vm1044, %v2030, %v2028
  %v2057 = vsel %vm1044, %v2034, %v2032
  %v2061 = vsel %vm1044, %v2038, %v2036
  %v2063 = vsel %vm1078, %v2039, 0
  %v2064 = vsel %vm1085, %v2049, 0
  %v2065 = vsel %vm1078, %v2040, 0
  %v2066 = vsel %vm1085, %v2053, 0
  %v2067 = vsel %vm1078, %v2041, 0
  %v2068 = vsel %vm1085, %v2057, 0
  %v2069 = vsel %vm1078, %v2042, 0
  %v2070 = vsel %vm1085, %v2061, 0
  %2071 = vrot.lane.b32.xlu0 %v1787, 117
  %v2072 = vpop.permute.xlu0 %2071
  %2073 = vrot.lane.b32.xlu0 %v1767, 117
  %v2074 = vpop.permute.xlu0 %2073
  %2075 = vrot.lane.b32.xlu0 %v1788, 117
  %v2076 = vpop.permute.xlu0 %2075
  %2077 = vrot.lane.b32.xlu0 %v1768, 117
  %v2078 = vpop.permute.xlu0 %2077
  %2079 = vrot.lane.b32.xlu0 %v1789, 117
  %v2080 = vpop.permute.xlu0 %2079
  %2081 = vrot.lane.b32.xlu0 %v1769, 117
  %v2082 = vpop.permute.xlu0 %2081
  %2083 = vrot.lane.b32.xlu0 %v1790, 117
  %v2084 = vpop.permute.xlu0 %2083
  %2085 = vrot.lane.b32.xlu0 %v1770, 117
  %v2086 = vpop.permute.xlu0 %2085
  %v2087 = vsel %vm98, %v2072, %v2074
  %v2088 = vsel %vm98, %v2076, %v2078
  %v2089 = vsel %vm98, %v2080, %v2082
  %v2090 = vsel %vm98, %v2084, %v2086
  %v2097 = vsel %vm101, %v2074, %v2072
  %v2101 = vsel %vm101, %v2078, %v2076
  %v2105 = vsel %vm101, %v2082, %v2080
  %v2109 = vsel %vm101, %v2086, %v2084
  %v2111 = vsel %vm1153, %v2087, 0
  %v2112 = vsel %vm1160, %v2097, 0
  %v2113 = vsel %vm1153, %v2088, 0
  %v2114 = vsel %vm1160, %v2101, 0
  %v2115 = vsel %vm1153, %v2089, 0
  %v2116 = vsel %vm1160, %v2105, 0
  %v2117 = vsel %vm1153, %v2090, 0
  %v2118 = vsel %vm1160, %v2109, 0
  %2119 = vrot.lane.b32.xlu0 %v1787, 116
  %v2120 = vpop.permute.xlu0 %2119
  %2121 = vrot.lane.b32.xlu0 %v1767, 116
  %v2122 = vpop.permute.xlu0 %2121
  %2123 = vrot.lane.b32.xlu0 %v1788, 116
  %v2124 = vpop.permute.xlu0 %2123
  %2125 = vrot.lane.b32.xlu0 %v1768, 116
  %v2126 = vpop.permute.xlu0 %2125
  %2127 = vrot.lane.b32.xlu0 %v1789, 116
  %v2128 = vpop.permute.xlu0 %2127
  %2129 = vrot.lane.b32.xlu0 %v1769, 116
  %v2130 = vpop.permute.xlu0 %2129
  %2131 = vrot.lane.b32.xlu0 %v1790, 116
  %v2132 = vpop.permute.xlu0 %2131
  %2133 = vrot.lane.b32.xlu0 %v1770, 116
  %v2134 = vpop.permute.xlu0 %2133
  %v2135 = vsel %vm110, %v2120, %v2122
  %v2136 = vsel %vm110, %v2124, %v2126
  %v2137 = vsel %vm110, %v2128, %v2130
  %v2138 = vsel %vm110, %v2132, %v2134
  %v2145 = vsel %vm113, %v2122, %v2120
  %v2149 = vsel %vm113, %v2126, %v2124
  %v2153 = vsel %vm113, %v2130, %v2128
  %v2157 = vsel %vm113, %v2134, %v2132
  %v2159 = vsel %vm1228, %v2135, 0
  %v2160 = vsel %vm1235, %v2145, 0
  %v2161 = vsel %vm1228, %v2136, 0
  %v2162 = vsel %vm1235, %v2149, 0
  %v2163 = vsel %vm1228, %v2137, 0
  %v2164 = vsel %vm1235, %v2153, 0
  %v2165 = vsel %vm1228, %v2138, 0
  %v2166 = vsel %vm1235, %v2157, 0
  %v2175 = vld [vmem:[%s7] sm:$0xff]
  %v2176 = vld [vmem:[%s7 + $0x8] sm:$0xff]
  %v2177 = vld [vmem:[%s7 + $0x10] sm:$0xf]
  %v2178 = vld [vmem:[%s7 + $0x14] sm:$0xff]
  %v2179 = vld [vmem:[%s7 + $0x1c] sm:$0xff]
  %v2180 = vld [vmem:[%s7 + $0x24] sm:$0xf]
  %v2181 = vld [vmem:[%s7 + $0x28] sm:$0xff]
  %v2182 = vld [vmem:[%s7 + $0x30] sm:$0xff]
  %v2183 = vld [vmem:[%s7 + $0x38] sm:$0xf]
  %v2184 = vld [vmem:[%s7 + $0x3c] sm:$0xff]
  %v2185 = vld [vmem:[%s7 + $0x44] sm:$0xff]
  %v2186 = vld [vmem:[%s7 + $0x4c] sm:$0xf]
  %v2187 = vld [vmem:[%s7 + $0x50] sm:$0xff]
  %v2188 = vld [vmem:[%s7 + $0x58] sm:$0xff]
  %v2189 = vld [vmem:[%s7 + $0x60] sm:$0xf]
  %v2190 = vld [vmem:[%s7 + $0x64] sm:$0xff]
  %v2191 = vld [vmem:[%s7 + $0x6c] sm:$0xff]
  %v2192 = vld [vmem:[%s7 + $0x74] sm:$0xf]
  %v2193 = vld [vmem:[%s7 + $0x78] sm:$0xff]
  %v2194 = vld [vmem:[%s7 + $0x80] sm:$0xff]
  %v2195 = vld [vmem:[%s7 + $0x88] sm:$0xf]
  %v2196 = vld [vmem:[%s7 + $0x8c] sm:$0xff]
  %v2197 = vld [vmem:[%s7 + $0x94] sm:$0xff]
  %v2198 = vld [vmem:[%s7 + $0x9c] sm:$0xf]
  %v2199 = vld [vmem:[%s8] sm:$0xff]
  %v2200 = vld [vmem:[%s8 + $0x8] sm:$0xff]
  %v2201 = vld [vmem:[%s8 + $0x10] sm:$0xff]
  %v2202 = vld [vmem:[%s8 + $0x18] sm:$0xff]
  %v2203 = vld [vmem:[%s8 + $0x20] sm:$0xff]
  %v2204 = vld [vmem:[%s8 + $0x28] sm:$0xff]
  %v2205 = vld [vmem:[%s8 + $0x30] sm:$0xff]
  %v2206 = vld [vmem:[%s8 + $0x38] sm:$0xff]
  %2208 = vset.pattern.permute.xlu0 0
  %2209 = vperm.xlu0 %2208, %v2199
  %v2210 = vpop.permute.xlu0 %2209
  %2213 = vset.pattern.permute.xlu0 0
  %2214 = vperm.xlu0 %2213, %v2200
  %v2215 = vpop.permute.xlu0 %2214
  %2218 = vset.pattern.permute.xlu0 0
  %2219 = vperm.xlu0 %2218, %v2201
  %v2220 = vpop.permute.xlu0 %2219
  %2223 = vset.pattern.permute.xlu0 0
  %2224 = vperm.xlu0 %2223, %v2202
  %v2225 = vpop.permute.xlu0 %2224
  %2228 = vset.pattern.permute.xlu0 0
  %2229 = vperm.xlu0 %2228, %v2203
  %v2230 = vpop.permute.xlu0 %2229
  %2233 = vset.pattern.permute.xlu0 0
  %2234 = vperm.xlu0 %2233, %v2204
  %v2235 = vpop.permute.xlu0 %2234
  %2238 = vset.pattern.permute.xlu0 0
  %2239 = vperm.xlu0 %2238, %v2205
  %v2240 = vpop.permute.xlu0 %2239
  %2243 = vset.pattern.permute.xlu0 0
  %2244 = vperm.xlu0 %2243, %v2206
  %v2245 = vpop.permute.xlu0 %2244
  %v2271 = vunpack.c.l.b16 %v2175
  %v2272 = vunpack.c.h.b16 %v2175
  %v2273 = vunpack.c.l.b16 %v2176
  %v2274 = vunpack.c.h.b16 %v2176
  %v2275 = vunpack.c.l.b16 %v2177
  %v2276 = vunpack.c.l.b16 %v2178
  %v2277 = vunpack.c.h.b16 %v2178
  %v2278 = vunpack.c.l.b16 %v2179
  %v2279 = vunpack.c.h.b16 %v2179
  %v2280 = vunpack.c.l.b16 %v2180
  %v2281 = vunpack.c.l.b16 %v2181
  %v2282 = vunpack.c.h.b16 %v2181
  %v2283 = vunpack.c.l.b16 %v2182
  %v2284 = vunpack.c.h.b16 %v2182
  %v2285 = vunpack.c.l.b16 %v2183
  %v2286 = vunpack.c.l.b16 %v2184
  %v2287 = vunpack.c.h.b16 %v2184
  %v2288 = vunpack.c.l.b16 %v2185
  %v2289 = vunpack.c.h.b16 %v2185
  %v2290 = vunpack.c.l.b16 %v2186
  %v2291 = vunpack.c.l.b16 %v2187
  %v2292 = vunpack.c.h.b16 %v2187
  %v2293 = vunpack.c.l.b16 %v2188
  %v2294 = vunpack.c.h.b16 %v2188
  %v2295 = vunpack.c.l.b16 %v2189
  %v2296 = vunpack.c.l.b16 %v2190
  %v2297 = vunpack.c.h.b16 %v2190
  %v2298 = vunpack.c.l.b16 %v2191
  %v2299 = vunpack.c.h.b16 %v2191
  %v2300 = vunpack.c.l.b16 %v2192
  %v2301 = vunpack.c.l.b16 %v2193
  %v2302 = vunpack.c.h.b16 %v2193
  %v2303 = vunpack.c.l.b16 %v2194
  %v2304 = vunpack.c.h.b16 %v2194
  %v2305 = vunpack.c.l.b16 %v2195
  %v2306 = vunpack.c.l.b16 %v2196
  %v2307 = vunpack.c.h.b16 %v2196
  %v2308 = vunpack.c.l.b16 %v2197
  %v2309 = vunpack.c.h.b16 %v2197
  %v2310 = vunpack.c.l.b16 %v2198
  %v2311 = vpack.c.b16 %v2276, %v2271
  %v2312 = vpack.c.b16 %v2277, %v2272
  %v2313 = vpack.c.b16 %v2278, %v2273
  %v2314 = vpack.c.b16 %v2279, %v2274
  %v2315 = vpack.c.b16 %v2280, %v2275
  %v2316 = vpack.c.b16 %v2286, %v2281
  %v2317 = vpack.c.b16 %v2287, %v2282
  %v2318 = vpack.c.b16 %v2288, %v2283
  %v2319 = vpack.c.b16 %v2289, %v2284
  %v2320 = vpack.c.b16 %v2290, %v2285
  %v2321 = vpack.c.b16 %v2296, %v2291
  %v2322 = vpack.c.b16 %v2297, %v2292
  %v2323 = vpack.c.b16 %v2298, %v2293
  %v2324 = vpack.c.b16 %v2299, %v2294
  %v2325 = vpack.c.b16 %v2300, %v2295
  %v2326 = vpack.c.b16 %v2306, %v2301
  %v2327 = vpack.c.b16 %v2307, %v2302
  %v2328 = vpack.c.b16 %v2308, %v2303
  %v2329 = vpack.c.b16 %v2309, %v2304
  %v2330 = vpack.c.b16 %v2310, %v2305
  %v2348 = vsel %vm1424, %v2315, 0
  %v2351 = vsel %vm1424, %v2320, 0
  %v2354 = vsel %vm1424, %v2325, 0
  %v2357 = vsel %vm1424, %v2330, 0
  %2359 = vmatpush.bf16.msra.mxu0 %v1877
  %2360 = vmatpush.bf16.msra.mxu0 %v1875
  %2361 = vmatpush.bf16.msra.mxu0 %v1873
  %2362 = vmatpush.bf16.msra.mxu0 %v1871
  %2363 = vmatpush.bf16.msra.mxu0 %v1829
  %2364 = vmatpush.bf16.msra.mxu0 %v1827
  %2365 = vmatpush.bf16.msra.mxu0 %v1825
  %2366 = vmatpush.bf16.msra.mxu0 %v1823
  %2367 = vmatmul.bf16.gmra.mxu0 %v2311
  %v2368 = vpop.f32.mrf.mxu0
  %v2369 = vadd.f32 %v2210, %v2368
  %v2370 = vpop.f32.mrf.mxu0
  %v2371 = vadd.f32 %v2215, %v2370
  %2372 = vmatmul.bf16.gmra.mxu0 %v2316
  %v2373 = vpop.f32.mrf.mxu0
  %v2374 = vadd.f32 %v2220, %v2373
  %v2375 = vpop.f32.mrf.mxu0
  %v2376 = vadd.f32 %v2225, %v2375
  %2377 = vmatmul.bf16.gmra.mxu0 %v2321
  %v2378 = vpop.f32.mrf.mxu0
  %v2379 = vadd.f32 %v2230, %v2378
  %v2380 = vpop.f32.mrf.mxu0
  %v2381 = vadd.f32 %v2235, %v2380
  %2382 = vmatmul.bf16.gmra.mxu0 %v2326
  %v2383 = vpop.f32.mrf.mxu0
  %v2384 = vadd.f32 %v2240, %v2383
  %v2385 = vpop.f32.mrf.mxu0
  %v2386 = vadd.f32 %v2245, %v2385
  %2387 = vdwg.mxu0
  %2388 = vmatpush.bf16.msra.mxu0 %v1973
  %2389 = vmatpush.bf16.msra.mxu0 %v1971
  %2390 = vmatpush.bf16.msra.mxu0 %v1969
  %2391 = vmatpush.bf16.msra.mxu0 %v1967
  %2392 = vmatpush.bf16.msra.mxu0 %v1925
  %2393 = vmatpush.bf16.msra.mxu0 %v1923
  %2394 = vmatpush.bf16.msra.mxu0 %v1921
  %2395 = vmatpush.bf16.msra.mxu0 %v1919
  %2396 = vmatmul.bf16.gmra.mxu0 %v2312
  %v2397 = vpop.f32.mrf.mxu0
  %v2398 = vadd.f32 %v2369, %v2397
  %v2399 = vpop.f32.mrf.mxu0
  %v2400 = vadd.f32 %v2371, %v2399
  %2401 = vmatmul.bf16.gmra.mxu0 %v2317
  %v2402 = vpop.f32.mrf.mxu0
  %v2403 = vadd.f32 %v2374, %v2402
  %v2404 = vpop.f32.mrf.mxu0
  %v2405 = vadd.f32 %v2376, %v2404
  %2406 = vmatmul.bf16.gmra.mxu0 %v2322
  %v2407 = vpop.f32.mrf.mxu0
  %v2408 = vadd.f32 %v2379, %v2407
  %v2409 = vpop.f32.mrf.mxu0
  %v2410 = vadd.f32 %v2381, %v2409
  %2411 = vmatmul.bf16.gmra.mxu0 %v2327
  %v2412 = vpop.f32.mrf.mxu0
  %v2413 = vadd.f32 %v2384, %v2412
  %v2414 = vpop.f32.mrf.mxu0
  %v2415 = vadd.f32 %v2386, %v2414
  %2416 = vdwg.mxu0
  %2417 = vmatpush.bf16.msra.mxu0 %v2021
  %2418 = vmatpush.bf16.msra.mxu0 %v2019
  %2419 = vmatpush.bf16.msra.mxu0 %v2017
  %2420 = vmatpush.bf16.msra.mxu0 %v2015
  %2421 = vmatpush.bf16.msra.mxu0 %v1790
  %2422 = vmatpush.bf16.msra.mxu0 %v1789
  %2423 = vmatpush.bf16.msra.mxu0 %v1788
  %2424 = vmatpush.bf16.msra.mxu0 %v1787
  %2425 = vmatmul.bf16.gmra.mxu0 %v2313
  %v2426 = vpop.f32.mrf.mxu0
  %v2427 = vadd.f32 %v2398, %v2426
  %v2428 = vpop.f32.mrf.mxu0
  %v2429 = vadd.f32 %v2400, %v2428
  %2430 = vmatmul.bf16.gmra.mxu0 %v2318
  %v2431 = vpop.f32.mrf.mxu0
  %v2432 = vadd.f32 %v2403, %v2431
  %v2433 = vpop.f32.mrf.mxu0
  %v2434 = vadd.f32 %v2405, %v2433
  %2435 = vmatmul.bf16.gmra.mxu0 %v2323
  %v2436 = vpop.f32.mrf.mxu0
  %v2437 = vadd.f32 %v2408, %v2436
  %v2438 = vpop.f32.mrf.mxu0
  %v2439 = vadd.f32 %v2410, %v2438
  %2440 = vmatmul.bf16.gmra.mxu0 %v2328
  %v2441 = vpop.f32.mrf.mxu0
  %v2442 = vadd.f32 %v2413, %v2441
  %v2443 = vpop.f32.mrf.mxu0
  %v2444 = vadd.f32 %v2415, %v2443
  %2445 = vdwg.mxu0
  %2446 = vmatpush.bf16.msra.mxu0 %v2117
  %2447 = vmatpush.bf16.msra.mxu0 %v2115
  %2448 = vmatpush.bf16.msra.mxu0 %v2113
  %2449 = vmatpush.bf16.msra.mxu0 %v2111
  %2450 = vmatpush.bf16.msra.mxu0 %v2069
  %2451 = vmatpush.bf16.msra.mxu0 %v2067
  %2452 = vmatpush.bf16.msra.mxu0 %v2065
  %2453 = vmatpush.bf16.msra.mxu0 %v2063
  %2454 = vmatmul.bf16.gmra.mxu0 %v2314
  %v2455 = vpop.f32.mrf.mxu0
  %v2456 = vadd.f32 %v2427, %v2455
  %v2457 = vpop.f32.mrf.mxu0
  %v2458 = vadd.f32 %v2429, %v2457
  %2459 = vmatmul.bf16.gmra.mxu0 %v2319
  %v2460 = vpop.f32.mrf.mxu0
  %v2461 = vadd.f32 %v2432, %v2460
  %v2462 = vpop.f32.mrf.mxu0
  %v2463 = vadd.f32 %v2434, %v2462
  %2464 = vmatmul.bf16.gmra.mxu0 %v2324
  %v2465 = vpop.f32.mrf.mxu0
  %v2466 = vadd.f32 %v2437, %v2465
  %v2467 = vpop.f32.mrf.mxu0
  %v2468 = vadd.f32 %v2439, %v2467
  %2469 = vmatmul.bf16.gmra.mxu0 %v2329
  %v2470 = vpop.f32.mrf.mxu0
  %v2471 = vadd.f32 %v2442, %v2470
  %v2472 = vpop.f32.mrf.mxu0
  %v2473 = vadd.f32 %v2444, %v2472
  %2474 = vdwg.mxu0
  %2475 = vmatpush.bf16.msra.mxu0 0
  %2476 = vmatpush.bf16.msra.mxu0 0
  %2477 = vmatpush.bf16.msra.mxu0 0
  %2478 = vmatpush.bf16.msra.mxu0 0
  %2479 = vmatpush.bf16.msra.mxu0 %v2165
  %2480 = vmatpush.bf16.msra.mxu0 %v2163
  %2481 = vmatpush.bf16.msra.mxu0 %v2161
  %2482 = vmatpush.bf16.msra.mxu0 %v2159
  %2483 = vmatmul.bf16.gmra.mxu0 %v2348
  %v2484 = vpop.f32.mrf.mxu0
  %v2485 = vadd.f32 %v2456, %v2484
  %v2486 = vpop.f32.mrf.mxu0
  %v2487 = vadd.f32 %v2458, %v2486
  %2488 = vmatmul.bf16.gmra.mxu0 %v2351
  %v2489 = vpop.f32.mrf.mxu0
  %v2490 = vadd.f32 %v2461, %v2489
  %v2491 = vpop.f32.mrf.mxu0
  %v2492 = vadd.f32 %v2463, %v2491
  %2493 = vmatmul.bf16.gmra.mxu0 %v2354
  %v2494 = vpop.f32.mrf.mxu0
  %v2495 = vadd.f32 %v2466, %v2494
  %v2496 = vpop.f32.mrf.mxu0
  %v2497 = vadd.f32 %v2468, %v2496
  %2498 = vmatmul.bf16.gmra.mxu0 %v2357
  %v2499 = vpop.f32.mrf.mxu0
  %v2500 = vadd.f32 %v2471, %v2499
  %v2501 = vpop.f32.mrf.mxu0
  %v2502 = vadd.f32 %v2473, %v2501
  %2503 = vdwg.mxu0
  %2504 = vmatpush.bf16.msra.mxu0 %v1878
  %2505 = vmatpush.bf16.msra.mxu0 %v1876
  %2506 = vmatpush.bf16.msra.mxu0 %v1874
  %2507 = vmatpush.bf16.msra.mxu0 %v1872
  %2508 = vmatpush.bf16.msra.mxu0 %v1830
  %2509 = vmatpush.bf16.msra.mxu0 %v1828
  %2510 = vmatpush.bf16.msra.mxu0 %v1826
  %2511 = vmatpush.bf16.msra.mxu0 %v1824
  %2512 = vmatmul.bf16.gmra.mxu0 %v2311
  %v2513 = vpop.f32.mrf.mxu0
  %v2514 = vadd.f32 %v2210, %v2513
  %v2515 = vpop.f32.mrf.mxu0
  %v2516 = vadd.f32 %v2215, %v2515
  %2517 = vmatmul.bf16.gmra.mxu0 %v2316
  %v2518 = vpop.f32.mrf.mxu0
  %v2519 = vadd.f32 %v2220, %v2518
  %v2520 = vpop.f32.mrf.mxu0
  %v2521 = vadd.f32 %v2225, %v2520
  %2522 = vmatmul.bf16.gmra.mxu0 %v2321
  %v2523 = vpop.f32.mrf.mxu0
  %v2524 = vadd.f32 %v2230, %v2523
  %v2525 = vpop.f32.mrf.mxu0
  %v2526 = vadd.f32 %v2235, %v2525
  %2527 = vmatmul.bf16.gmra.mxu0 %v2326
  %v2528 = vpop.f32.mrf.mxu0
  %v2529 = vadd.f32 %v2240, %v2528
  %v2530 = vpop.f32.mrf.mxu0
  %v2531 = vadd.f32 %v2245, %v2530
  %2532 = vdwg.mxu0
  %2533 = vmatpush.bf16.msra.mxu0 %v1974
  %2534 = vmatpush.bf16.msra.mxu0 %v1972
  %2535 = vmatpush.bf16.msra.mxu0 %v1970
  %2536 = vmatpush.bf16.msra.mxu0 %v1968
  %2537 = vmatpush.bf16.msra.mxu0 %v1926
  %2538 = vmatpush.bf16.msra.mxu0 %v1924
  %2539 = vmatpush.bf16.msra.mxu0 %v1922
  %2540 = vmatpush.bf16.msra.mxu0 %v1920
  %2541 = vmatmul.bf16.gmra.mxu0 %v2312
  %v2542 = vpop.f32.mrf.mxu0
  %v2543 = vadd.f32 %v2514, %v2542
  %v2544 = vpop.f32.mrf.mxu0
  %v2545 = vadd.f32 %v2516, %v2544
  %2546 = vmatmul.bf16.gmra.mxu0 %v2317
  %v2547 = vpop.f32.mrf.mxu0
  %v2548 = vadd.f32 %v2519, %v2547
  %v2549 = vpop.f32.mrf.mxu0
  %v2550 = vadd.f32 %v2521, %v2549
  %2551 = vmatmul.bf16.gmra.mxu0 %v2322
  %v2552 = vpop.f32.mrf.mxu0
  %v2553 = vadd.f32 %v2524, %v2552
  %v2554 = vpop.f32.mrf.mxu0
  %v2555 = vadd.f32 %v2526, %v2554
  %2556 = vmatmul.bf16.gmra.mxu0 %v2327
  %v2557 = vpop.f32.mrf.mxu0
  %v2558 = vadd.f32 %v2529, %v2557
  %v2559 = vpop.f32.mrf.mxu0
  %v2560 = vadd.f32 %v2531, %v2559
  %2561 = vdwg.mxu0
  %2562 = vmatpush.bf16.msra.mxu0 %v2022
  %2563 = vmatpush.bf16.msra.mxu0 %v2020
  %2564 = vmatpush.bf16.msra.mxu0 %v2018
  %2565 = vmatpush.bf16.msra.mxu0 %v2016
  %2566 = vmatpush.bf16.msra.mxu0 %v1770
  %2567 = vmatpush.bf16.msra.mxu0 %v1769
  %2568 = vmatpush.bf16.msra.mxu0 %v1768
  %2569 = vmatpush.bf16.msra.mxu0 %v1767
  %2570 = vmatmul.bf16.gmra.mxu0 %v2313
  %v2571 = vpop.f32.mrf.mxu0
  %v2572 = vadd.f32 %v2543, %v2571
  %v2573 = vpop.f32.mrf.mxu0
  %v2574 = vadd.f32 %v2545, %v2573
  %2575 = vmatmul.bf16.gmra.mxu0 %v2318
  %v2576 = vpop.f32.mrf.mxu0
  %v2577 = vadd.f32 %v2548, %v2576
  %v2578 = vpop.f32.mrf.mxu0
  %v2579 = vadd.f32 %v2550, %v2578
  %2580 = vmatmul.bf16.gmra.mxu0 %v2323
  %v2581 = vpop.f32.mrf.mxu0
  %v2582 = vadd.f32 %v2553, %v2581
  %v2583 = vpop.f32.mrf.mxu0
  %v2584 = vadd.f32 %v2555, %v2583
  %2585 = vmatmul.bf16.gmra.mxu0 %v2328
  %v2586 = vpop.f32.mrf.mxu0
  %v2587 = vadd.f32 %v2558, %v2586
  %v2588 = vpop.f32.mrf.mxu0
  %v2589 = vadd.f32 %v2560, %v2588
  %2590 = vdwg.mxu0
  %2591 = vmatpush.bf16.msra.mxu0 %v2118
  %2592 = vmatpush.bf16.msra.mxu0 %v2116
  %2593 = vmatpush.bf16.msra.mxu0 %v2114
  %2594 = vmatpush.bf16.msra.mxu0 %v2112
  %2595 = vmatpush.bf16.msra.mxu0 %v2070
  %2596 = vmatpush.bf16.msra.mxu0 %v2068
  %2597 = vmatpush.bf16.msra.mxu0 %v2066
  %2598 = vmatpush.bf16.msra.mxu0 %v2064
  %2599 = vmatmul.bf16.gmra.mxu0 %v2314
  %v2600 = vpop.f32.mrf.mxu0
  %v2601 = vadd.f32 %v2572, %v2600
  %v2602 = vpop.f32.mrf.mxu0
  %v2603 = vadd.f32 %v2574, %v2602
  %2604 = vmatmul.bf16.gmra.mxu0 %v2319
  %v2605 = vpop.f32.mrf.mxu0
  %v2606 = vadd.f32 %v2577, %v2605
  %v2607 = vpop.f32.mrf.mxu0
  %v2608 = vadd.f32 %v2579, %v2607
  %2609 = vmatmul.bf16.gmra.mxu0 %v2324
  %v2610 = vpop.f32.mrf.mxu0
  %v2611 = vadd.f32 %v2582, %v2610
  %v2612 = vpop.f32.mrf.mxu0
  %v2613 = vadd.f32 %v2584, %v2612
  %2614 = vmatmul.bf16.gmra.mxu0 %v2329
  %v2615 = vpop.f32.mrf.mxu0
  %v2616 = vadd.f32 %v2587, %v2615
  %v2617 = vpop.f32.mrf.mxu0
  %v2618 = vadd.f32 %v2589, %v2617
  %2619 = vdwg.mxu0
  %2620 = vmatpush.bf16.msra.mxu0 0
  %2621 = vmatpush.bf16.msra.mxu0 0
  %2622 = vmatpush.bf16.msra.mxu0 0
  %2623 = vmatpush.bf16.msra.mxu0 0
  %2624 = vmatpush.bf16.msra.mxu0 %v2166
  %2625 = vmatpush.bf16.msra.mxu0 %v2164
  %2626 = vmatpush.bf16.msra.mxu0 %v2162
  %2627 = vmatpush.bf16.msra.mxu0 %v2160
  %2628 = vmatmul.bf16.gmra.mxu0 %v2348
  %v2629 = vpop.f32.mrf.mxu0
  %v2630 = vadd.f32 %v2601, %v2629
  %v2631 = vpop.f32.mrf.mxu0
  %v2632 = vadd.f32 %v2603, %v2631
  %2633 = vmatmul.bf16.gmra.mxu0 %v2351
  %v2634 = vpop.f32.mrf.mxu0
  %v2635 = vadd.f32 %v2606, %v2634
  %v2636 = vpop.f32.mrf.mxu0
  %v2637 = vadd.f32 %v2608, %v2636
  %2638 = vmatmul.bf16.gmra.mxu0 %v2354
  %v2639 = vpop.f32.mrf.mxu0
  %v2640 = vadd.f32 %v2611, %v2639
  %v2641 = vpop.f32.mrf.mxu0
  %v2642 = vadd.f32 %v2613, %v2641
  %2643 = vmatmul.bf16.gmra.mxu0 %v2357
  %v2644 = vpop.f32.mrf.mxu0
  %v2645 = vadd.f32 %v2616, %v2644
  %v2646 = vpop.f32.mrf.mxu0
  %v2647 = vadd.f32 %v2618, %v2646
  %2648 = vdwg.mxu0
  %v2649 = vsel %vm47, 1, 0
  %v2650 = vperm.slane %v2649, 0
  %v2651 = vperm.slane %v2649, 2
  %v2652 = vperm.slane %v2650, 0
  %v2653 = vperm.slane %v2651, 0
  %vm2654 = vcmp.eq.s32.totalorder %v2652, 1
  %vm2655 = vcmp.eq.s32.totalorder %v2653, 1
  %v2656 = vsel %vm2654, %v2485, -inf
  %v2657 = vsel %vm2655, %v2630, -inf
  %v2658 = vsel %vm2654, %v2487, -inf
  %v2659 = vsel %vm2655, %v2632, -inf
  %v2660 = vsel %vm2654, %v2490, -inf
  %v2661 = vsel %vm2655, %v2635, -inf
  %v2662 = vsel %vm2654, %v2492, -inf
  %v2663 = vsel %vm2655, %v2637, -inf
  %v2664 = vsel %vm2654, %v2495, -inf
  %v2665 = vsel %vm2655, %v2640, -inf
  %v2666 = vsel %vm2654, %v2497, -inf
  %v2667 = vsel %vm2655, %v2642, -inf
  %v2668 = vsel %vm2654, %v2500, -inf
  %v2669 = vsel %vm2655, %v2645, -inf
  %v2670 = vsel %vm2654, %v2502, -inf
  %v2671 = vsel %vm2655, %v2647, -inf
  %2672 = vmax.xlane.f32.xlu0 %v2656
  %v2673 = vpop.xlane.xlu0 %2672
  %2674 = vmax.xlane.f32.xlu0 %v2658
  %v2675 = vpop.xlane.xlu0 %2674
  %2676 = vmax.xlane.f32.xlu0 %v2660
  %v2677 = vpop.xlane.xlu0 %2676
  %2678 = vmax.xlane.f32.xlu0 %v2662
  %v2679 = vpop.xlane.xlu0 %2678
  %2680 = vmax.xlane.f32.xlu0 %v2664
  %v2681 = vpop.xlane.xlu0 %2680
  %2682 = vmax.xlane.f32.xlu0 %v2666
  %v2683 = vpop.xlane.xlu0 %2682
  %2684 = vmax.xlane.f32.xlu0 %v2668
  %v2685 = vpop.xlane.xlu0 %2684
  %2686 = vmax.xlane.f32.xlu0 %v2670
  %v2687 = vpop.xlane.xlu0 %2686
  %2688 = vmax.xlane.f32.xlu0 %v2657
  %v2689 = vpop.xlane.xlu0 %2688
  %2690 = vmax.xlane.f32.xlu0 %v2659
  %v2691 = vpop.xlane.xlu0 %2690
  %2692 = vmax.xlane.f32.xlu0 %v2661
  %v2693 = vpop.xlane.xlu0 %2692
  %2694 = vmax.xlane.f32.xlu0 %v2663
  %v2695 = vpop.xlane.xlu0 %2694
  %2696 = vmax.xlane.f32.xlu0 %v2665
  %v2697 = vpop.xlane.xlu0 %2696
  %2698 = vmax.xlane.f32.xlu0 %v2667
  %v2699 = vpop.xlane.xlu0 %2698
  %2700 = vmax.xlane.f32.xlu0 %v2669
  %v2701 = vpop.xlane.xlu0 %2700
  %2702 = vmax.xlane.f32.xlu0 %v2671
  %v2703 = vpop.xlane.xlu0 %2702
  %v2704 = vsel %vm891, %v2673, %v2689
  %v2705 = vsel %vm891, %v2675, %v2691
  %v2706 = vsel %vm891, %v2677, %v2693
  %v2707 = vsel %vm891, %v2679, %v2695
  %v2708 = vsel %vm891, %v2681, %v2697
  %v2709 = vsel %vm891, %v2683, %v2699
  %v2710 = vsel %vm891, %v2685, %v2701
  %v2711 = vsel %vm891, %v2687, %v2703
  %v2712 = vld [vmem:[%s9] sm:$0xf]
  %v2713 = vld [vmem:[%s10] sm:$0xf]
  %2715 = vset.pattern.permute.xlu0 0
  %2716 = vperm.xlu0 %2715, %v2713
  %v2717 = vpop.permute.xlu0 %2716
  %v2720 = vsel %vm1424, %v2712, 0
  %2722 = vmatpush.msra.mxu0 0.0
  %2723 = vmatpush.msra.mxu0 0.0
  %2724 = vmatpush.msra.mxu0 0.0
  %2725 = vmatpush.msra.mxu0 0.0
  %2726 = vmatpush.msra.mxu0 0.0
  %2727 = vmatpush.msra.mxu0 0.0
  %2728 = vmatpush.msra.mxu0 0.0
  %2729 = vmatpush.msra.mxu0 0.0
  %2730 = vmatpush.msra.mxu0 %v2711
  %2731 = vmatpush.msra.mxu0 %v2710
  %2732 = vmatpush.msra.mxu0 %v2709
  %2733 = vmatpush.msra.mxu0 %v2708
  %2734 = vmatpush.msra.mxu0 %v2707
  %2735 = vmatpush.msra.mxu0 %v2706
  %2736 = vmatpush.msra.mxu0 %v2705
  %2737 = vmatpush.msra.mxu0 %v2704
  %2738 = vmatmul.f32.gmra.mxu0 %v2720
  %v2739 = vpop.f32.mrf.mxu0
  %v2740 = vadd.f32 %v2717, %v2739
  %2741 = vdwg.mxu0
  %vm2742 = vcmask 11264
  %2743 = vst.msk [vmem:[%s11] sm:$0xf] %vm2742, %v2740
  // Predicated region
  $region46: #{illumination_forward.1} parent=0 // pred_check
    _
  $region47: #{illumination_forward.1} parent=0 // pred_check_branch
    %2745 = sbr.rel (0) target = $region49
  $region48: #{illumination_forward.1} parent=0 // pred_region
    _
  $region49: #{illumination_forward.1} parent=0 // pred_fallthru
    _
  // Predicated region
  $region50: #{illumination_forward.1} parent=0 // pred_check
    _
  $region51: #{illumination_forward.1} parent=0 // pred_check_branch
    %2747 = sbr.rel (0) target = $region53
  $region52: #{illumination_forward.1} parent=0 // pred_region
    _
  $region53: #{illumination_forward.1} parent=0 // pred_fallthru
    _

</llo_original>
